<compile_context>
chip_gen: v5e
topology: v5e:2x2
jax: 0.10.0
libtpu: 0.0.40
codegen_flags: <defaults>
</compile_context>

<pallas_src>
import functools

import jax
import jax.numpy as jnp
from jax.experimental import pallas as pl
from jax.experimental.pallas import tpu as pltpu


# ----------------------------------------------------------------------------
# In-kernel helpers
# ----------------------------------------------------------------------------
def _layernorm(x, gamma, beta, eps):
    """LayerNorm over the last dim. x: [S, D] f32, gamma/beta: [1, D] f32."""
    mu = jnp.mean(x, axis=-1, keepdims=True)
    xc = x - mu
    var = jnp.mean(xc * xc, axis=-1, keepdims=True)
    return xc * jax.lax.rsqrt(var + eps) * gamma + beta


# ----------------------------------------------------------------------------
# Fused embedding (word + type + pos) + LayerNorm kernel  ->  bf16 activations
# ----------------------------------------------------------------------------
def _emb_ln_kernel(we_ref, te_ref, pe_ref, g_ref, b_ref, o_ref, *, eps):
    x = (we_ref[0].astype(jnp.float32)
         + te_ref[0].astype(jnp.float32)
         + pe_ref[0].astype(jnp.float32))                      # [S, D] f32
    o_ref[0] = _layernorm(x, g_ref[...], b_ref[...], eps).astype(o_ref.dtype)


def emb_layernorm(we, te, pe, gamma, beta, eps=1e-12):
    B, S, D = we.shape
    return pl.pallas_call(
        functools.partial(_emb_ln_kernel, eps=eps),
        grid=(B,),
        in_specs=[
            pl.BlockSpec((1, S, D), lambda b: (b, 0, 0)),
            pl.BlockSpec((1, S, D), lambda b: (b, 0, 0)),
            pl.BlockSpec((1, S, D), lambda b: (0, 0, 0)),      # pos emb, shared
            pl.BlockSpec((1, D), lambda b: (0, 0)),
            pl.BlockSpec((1, D), lambda b: (0, 0)),
        ],
        out_specs=pl.BlockSpec((1, S, D), lambda b: (b, 0, 0)),
        out_shape=jax.ShapeDtypeStruct((B, S, D), jnp.bfloat16),
        compiler_params=pltpu.CompilerParams(dimension_semantics=("parallel",)),
    )(we, te, pe, gamma, beta)


# ----------------------------------------------------------------------------
# Fully fused encoder layer kernel (one pallas_call per layer, grid over batch)
# ----------------------------------------------------------------------------
def _encoder_layer_kernel(h_ref, mask_ref,
                          wqkv_ref, bqkv_ref, wo_ref, bo_ref,
                          ln1g_ref, ln1b_ref,
                          wff1_ref, bff1_ref, wff2_ref, bff2_ref,
                          ln2g_ref, ln2b_ref,
                          o_ref, *, num_heads, eps):
    x = h_ref[0]                                               # [S, D] bf16
    S, D = x.shape
    H = num_heads
    Dh = D // H
    scale = 1.0 / float(Dh) ** 0.5
    x_f32 = x.astype(jnp.float32)                              # for the residual

    # Additive key mask built in-kernel from the [1, S] row (no S x S HBM mask).
    bias = (1.0 - mask_ref[0]) * -1e9                          # [1, S] f32

    # ---- multi-head attention: weight-side head split -----------------------
    # wqkv_ref: [H, D, 3*Dh] (head-major), so each head's q/k/v start at lane 0.
    # TODO(synk): switch to lax.fori_loop / head grid axis at production H=12.
    ctx_heads = []
    for hd in range(H):                                        # static unroll (H=2 demo)
        qkv_h = (jnp.dot(x, wqkv_ref[hd],
                         preferred_element_type=jnp.float32)
                 + bqkv_ref[hd]).astype(jnp.bfloat16)          # [S, 3*Dh]; one bf16 cast
        qh = qkv_h[:, :Dh]
        kh = qkv_h[:, Dh:2 * Dh]
        vh = qkv_h[:, 2 * Dh:]
        # scores = q @ k^T (contract Dh, no explicit transpose), f32 acc
        s = jax.lax.dot_general(qh, kh, (((1,), (1,)), ((), ())),
                                preferred_element_type=jnp.float32) * scale
        s = s + bias                                           # mask key positions
        s = s - jnp.max(s, axis=-1, keepdims=True)
        p = jnp.exp(s)                                         # f32 softmax (v5e-safe)
        p = p * pl.reciprocal(jnp.sum(p, axis=-1, keepdims=True), approx=True)
        ctx_h = jnp.dot(p.astype(jnp.bfloat16), vh,
                        preferred_element_type=jnp.float32)    # [S, Dh] f32
        ctx_heads.append(ctx_h.astype(jnp.bfloat16))

    # Single K=D out-projection matmul (no per-head K=Dh matmuls, no f32
    # accumulation passes on the VALU).
    ctx = jnp.concatenate(ctx_heads, axis=-1)                  # [S, D] bf16
    proj = jnp.dot(ctx, wo_ref[...],
                   preferred_element_type=jnp.float32) + bo_ref[...]      # [S, D]

    # ---- residual + LayerNorm 1 ---------------------------------------------
    h1 = _layernorm(proj + x_f32, ln1g_ref[...], ln1b_ref[...], eps)      # [S, D] f32

    # ---- feed-forward: FF1 + GELU + FF2, residual + LayerNorm 2 -------------
    ff = jnp.dot(h1.astype(jnp.bfloat16), wff1_ref[...],
                 preferred_element_type=jnp.float32) + bff1_ref[...]      # [S, FF]
    # TODO(synk): swap to exact erf GELU if bit-level parity with HF BERT is
    # required (tanh approximation used here).
    ff = jax.nn.gelu(ff)
    ff = jnp.dot(ff.astype(jnp.bfloat16), wff2_ref[...],
                 preferred_element_type=jnp.float32) + bff2_ref[...]      # [S, D]
    h2 = _layernorm(ff + h1, ln2g_ref[...], ln2b_ref[...], eps)

    o_ref[0] = h2.astype(o_ref.dtype)                          # bf16 activation carry


def encoder_layer(h, mask, p, *, num_heads, eps=1e-12):
    """h: [B, S, D] bf16, mask: [B, 1, S] f32 -> [B, S, D] bf16."""
    B, S, D = h.shape

    def const(arr):
        n = arr.ndim
        return pl.BlockSpec(arr.shape, lambda b: (0,) * n)

    return pl.pallas_call(
        functools.partial(_encoder_layer_kernel, num_heads=num_heads, eps=eps),
        grid=(B,),
        in_specs=[
            pl.BlockSpec((1, S, D), lambda b: (b, 0, 0)),      # h (bf16)
            pl.BlockSpec((1, 1, S), lambda b: (b, 0, 0)),      # key mask row
            const(p["w_qkv"]), const(p["b_qkv"]),              # [H,D,3Dh], [H,1,3Dh]
            const(p["w_o"]), const(p["b_o"]),
            const(p["ln1_g"]), const(p["ln1_b"]),
            const(p["w_ff1"]), const(p["b_ff1"]),
            const(p["w_ff2"]), const(p["b_ff2"]),
            const(p["ln2_g"]), const(p["ln2_b"]),
        ],
        out_specs=pl.BlockSpec((1, S, D), lambda b: (b, 0, 0)),
        out_shape=jax.ShapeDtypeStruct((B, S, D), jnp.bfloat16),
        compiler_params=pltpu.CompilerParams(
            dimension_semantics=("parallel",),
            # Explicit scoped-VMEM budget; raise to ~48-64 MiB (chip dependent)
            # and single-buffer the constant weight specs at production sizes.
            vmem_limit_bytes=32 * 1024 * 1024,
        ),
    )(h, mask,
      p["w_qkv"], p["b_qkv"], p["w_o"], p["b_o"],
      p["ln1_g"], p["ln1_b"],
      p["w_ff1"], p["b_ff1"], p["w_ff2"], p["b_ff2"],
      p["ln2_g"], p["ln2_b"])


# ----------------------------------------------------------------------------
# Model forward (embedding gathers + tiny CLS classifier stay in plain XLA)
# ----------------------------------------------------------------------------
@functools.partial(jax.jit, static_argnames=("num_heads",))
def my_model_forward(params, input_ids, attn_masks, token_type_ids, *, num_heads):
    B, S = input_ids.shape

    # bf16 embedding gathers (glue) + fused sum+LayerNorm Pallas kernel.
    we = params["word_emb"][input_ids]                          # [B, S, D] bf16
    te = params["type_emb"][token_type_ids]                     # [B, S, D] bf16
    pe = params["pos_emb"][:S][None]                            # [1, S, D] bf16
    h = emb_layernorm(we, te, pe, params["emb_ln_g"], params["emb_ln_b"])

    # [B, 1, S] key mask row; expanded to additive bias inside the kernel.
    mask = attn_masks.astype(jnp.float32).reshape(B, 1, S)

    hidden_states = [h]
    for layer_p in params["layers"]:
        h = encoder_layer(h, mask, layer_p, num_heads=num_heads)
        hidden_states.append(h)

    # torch.cat([hidden_states[i] for i in [-1,-2,-3,-4]], dim=-1)[:, 0, :]
    # — slice the CLS token first, then concatenate (no [B, S, 4D] tensor).
    cls_cat = jnp.concatenate(
        [hidden_states[i][:, 0, :] for i in (-1, -2, -3, -4)], axis=-1)     # [B, 4D]

    # nn.Dropout(p=0.5) is identity at inference; nn.Linear(4D, C, bias=False)
    # is an N=2 matmul — done in plain XLA (cheaper than a Pallas launch).
    return jnp.dot(cls_cat, params["fc_w"],
                   preferred_element_type=jnp.float32)          # [B, C] f32


# ----------------------------------------------------------------------------
# Deterministic parameter init (bf16 matmul weights & embeddings, f32 norms/bias)
# ----------------------------------------------------------------------------
def init_params(key, vocab=50, type_vocab=2, max_pos=64, D=32, H=2, FF=64, L=4, C=2):
    keys = iter(jax.random.split(key, 64))
    bf = jnp.bfloat16
    Dh = D // H

    def nrm(shape, dtype=jnp.float32, s=0.02):
        return (jax.random.normal(next(keys), shape, jnp.float32) * s).astype(dtype)

    params = dict(
        word_emb=nrm((vocab, D), bf),
        type_emb=nrm((type_vocab, D), bf),
        pos_emb=nrm((max_pos, D), bf),
        emb_ln_g=jnp.ones((1, D), jnp.float32),
        emb_ln_b=jnp.zeros((1, D), jnp.float32),
        layers=[],
        fc_w=nrm((4 * D, C), bf),       # nn.Linear(hidden_size*4, C, bias=False)
    )
    for _ in range(L):
        params["layers"].append(dict(
            # Head-major QKV weights: [H, D, 3*Dh] so each head's q|k|v block is
            # produced at lane offset 0 inside the kernel (no misaligned slices
            # of the activation).
            w_qkv=nrm((H, D, 3 * Dh), bf),
            b_qkv=jnp.zeros((H, 1, 3 * Dh), jnp.float32),
            w_o=nrm((D, D), bf), b_o=jnp.zeros((1, D), jnp.float32),
            ln1_g=jnp.ones((1, D), jnp.float32), ln1_b=jnp.zeros((1, D), jnp.float32),
            w_ff1=nrm((D, FF), bf), b_ff1=jnp.zeros((1, FF), jnp.float32),
            w_ff2=nrm((FF, D), bf), b_ff2=jnp.zeros((1, D), jnp.float32),
            ln2_g=jnp.ones((1, D), jnp.float32), ln2_b=jnp.zeros((1, D), jnp.float32),
        ))
    return params, H


if __name__ == "__main__":
    key = jax.random.PRNGKey(0)
    pkey, ikey = jax.random.split(key)
    params, num_heads = init_params(pkey)

    B, S = 2, 8
    input_ids = jax.random.randint(ikey, (B, S), 0, 50, dtype=jnp.int32)
    attn_masks = jnp.ones((B, S), jnp.int32).at[1, 6:].set(0)   # pad last 2 of seq 1
    token_type_ids = jnp.zeros((B, S), jnp.int32)

    logits = my_model_forward(params, input_ids, attn_masks, token_type_ids,
                              num_heads=num_heads)
    jax.block_until_ready(logits)
    assert logits.shape == (B, 2) and logits.dtype == jnp.float32
    print("KERNEL_OK")
</pallas_src>

<mosaic_0001>
module attributes {stable_mosaic.version = 11 : i64} {
  func.func @_emb_ln_kernel(%arg0: i32, %arg1: memref<1x8x32xbf16, #tpu.memory_space<vmem>>, %arg2: memref<1x8x32xbf16, #tpu.memory_space<vmem>>, %arg3: memref<1x8x32xbf16, #tpu.memory_space<vmem>>, %arg4: memref<1x32xf32, #tpu.memory_space<vmem>>, %arg5: memref<1x32xf32, #tpu.memory_space<vmem>>, %arg6: memref<1x8x32xbf16, #tpu.memory_space<vmem>>) attributes {dimension_semantics = [#tpu.dimension_semantics<parallel>], iteration_bounds = array<i64: 2>, scalar_prefetch = 0 : i64, scratch_operands = 0 : i64, tpu.core_type = #tpu.core_type<tc>, window_params = [{transform_indices = @transform_0, window_bounds = array<i64: 1, 8, 32>}, {transform_indices = @transform_1, window_bounds = array<i64: 1, 8, 32>}, {pipeline_mode = #tpu.pipeline_mode<synchronous>, transform_indices = @transform_2, window_bounds = array<i64: 1, 8, 32>}, {pipeline_mode = #tpu.pipeline_mode<synchronous>, transform_indices = @transform_3, window_bounds = array<i64: 1, 32>}, {pipeline_mode = #tpu.pipeline_mode<synchronous>, transform_indices = @transform_4, window_bounds = array<i64: 1, 32>}, {transform_indices = @transform_5, window_bounds = array<i64: 1, 8, 32>}]} {
    %c0 = arith.constant 0 : index
    %c0_0 = arith.constant 0 : index
    %c0_1 = arith.constant 0 : index
    %0 = vector.load %arg1[%c0, %c0_0, %c0_1] : memref<1x8x32xbf16, #tpu.memory_space<vmem>>, vector<1x8x32xbf16>
    %1 = vector.shape_cast %0 : vector<1x8x32xbf16> to vector<8x32xbf16>
    %2 = arith.extf %1 : vector<8x32xbf16> to vector<8x32xf32>
    %c0_2 = arith.constant 0 : index
    %c0_3 = arith.constant 0 : index
    %c0_4 = arith.constant 0 : index
    %3 = vector.load %arg2[%c0_2, %c0_3, %c0_4] : memref<1x8x32xbf16, #tpu.memory_space<vmem>>, vector<1x8x32xbf16>
    %4 = vector.shape_cast %3 : vector<1x8x32xbf16> to vector<8x32xbf16>
    %5 = arith.extf %4 : vector<8x32xbf16> to vector<8x32xf32>
    %6 = arith.addf %2, %5 : vector<8x32xf32>
    %c0_5 = arith.constant 0 : index
    %c0_6 = arith.constant 0 : index
    %c0_7 = arith.constant 0 : index
    %7 = vector.load %arg3[%c0_5, %c0_6, %c0_7] : memref<1x8x32xbf16, #tpu.memory_space<vmem>>, vector<1x8x32xbf16>
    %8 = vector.shape_cast %7 : vector<1x8x32xbf16> to vector<8x32xbf16>
    %9 = arith.extf %8 : vector<8x32xbf16> to vector<8x32xf32>
    %10 = arith.addf %6, %9 : vector<8x32xf32>
    %c0_8 = arith.constant 0 : index
    %c0_9 = arith.constant 0 : index
    %11 = vector.load %arg4[%c0_8, %c0_9] : memref<1x32xf32, #tpu.memory_space<vmem>>, vector<1x32xf32>
    %c0_10 = arith.constant 0 : index
    %c0_11 = arith.constant 0 : index
    %12 = vector.load %arg5[%c0_10, %c0_11] : memref<1x32xf32, #tpu.memory_space<vmem>>, vector<1x32xf32>
    %cst = arith.constant dense<0.000000e+00> : vector<8xf32>
    %13 = vector.multi_reduction <add>, %10, %cst [1] : vector<8x32xf32> to vector<8xf32>
    %14 = vector.shape_cast %13 : vector<8xf32> to vector<8x1xf32>
    %cst_12 = arith.constant 3.200000e+01 : f32
    %15 = vector.broadcast %cst_12 : f32 to vector<8x1xf32>
    %16 = arith.divf %14, %15 : vector<8x1xf32>
    %17 = vector.broadcast %16 : vector<8x1xf32> to vector<8x32xf32>
    %18 = arith.subf %10, %17 : vector<8x32xf32>
    %19 = arith.mulf %18, %18 : vector<8x32xf32>
    %cst_13 = arith.constant dense<0.000000e+00> : vector<8xf32>
    %20 = vector.multi_reduction <add>, %19, %cst_13 [1] : vector<8x32xf32> to vector<8xf32>
    %21 = vector.shape_cast %20 : vector<8xf32> to vector<8x1xf32>
    %cst_14 = arith.constant 3.200000e+01 : f32
    %22 = vector.broadcast %cst_14 : f32 to vector<8x1xf32>
    %23 = arith.divf %21, %22 : vector<8x1xf32>
    %cst_15 = arith.constant 9.99999996E-13 : f32
    %24 = vector.broadcast %cst_15 : f32 to vector<8x1xf32>
    %25 = arith.addf %23, %24 : vector<8x1xf32>
    %26 = math.rsqrt %25 : vector<8x1xf32>
    %27 = vector.broadcast %26 : vector<8x1xf32> to vector<8x32xf32>
    %28 = arith.mulf %18, %27 : vector<8x32xf32>
    %29 = vector.broadcast %11 : vector<1x32xf32> to vector<8x32xf32>
    %30 = arith.mulf %28, %29 : vector<8x32xf32>
    %31 = vector.broadcast %12 : vector<1x32xf32> to vector<8x32xf32>
    %32 = arith.addf %30, %31 : vector<8x32xf32>
    %33 = arith.truncf %32 : vector<8x32xf32> to vector<8x32xbf16>
    %c0_16 = arith.constant 0 : index
    %c0_17 = arith.constant 0 : index
    %c0_18 = arith.constant 0 : index
    %34 = vector.load %arg6[%c0_16, %c0_17, %c0_18] : memref<1x8x32xbf16, #tpu.memory_space<vmem>>, vector<1x8x32xbf16>
    %35 = vector.shape_cast %34 : vector<1x8x32xbf16> to vector<8x32xbf16>
    %36 = vector.shape_cast %33 : vector<8x32xbf16> to vector<1x8x32xbf16>
    tpu.vector_store %arg6[%c0_16, %c0_17, %c0_18], %36 {strides = array<i32>} : memref<1x8x32xbf16, #tpu.memory_space<vmem>>, vector<1x8x32xbf16>,
    return
  }
  func.func @transform_0(%arg0: i32) -> (i32, i32, i32) {
    %c0_i32 = arith.constant 0 : i32
    %c0_i32_0 = arith.constant 0 : i32
    %c0_i32_1 = arith.constant 0 : i32
    return %arg0, %c0_i32, %c0_i32_0 : i32, i32, i32
  }
  func.func @transform_1(%arg0: i32) -> (i32, i32, i32) {
    %c0_i32 = arith.constant 0 : i32
    %c0_i32_0 = arith.constant 0 : i32
    %c0_i32_1 = arith.constant 0 : i32
    return %arg0, %c0_i32, %c0_i32_0 : i32, i32, i32
  }
  func.func @transform_2(%arg0: i32) -> (i32, i32, i32) {
    %c0_i32 = arith.constant 0 : i32
    %c0_i32_0 = arith.constant 0 : i32
    %c0_i32_1 = arith.constant 0 : i32
    %c0_i32_2 = arith.constant 0 : i32
    return %c0_i32, %c0_i32_0, %c0_i32_1 : i32, i32, i32
  }
  func.func @transform_3(%arg0: i32) -> (i32, i32) {
    %c0_i32 = arith.constant 0 : i32
    %c0_i32_0 = arith.constant 0 : i32
    %c0_i32_1 = arith.constant 0 : i32
    return %c0_i32, %c0_i32_0 : i32, i32
  }
  func.func @transform_4(%arg0: i32) -> (i32, i32) {
    %c0_i32 = arith.constant 0 : i32
    %c0_i32_0 = arith.constant 0 : i32
    %c0_i32_1 = arith.constant 0 : i32
    return %c0_i32, %c0_i32_0 : i32, i32
  }
  func.func @transform_5(%arg0: i32) -> (i32, i32, i32) {
    %c0_i32 = arith.constant 0 : i32
    %c0_i32_0 = arith.constant 0 : i32
    %c0_i32_1 = arith.constant 0 : i32
    return %arg0, %c0_i32, %c0_i32_0 : i32, i32, i32
  }
}

module attributes {stable_mosaic.version = 11 : i64} {
  func.func @_encoder_layer_kernel(%arg0: i32, %arg1: memref<1x8x32xbf16, #tpu.memory_space<vmem>>, %arg2: memref<1x1x8xf32, #tpu.memory_space<vmem>>, %arg3: memref<2x32x48xbf16, #tpu.memory_space<vmem>>, %arg4: memref<2x1x48xf32, #tpu.memory_space<vmem>>, %arg5: memref<32x32xbf16, #tpu.memory_space<vmem>>, %arg6: memref<1x32xf32, #tpu.memory_space<vmem>>, %arg7: memref<1x32xf32, #tpu.memory_space<vmem>>, %arg8: memref<1x32xf32, #tpu.memory_space<vmem>>, %arg9: memref<32x64xbf16, #tpu.memory_space<vmem>>, %arg10: memref<1x64xf32, #tpu.memory_space<vmem>>, %arg11: memref<64x32xbf16, #tpu.memory_space<vmem>>, %arg12: memref<1x32xf32, #tpu.memory_space<vmem>>, %arg13: memref<1x32xf32, #tpu.memory_space<vmem>>, %arg14: memref<1x32xf32, #tpu.memory_space<vmem>>, %arg15: memref<1x8x32xbf16, #tpu.memory_space<vmem>>) attributes {dimension_semantics = [#tpu.dimension_semantics<parallel>], iteration_bounds = array<i64: 2>, scalar_prefetch = 0 : i64, scratch_operands = 0 : i64, tpu.core_type = #tpu.core_type<tc>, window_params = [{transform_indices = @transform_0, window_bounds = array<i64: 1, 8, 32>}, {transform_indices = @transform_1, window_bounds = array<i64: 1, 1, 8>}, {pipeline_mode = #tpu.pipeline_mode<synchronous>, transform_indices = @transform_2, window_bounds = array<i64: 2, 32, 48>}, {pipeline_mode = #tpu.pipeline_mode<synchronous>, transform_indices = @transform_3, window_bounds = array<i64: 2, 1, 48>}, {pipeline_mode = #tpu.pipeline_mode<synchronous>, transform_indices = @transform_4, window_bounds = array<i64: 32, 32>}, {pipeline_mode = #tpu.pipeline_mode<synchronous>, transform_indices = @transform_5, window_bounds = array<i64: 1, 32>}, {pipeline_mode = #tpu.pipeline_mode<synchronous>, transform_indices = @transform_6, window_bounds = array<i64: 1, 32>}, {pipeline_mode = #tpu.pipeline_mode<synchronous>, transform_indices = @transform_7, window_bounds = array<i64: 1, 32>}, {pipeline_mode = #tpu.pipeline_mode<synchronous>, transform_indices = @transform_8, window_bounds = array<i64: 32, 64>}, {pipeline_mode = #tpu.pipeline_mode<synchronous>, transform_indices = @transform_9, window_bounds = array<i64: 1, 64>}, {pipeline_mode = #tpu.pipeline_mode<synchronous>, transform_indices = @transform_10, window_bounds = array<i64: 64, 32>}, {pipeline_mode = #tpu.pipeline_mode<synchronous>, transform_indices = @transform_11, window_bounds = array<i64: 1, 32>}, {pipeline_mode = #tpu.pipeline_mode<synchronous>, transform_indices = @transform_12, window_bounds = array<i64: 1, 32>}, {pipeline_mode = #tpu.pipeline_mode<synchronous>, transform_indices = @transform_13, window_bounds = array<i64: 1, 32>}, {transform_indices = @transform_14, window_bounds = array<i64: 1, 8, 32>}]} {
    %c0 = arith.constant 0 : index
    %c0_0 = arith.constant 0 : index
    %c0_1 = arith.constant 0 : index
    %0 = vector.load %arg1[%c0, %c0_0, %c0_1] : memref<1x8x32xbf16, #tpu.memory_space<vmem>>, vector<1x8x32xbf16>
    %1 = vector.shape_cast %0 : vector<1x8x32xbf16> to vector<8x32xbf16>
    %2 = arith.extf %1 : vector<8x32xbf16> to vector<8x32xf32>
    %c0_2 = arith.constant 0 : index
    %c0_3 = arith.constant 0 : index
    %c0_4 = arith.constant 0 : index
    %3 = vector.load %arg2[%c0_2, %c0_3, %c0_4] : memref<1x1x8xf32, #tpu.memory_space<vmem>>, vector<1x1x8xf32>
    %4 = vector.shape_cast %3 : vector<1x1x8xf32> to vector<1x8xf32>
    %cst = arith.constant 1.000000e+00 : f32
    %5 = vector.broadcast %cst : f32 to vector<1x8xf32>
    %6 = arith.subf %5, %4 : vector<1x8xf32>
    %cst_5 = arith.constant -1.000000e+09 : f32
    %7 = vector.broadcast %cst_5 : f32 to vector<1x8xf32>
    %8 = arith.mulf %6, %7 : vector<1x8xf32>
    %c0_6 = arith.constant 0 : index
    %c0_7 = arith.constant 0 : index
    %c0_8 = arith.constant 0 : index
    %9 = vector.load %arg3[%c0_6, %c0_7, %c0_8] : memref<2x32x48xbf16, #tpu.memory_space<vmem>>, vector<1x32x48xbf16>
    %10 = vector.shape_cast %9 : vector<1x32x48xbf16> to vector<32x48xbf16>
    %cst_9 = arith.constant dense<0.000000e+00> : vector<8x48xf32>
    %11 = tpu.matmul %1, %10, %cst_9 {dimension_numbers = #tpu.dot_dimension_numbers<[1], [0], [0], [1], [0, 0, 1, 1], [], []>} : vector<8x32xbf16>, vector<32x48xbf16>, vector<8x48xf32> -> vector<8x48xf32>
    %c0_10 = arith.constant 0 : index
    %c0_11 = arith.constant 0 : index
    %c0_12 = arith.constant 0 : index
    %12 = vector.load %arg4[%c0_10, %c0_11, %c0_12] : memref<2x1x48xf32, #tpu.memory_space<vmem>>, vector<1x1x48xf32>
    %13 = vector.shape_cast %12 : vector<1x1x48xf32> to vector<1x48xf32>
    %14 = vector.broadcast %13 : vector<1x48xf32> to vector<8x48xf32>
    %15 = arith.addf %11, %14 : vector<8x48xf32>
    %16 = arith.truncf %15 : vector<8x48xf32> to vector<8x48xbf16>
    %17 = vector.extract_strided_slice %16 {offsets = [0, 0], sizes = [8, 16], strides = [1, 1]} : vector<8x48xbf16> to vector<8x16xbf16>
    %18 = vector.extract_strided_slice %16 {offsets = [0, 16], sizes = [8, 16], strides = [1, 1]} : vector<8x48xbf16> to vector<8x16xbf16>
    %19 = vector.extract_strided_slice %16 {offsets = [0, 32], sizes = [8, 16], strides = [1, 1]} : vector<8x48xbf16> to vector<8x16xbf16>
    %cst_13 = arith.constant dense<0.000000e+00> : vector<8x8xf32>
    %20 = tpu.matmul %17, %18, %cst_13 {dimension_numbers = #tpu.dot_dimension_numbers<[1], [1], [0], [0], [0, 0, 1, 0], [], []>} : vector<8x16xbf16>, vector<8x16xbf16>, vector<8x8xf32> -> vector<8x8xf32>
    %cst_14 = arith.constant 2.500000e-01 : f32
    %21 = vector.broadcast %cst_14 : f32 to vector<8x8xf32>
    %22 = arith.mulf %20, %21 : vector<8x8xf32>
    %23 = vector.broadcast %8 : vector<1x8xf32> to vector<8x8xf32>
    %24 = arith.addf %22, %23 : vector<8x8xf32>
    %cst_15 = arith.constant dense<0xFF800000> : vector<8xf32>
    %25 = vector.multi_reduction <maximumf>, %24, %cst_15 [1] : vector<8x8xf32> to vector<8xf32>
    %26 = vector.shape_cast %25 : vector<8xf32> to vector<8x1xf32>
    %27 = vector.broadcast %26 : vector<8x1xf32> to vector<8x8xf32>
    %28 = arith.subf %24, %27 : vector<8x8xf32>
    %29 = math.exp %28 : vector<8x8xf32>
    %cst_16 = arith.constant dense<0.000000e+00> : vector<8xf32>
    %30 = vector.multi_reduction <add>, %29, %cst_16 [1] : vector<8x8xf32> to vector<8xf32>
    %31 = vector.shape_cast %30 : vector<8xf32> to vector<8x1xf32>
    %32 = tpu.reciprocal %31 {approx = true} : vector<8x1xf32> -> vector<8x1xf32>
    %33 = vector.broadcast %32 : vector<8x1xf32> to vector<8x8xf32>
    %34 = arith.mulf %29, %33 : vector<8x8xf32>
    %35 = arith.truncf %34 : vector<8x8xf32> to vector<8x8xbf16>
    %cst_17 = arith.constant dense<0.000000e+00> : vector<8x16xf32>
    %36 = tpu.matmul %35, %19, %cst_17 {dimension_numbers = #tpu.dot_dimension_numbers<[1], [0], [0], [1], [0, 0, 1, 1], [], []>} : vector<8x8xbf16>, vector<8x16xbf16>, vector<8x16xf32> -> vector<8x16xf32>
    %37 = arith.truncf %36 : vector<8x16xf32> to vector<8x16xbf16>
    %c1 = arith.constant 1 : index
    %c0_18 = arith.constant 0 : index
    %c0_19 = arith.constant 0 : index
    %38 = vector.load %arg3[%c1, %c0_18, %c0_19] : memref<2x32x48xbf16, #tpu.memory_space<vmem>>, vector<1x32x48xbf16>
    %39 = vector.shape_cast %38 : vector<1x32x48xbf16> to vector<32x48xbf16>
    %cst_20 = arith.constant dense<0.000000e+00> : vector<8x48xf32>
    %40 = tpu.matmul %1, %39, %cst_20 {dimension_numbers = #tpu.dot_dimension_numbers<[1], [0], [0], [1], [0, 0, 1, 1], [], []>} : vector<8x32xbf16>, vector<32x48xbf16>, vector<8x48xf32> -> vector<8x48xf32>
    %c1_21 = arith.constant 1 : index
    %c0_22 = arith.constant 0 : index
    %c0_23 = arith.constant 0 : index
    %41 = vector.load %arg4[%c1_21, %c0_22, %c0_23] : memref<2x1x48xf32, #tpu.memory_space<vmem>>, vector<1x1x48xf32>
    %42 = vector.shape_cast %41 : vector<1x1x48xf32> to vector<1x48xf32>
    %43 = vector.broadcast %42 : vector<1x48xf32> to vector<8x48xf32>
    %44 = arith.addf %40, %43 : vector<8x48xf32>
    %45 = arith.truncf %44 : vector<8x48xf32> to vector<8x48xbf16>
    %46 = vector.extract_strided_slice %45 {offsets = [0, 0], sizes = [8, 16], strides = [1, 1]} : vector<8x48xbf16> to vector<8x16xbf16>
    %47 = vector.extract_strided_slice %45 {offsets = [0, 16], sizes = [8, 16], strides = [1, 1]} : vector<8x48xbf16> to vector<8x16xbf16>
    %48 = vector.extract_strided_slice %45 {offsets = [0, 32], sizes = [8, 16], strides = [1, 1]} : vector<8x48xbf16> to vector<8x16xbf16>
    %cst_24 = arith.constant dense<0.000000e+00> : vector<8x8xf32>
    %49 = tpu.matmul %46, %47, %cst_24 {dimension_numbers = #tpu.dot_dimension_numbers<[1], [1], [0], [0], [0, 0, 1, 0], [], []>} : vector<8x16xbf16>, vector<8x16xbf16>, vector<8x8xf32> -> vector<8x8xf32>
    %cst_25 = arith.constant 2.500000e-01 : f32
    %50 = vector.broadcast %cst_25 : f32 to vector<8x8xf32>
    %51 = arith.mulf %49, %50 : vector<8x8xf32>
    %52 = vector.broadcast %8 : vector<1x8xf32> to vector<8x8xf32>
    %53 = arith.addf %51, %52 : vector<8x8xf32>
    %cst_26 = arith.constant dense<0xFF800000> : vector<8xf32>
    %54 = vector.multi_reduction <maximumf>, %53, %cst_26 [1] : vector<8x8xf32> to vector<8xf32>
    %55 = vector.shape_cast %54 : vector<8xf32> to vector<8x1xf32>
    %56 = vector.broadcast %55 : vector<8x1xf32> to vector<8x8xf32>
    %57 = arith.subf %53, %56 : vector<8x8xf32>
    %58 = math.exp %57 : vector<8x8xf32>
    %cst_27 = arith.constant dense<0.000000e+00> : vector<8xf32>
    %59 = vector.multi_reduction <add>, %58, %cst_27 [1] : vector<8x8xf32> to vector<8xf32>
    %60 = vector.shape_cast %59 : vector<8xf32> to vector<8x1xf32>
    %61 = tpu.reciprocal %60 {approx = true} : vector<8x1xf32> -> vector<8x1xf32>
    %62 = vector.broadcast %61 : vector<8x1xf32> to vector<8x8xf32>
    %63 = arith.mulf %58, %62 : vector<8x8xf32>
    %64 = arith.truncf %63 : vector<8x8xf32> to vector<8x8xbf16>
    %cst_28 = arith.constant dense<0.000000e+00> : vector<8x16xf32>
    %65 = tpu.matmul %64, %48, %cst_28 {dimension_numbers = #tpu.dot_dimension_numbers<[1], [0], [0], [1], [0, 0, 1, 1], [], []>} : vector<8x8xbf16>, vector<8x16xbf16>, vector<8x16xf32> -> vector<8x16xf32>
    %66 = arith.truncf %65 : vector<8x16xf32> to vector<8x16xbf16>
    %67 = tpu.concatenate %37, %66 in 1 : vector<8x16xbf16>, vector<8x16xbf16> -> vector<8x32xbf16>
    %c0_29 = arith.constant 0 : index
    %c0_30 = arith.constant 0 : index
    %68 = vector.load %arg5[%c0_29, %c0_30] : memref<32x32xbf16, #tpu.memory_space<vmem>>, vector<32x32xbf16>
    %cst_31 = arith.constant dense<0.000000e+00> : vector<8x32xf32>
    %69 = tpu.matmul %67, %68, %cst_31 {dimension_numbers = #tpu.dot_dimension_numbers<[1], [0], [0], [1], [0, 0, 1, 1], [], []>} : vector<8x32xbf16>, vector<32x32xbf16>, vector<8x32xf32> -> vector<8x32xf32>
    %c0_32 = arith.constant 0 : index
    %c0_33 = arith.constant 0 : index
    %70 = vector.load %arg6[%c0_32, %c0_33] : memref<1x32xf32, #tpu.memory_space<vmem>>, vector<1x32xf32>
    %71 = vector.broadcast %70 : vector<1x32xf32> to vector<8x32xf32>
    %72 = arith.addf %69, %71 : vector<8x32xf32>
    %73 = arith.addf %72, %2 : vector<8x32xf32>
    %c0_34 = arith.constant 0 : index
    %c0_35 = arith.constant 0 : index
    %74 = vector.load %arg7[%c0_34, %c0_35] : memref<1x32xf32, #tpu.memory_space<vmem>>, vector<1x32xf32>
    %c0_36 = arith.constant 0 : index
    %c0_37 = arith.constant 0 : index
    %75 = vector.load %arg8[%c0_36, %c0_37] : memref<1x32xf32, #tpu.memory_space<vmem>>, vector<1x32xf32>
    %cst_38 = arith.constant dense<0.000000e+00> : vector<8xf32>
    %76 = vector.multi_reduction <add>, %73, %cst_38 [1] : vector<8x32xf32> to vector<8xf32>
    %77 = vector.shape_cast %76 : vector<8xf32> to vector<8x1xf32>
    %cst_39 = arith.constant 3.200000e+01 : f32
    %78 = vector.broadcast %cst_39 : f32 to vector<8x1xf32>
    %79 = arith.divf %77, %78 : vector<8x1xf32>
    %80 = vector.broadcast %79 : vector<8x1xf32> to vector<8x32xf32>
    %81 = arith.subf %73, %80 : vector<8x32xf32>
    %82 = arith.mulf %81, %81 : vector<8x32xf32>
    %cst_40 = arith.constant dense<0.000000e+00> : vector<8xf32>
    %83 = vector.multi_reduction <add>, %82, %cst_40 [1] : vector<8x32xf32> to vector<8xf32>
    %84 = vector.shape_cast %83 : vector<8xf32> to vector<8x1xf32>
    %cst_41 = arith.constant 3.200000e+01 : f32
    %85 = vector.broadcast %cst_41 : f32 to vector<8x1xf32>
    %86 = arith.divf %84, %85 : vector<8x1xf32>
    %cst_42 = arith.constant 9.99999996E-13 : f32
    %87 = vector.broadcast %cst_42 : f32 to vector<8x1xf32>
    %88 = arith.addf %86, %87 : vector<8x1xf32>
    %89 = math.rsqrt %88 : vector<8x1xf32>
    %90 = vector.broadcast %89 : vector<8x1xf32> to vector<8x32xf32>
    %91 = arith.mulf %81, %90 : vector<8x32xf32>
    %92 = vector.broadcast %74 : vector<1x32xf32> to vector<8x32xf32>
    %93 = arith.mulf %91, %92 : vector<8x32xf32>
    %94 = vector.broadcast %75 : vector<1x32xf32> to vector<8x32xf32>
    %95 = arith.addf %93, %94 : vector<8x32xf32>
    %96 = arith.truncf %95 : vector<8x32xf32> to vector<8x32xbf16>
    %c0_43 = arith.constant 0 : index
    %c0_44 = arith.constant 0 : index
    %97 = vector.load %arg9[%c0_43, %c0_44] : memref<32x64xbf16, #tpu.memory_space<vmem>>, vector<32x64xbf16>
    %cst_45 = arith.constant dense<0.000000e+00> : vector<8x64xf32>
    %98 = tpu.matmul %96, %97, %cst_45 {dimension_numbers = #tpu.dot_dimension_numbers<[1], [0], [0], [1], [0, 0, 1, 1], [], []>} : vector<8x32xbf16>, vector<32x64xbf16>, vector<8x64xf32> -> vector<8x64xf32>
    %c0_46 = arith.constant 0 : index
    %c0_47 = arith.constant 0 : index
    %99 = vector.load %arg10[%c0_46, %c0_47] : memref<1x64xf32, #tpu.memory_space<vmem>>, vector<1x64xf32>
    %100 = vector.broadcast %99 : vector<1x64xf32> to vector<8x64xf32>
    %101 = arith.addf %98, %100 : vector<8x64xf32>
    %102 = arith.mulf %101, %101 : vector<8x64xf32>
    %103 = arith.mulf %101, %102 : vector<8x64xf32>
    %cst_48 = arith.constant 4.471500e-02 : f32
    %104 = vector.broadcast %cst_48 : f32 to vector<8x64xf32>
    %105 = arith.mulf %104, %103 : vector<8x64xf32>
    %106 = arith.addf %101, %105 : vector<8x64xf32>
    %cst_49 = arith.constant 0.797884583 : f32
    %107 = vector.broadcast %cst_49 : f32 to vector<8x64xf32>
    %108 = arith.mulf %107, %106 : vector<8x64xf32>
    %109 = math.tanh %108 : vector<8x64xf32>
    %cst_50 = arith.constant 1.000000e+00 : f32
    %110 = vector.broadcast %cst_50 : f32 to vector<8x64xf32>
    %111 = arith.addf %110, %109 : vector<8x64xf32>
    %cst_51 = arith.constant 5.000000e-01 : f32
    %112 = vector.broadcast %cst_51 : f32 to vector<8x64xf32>
    %113 = arith.mulf %112, %111 : vector<8x64xf32>
    %114 = arith.mulf %101, %113 : vector<8x64xf32>
    %115 = arith.truncf %114 : vector<8x64xf32> to vector<8x64xbf16>
    %c0_52 = arith.constant 0 : index
    %c0_53 = arith.constant 0 : index
    %116 = vector.load %arg11[%c0_52, %c0_53] : memref<64x32xbf16, #tpu.memory_space<vmem>>, vector<64x32xbf16>
    %cst_54 = arith.constant dense<0.000000e+00> : vector<8x32xf32>
    %117 = tpu.matmul %115, %116, %cst_54 {dimension_numbers = #tpu.dot_dimension_numbers<[1], [0], [0], [1], [0, 0, 1, 1], [], []>} : vector<8x64xbf16>, vector<64x32xbf16>, vector<8x32xf32> -> vector<8x32xf32>
    %c0_55 = arith.constant 0 : index
    %c0_56 = arith.constant 0 : index
    %118 = vector.load %arg12[%c0_55, %c0_56] : memref<1x32xf32, #tpu.memory_space<vmem>>, vector<1x32xf32>
    %119 = vector.broadcast %118 : vector<1x32xf32> to vector<8x32xf32>
    %120 = arith.addf %117, %119 : vector<8x32xf32>
    %121 = arith.addf %120, %95 : vector<8x32xf32>
    %c0_57 = arith.constant 0 : index
    %c0_58 = arith.constant 0 : index
    %122 = vector.load %arg13[%c0_57, %c0_58] : memref<1x32xf32, #tpu.memory_space<vmem>>, vector<1x32xf32>
    %c0_59 = arith.constant 0 : index
    %c0_60 = arith.constant 0 : index
    %123 = vector.load %arg14[%c0_59, %c0_60] : memref<1x32xf32, #tpu.memory_space<vmem>>, vector<1x32xf32>
    %cst_61 = arith.constant dense<0.000000e+00> : vector<8xf32>
    %124 = vector.multi_reduction <add>, %121, %cst_61 [1] : vector<8x32xf32> to vector<8xf32>
    %125 = vector.shape_cast %124 : vector<8xf32> to vector<8x1xf32>
    %cst_62 = arith.constant 3.200000e+01 : f32
    %126 = vector.broadcast %cst_62 : f32 to vector<8x1xf32>
    %127 = arith.divf %125, %126 : vector<8x1xf32>
    %128 = vector.broadcast %127 : vector<8x1xf32> to vector<8x32xf32>
    %129 = arith.subf %121, %128 : vector<8x32xf32>
    %130 = arith.mulf %129, %129 : vector<8x32xf32>
    %cst_63 = arith.constant dense<0.000000e+00> : vector<8xf32>
    %131 = vector.multi_reduction <add>, %130, %cst_63 [1] : vector<8x32xf32> to vector<8xf32>
    %132 = vector.shape_cast %131 : vector<8xf32> to vector<8x1xf32>
    %cst_64 = arith.constant 3.200000e+01 : f32
    %133 = vector.broadcast %cst_64 : f32 to vector<8x1xf32>
    %134 = arith.divf %132, %133 : vector<8x1xf32>
    %cst_65 = arith.constant 9.99999996E-13 : f32
    %135 = vector.broadcast %cst_65 : f32 to vector<8x1xf32>
    %136 = arith.addf %134, %135 : vector<8x1xf32>
    %137 = math.rsqrt %136 : vector<8x1xf32>
    %138 = vector.broadcast %137 : vector<8x1xf32> to vector<8x32xf32>
    %139 = arith.mulf %129, %138 : vector<8x32xf32>
    %140 = vector.broadcast %122 : vector<1x32xf32> to vector<8x32xf32>
    %141 = arith.mulf %139, %140 : vector<8x32xf32>
    %142 = vector.broadcast %123 : vector<1x32xf32> to vector<8x32xf32>
    %143 = arith.addf %141, %142 : vector<8x32xf32>
    %144 = arith.truncf %143 : vector<8x32xf32> to vector<8x32xbf16>
    %c0_66 = arith.constant 0 : index
    %c0_67 = arith.constant 0 : index
    %c0_68 = arith.constant 0 : index
    %145 = vector.load %arg15[%c0_66, %c0_67, %c0_68] : memref<1x8x32xbf16, #tpu.memory_space<vmem>>, vector<1x8x32xbf16>
    %146 = vector.shape_cast %145 : vector<1x8x32xbf16> to vector<8x32xbf16>
    %147 = vector.shape_cast %144 : vector<8x32xbf16> to vector<1x8x32xbf16>
    tpu.vector_store %arg15[%c0_66, %c0_67, %c0_68], %147 {strides = array<i32>} : memref<1x8x32xbf16, #tpu.memory_space<vmem>>, vector<1x8x32xbf16>,
    return
  }
  func.func @transform_0(%arg0: i32) -> (i32, i32, i32) {
    %c0_i32 = arith.constant 0 : i32
    %c0_i32_0 = arith.constant 0 : i32
    %c0_i32_1 = arith.constant 0 : i32
    return %arg0, %c0_i32, %c0_i32_0 : i32, i32, i32
  }
  func.func @transform_1(%arg0: i32) -> (i32, i32, i32) {
    %c0_i32 = arith.constant 0 : i32
    %c0_i32_0 = arith.constant 0 : i32
    %c0_i32_1 = arith.constant 0 : i32
    return %arg0, %c0_i32, %c0_i32_0 : i32, i32, i32
  }
  func.func @transform_2(%arg0: i32) -> (i32, i32, i32) {
    %c0_i32 = arith.constant 0 : i32
    %c0_i32_0 = arith.constant 0 : i32
    %c0_i32_1 = arith.constant 0 : i32
    %c0_i32_2 = arith.constant 0 : i32
    return %c0_i32, %c0_i32_0, %c0_i32_1 : i32, i32, i32
  }
  func.func @transform_3(%arg0: i32) -> (i32, i32, i32) {
    %c0_i32 = arith.constant 0 : i32
    %c0_i32_0 = arith.constant 0 : i32
    %c0_i32_1 = arith.constant 0 : i32
    %c0_i32_2 = arith.constant 0 : i32
    return %c0_i32, %c0_i32_0, %c0_i32_1 : i32, i32, i32
  }
  func.func @transform_4(%arg0: i32) -> (i32, i32) {
    %c0_i32 = arith.constant 0 : i32
    %c0_i32_0 = arith.constant 0 : i32
    %c0_i32_1 = arith.constant 0 : i32
    return %c0_i32, %c0_i32_0 : i32, i32
  }
  func.func @transform_5(%arg0: i32) -> (i32, i32) {
    %c0_i32 = arith.constant 0 : i32
    %c0_i32_0 = arith.constant 0 : i32
    %c0_i32_1 = arith.constant 0 : i32
    return %c0_i32, %c0_i32_0 : i32, i32
  }
  func.func @transform_6(%arg0: i32) -> (i32, i32) {
    %c0_i32 = arith.constant 0 : i32
    %c0_i32_0 = arith.constant 0 : i32
    %c0_i32_1 = arith.constant 0 : i32
    return %c0_i32, %c0_i32_0 : i32, i32
  }
  func.func @transform_7(%arg0: i32) -> (i32, i32) {
    %c0_i32 = arith.constant 0 : i32
    %c0_i32_0 = arith.constant 0 : i32
    %c0_i32_1 = arith.constant 0 : i32
    return %c0_i32, %c0_i32_0 : i32, i32
  }
  func.func @transform_8(%arg0: i32) -> (i32, i32) {
    %c0_i32 = arith.constant 0 : i32
    %c0_i32_0 = arith.constant 0 : i32
    %c0_i32_1 = arith.constant 0 : i32
    return %c0_i32, %c0_i32_0 : i32, i32
  }
  func.func @transform_9(%arg0: i32) -> (i32, i32) {
    %c0_i32 = arith.constant 0 : i32
    %c0_i32_0 = arith.constant 0 : i32
    %c0_i32_1 = arith.constant 0 : i32
    return %c0_i32, %c0_i32_0 : i32, i32
  }
  func.func @transform_10(%arg0: i32) -> (i32, i32) {
    %c0_i32 = arith.constant 0 : i32
    %c0_i32_0 = arith.constant 0 : i32
    %c0_i32_1 = arith.constant 0 : i32
    return %c0_i32, %c0_i32_0 : i32, i32
  }
  func.func @transform_11(%arg0: i32) -> (i32, i32) {
    %c0_i32 = arith.constant 0 : i32
    %c0_i32_0 = arith.constant 0 : i32
    %c0_i32_1 = arith.constant 0 : i32
    return %c0_i32, %c0_i32_0 : i32, i32
  }
  func.func @transform_12(%arg0: i32) -> (i32, i32) {
    %c0_i32 = arith.constant 0 : i32
    %c0_i32_0 = arith.constant 0 : i32
    %c0_i32_1 = arith.constant 0 : i32
    return %c0_i32, %c0_i32_0 : i32, i32
  }
  func.func @transform_13(%arg0: i32) -> (i32, i32) {
    %c0_i32 = arith.constant 0 : i32
    %c0_i32_0 = arith.constant 0 : i32
    %c0_i32_1 = arith.constant 0 : i32
    return %c0_i32, %c0_i32_0 : i32, i32
  }
  func.func @transform_14(%arg0: i32) -> (i32, i32, i32) {
    %c0_i32 = arith.constant 0 : i32
    %c0_i32_0 = arith.constant 0 : i32
    %c0_i32_1 = arith.constant 0 : i32
    return %arg0, %c0_i32, %c0_i32_0 : i32, i32, i32
  }
}

module attributes {stable_mosaic.version = 11 : i64} {
  func.func @_encoder_layer_kernel(%arg0: i32, %arg1: memref<1x8x32xbf16, #tpu.memory_space<vmem>>, %arg2: memref<1x1x8xf32, #tpu.memory_space<vmem>>, %arg3: memref<2x32x48xbf16, #tpu.memory_space<vmem>>, %arg4: memref<2x1x48xf32, #tpu.memory_space<vmem>>, %arg5: memref<32x32xbf16, #tpu.memory_space<vmem>>, %arg6: memref<1x32xf32, #tpu.memory_space<vmem>>, %arg7: memref<1x32xf32, #tpu.memory_space<vmem>>, %arg8: memref<1x32xf32, #tpu.memory_space<vmem>>, %arg9: memref<32x64xbf16, #tpu.memory_space<vmem>>, %arg10: memref<1x64xf32, #tpu.memory_space<vmem>>, %arg11: memref<64x32xbf16, #tpu.memory_space<vmem>>, %arg12: memref<1x32xf32, #tpu.memory_space<vmem>>, %arg13: memref<1x32xf32, #tpu.memory_space<vmem>>, %arg14: memref<1x32xf32, #tpu.memory_space<vmem>>, %arg15: memref<1x8x32xbf16, #tpu.memory_space<vmem>>) attributes {dimension_semantics = [#tpu.dimension_semantics<parallel>], iteration_bounds = array<i64: 2>, scalar_prefetch = 0 : i64, scratch_operands = 0 : i64, tpu.core_type = #tpu.core_type<tc>, window_params = [{transform_indices = @transform_0, window_bounds = array<i64: 1, 8, 32>}, {transform_indices = @transform_1, window_bounds = array<i64: 1, 1, 8>}, {pipeline_mode = #tpu.pipeline_mode<synchronous>, transform_indices = @transform_2, window_bounds = array<i64: 2, 32, 48>}, {pipeline_mode = #tpu.pipeline_mode<synchronous>, transform_indices = @transform_3, window_bounds = array<i64: 2, 1, 48>}, {pipeline_mode = #tpu.pipeline_mode<synchronous>, transform_indices = @transform_4, window_bounds = array<i64: 32, 32>}, {pipeline_mode = #tpu.pipeline_mode<synchronous>, transform_indices = @transform_5, window_bounds = array<i64: 1, 32>}, {pipeline_mode = #tpu.pipeline_mode<synchronous>, transform_indices = @transform_6, window_bounds = array<i64: 1, 32>}, {pipeline_mode = #tpu.pipeline_mode<synchronous>, transform_indices = @transform_7, window_bounds = array<i64: 1, 32>}, {pipeline_mode = #tpu.pipeline_mode<synchronous>, transform_indices = @transform_8, window_bounds = array<i64: 32, 64>}, {pipeline_mode = #tpu.pipeline_mode<synchronous>, transform_indices = @transform_9, window_bounds = array<i64: 1, 64>}, {pipeline_mode = #tpu.pipeline_mode<synchronous>, transform_indices = @transform_10, window_bounds = array<i64: 64, 32>}, {pipeline_mode = #tpu.pipeline_mode<synchronous>, transform_indices = @transform_11, window_bounds = array<i64: 1, 32>}, {pipeline_mode = #tpu.pipeline_mode<synchronous>, transform_indices = @transform_12, window_bounds = array<i64: 1, 32>}, {pipeline_mode = #tpu.pipeline_mode<synchronous>, transform_indices = @transform_13, window_bounds = array<i64: 1, 32>}, {transform_indices = @transform_14, window_bounds = array<i64: 1, 8, 32>}]} {
    %c0 = arith.constant 0 : index
    %c0_0 = arith.constant 0 : index
    %c0_1 = arith.constant 0 : index
    %0 = vector.load %arg1[%c0, %c0_0, %c0_1] : memref<1x8x32xbf16, #tpu.memory_space<vmem>>, vector<1x8x32xbf16>
    %1 = vector.shape_cast %0 : vector<1x8x32xbf16> to vector<8x32xbf16>
    %2 = arith.extf %1 : vector<8x32xbf16> to vector<8x32xf32>
    %c0_2 = arith.constant 0 : index
    %c0_3 = arith.constant 0 : index
    %c0_4 = arith.constant 0 : index
    %3 = vector.load %arg2[%c0_2, %c0_3, %c0_4] : memref<1x1x8xf32, #tpu.memory_space<vmem>>, vector<1x1x8xf32>
    %4 = vector.shape_cast %3 : vector<1x1x8xf32> to vector<1x8xf32>
    %cst = arith.constant 1.000000e+00 : f32
    %5 = vector.broadcast %cst : f32 to vector<1x8xf32>
    %6 = arith.subf %5, %4 : vector<1x8xf32>
    %cst_5 = arith.constant -1.000000e+09 : f32
    %7 = vector.broadcast %cst_5 : f32 to vector<1x8xf32>
    %8 = arith.mulf %6, %7 : vector<1x8xf32>
    %c0_6 = arith.constant 0 : index
    %c0_7 = arith.constant 0 : index
    %c0_8 = arith.constant 0 : index
    %9 = vector.load %arg3[%c0_6, %c0_7, %c0_8] : memref<2x32x48xbf16, #tpu.memory_space<vmem>>, vector<1x32x48xbf16>
    %10 = vector.shape_cast %9 : vector<1x32x48xbf16> to vector<32x48xbf16>
    %cst_9 = arith.constant dense<0.000000e+00> : vector<8x48xf32>
    %11 = tpu.matmul %1, %10, %cst_9 {dimension_numbers = #tpu.dot_dimension_numbers<[1], [0], [0], [1], [0, 0, 1, 1], [], []>} : vector<8x32xbf16>, vector<32x48xbf16>, vector<8x48xf32> -> vector<8x48xf32>
    %c0_10 = arith.constant 0 : index
    %c0_11 = arith.constant 0 : index
    %c0_12 = arith.constant 0 : index
    %12 = vector.load %arg4[%c0_10, %c0_11, %c0_12] : memref<2x1x48xf32, #tpu.memory_space<vmem>>, vector<1x1x48xf32>
    %13 = vector.shape_cast %12 : vector<1x1x48xf32> to vector<1x48xf32>
    %14 = vector.broadcast %13 : vector<1x48xf32> to vector<8x48xf32>
    %15 = arith.addf %11, %14 : vector<8x48xf32>
    %16 = arith.truncf %15 : vector<8x48xf32> to vector<8x48xbf16>
    %17 = vector.extract_strided_slice %16 {offsets = [0, 0], sizes = [8, 16], strides = [1, 1]} : vector<8x48xbf16> to vector<8x16xbf16>
    %18 = vector.extract_strided_slice %16 {offsets = [0, 16], sizes = [8, 16], strides = [1, 1]} : vector<8x48xbf16> to vector<8x16xbf16>
    %19 = vector.extract_strided_slice %16 {offsets = [0, 32], sizes = [8, 16], strides = [1, 1]} : vector<8x48xbf16> to vector<8x16xbf16>
    %cst_13 = arith.constant dense<0.000000e+00> : vector<8x8xf32>
    %20 = tpu.matmul %17, %18, %cst_13 {dimension_numbers = #tpu.dot_dimension_numbers<[1], [1], [0], [0], [0, 0, 1, 0], [], []>} : vector<8x16xbf16>, vector<8x16xbf16>, vector<8x8xf32> -> vector<8x8xf32>
    %cst_14 = arith.constant 2.500000e-01 : f32
    %21 = vector.broadcast %cst_14 : f32 to vector<8x8xf32>
    %22 = arith.mulf %20, %21 : vector<8x8xf32>
    %23 = vector.broadcast %8 : vector<1x8xf32> to vector<8x8xf32>
    %24 = arith.addf %22, %23 : vector<8x8xf32>
    %cst_15 = arith.constant dense<0xFF800000> : vector<8xf32>
    %25 = vector.multi_reduction <maximumf>, %24, %cst_15 [1] : vector<8x8xf32> to vector<8xf32>
    %26 = vector.shape_cast %25 : vector<8xf32> to vector<8x1xf32>
    %27 = vector.broadcast %26 : vector<8x1xf32> to vector<8x8xf32>
    %28 = arith.subf %24, %27 : vector<8x8xf32>
    %29 = math.exp %28 : vector<8x8xf32>
    %cst_16 = arith.constant dense<0.000000e+00> : vector<8xf32>
    %30 = vector.multi_reduction <add>, %29, %cst_16 [1] : vector<8x8xf32> to vector<8xf32>
    %31 = vector.shape_cast %30 : vector<8xf32> to vector<8x1xf32>
    %32 = tpu.reciprocal %31 {approx = true} : vector<8x1xf32> -> vector<8x1xf32>
    %33 = vector.broadcast %32 : vector<8x1xf32> to vector<8x8xf32>
    %34 = arith.mulf %29, %33 : vector<8x8xf32>
    %35 = arith.truncf %34 : vector<8x8xf32> to vector<8x8xbf16>
    %cst_17 = arith.constant dense<0.000000e+00> : vector<8x16xf32>
    %36 = tpu.matmul %35, %19, %cst_17 {dimension_numbers = #tpu.dot_dimension_numbers<[1], [0], [0], [1], [0, 0, 1, 1], [], []>} : vector<8x8xbf16>, vector<8x16xbf16>, vector<8x16xf32> -> vector<8x16xf32>
    %37 = arith.truncf %36 : vector<8x16xf32> to vector<8x16xbf16>
    %c1 = arith.constant 1 : index
    %c0_18 = arith.constant 0 : index
    %c0_19 = arith.constant 0 : index
    %38 = vector.load %arg3[%c1, %c0_18, %c0_19] : memref<2x32x48xbf16, #tpu.memory_space<vmem>>, vector<1x32x48xbf16>
    %39 = vector.shape_cast %38 : vector<1x32x48xbf16> to vector<32x48xbf16>
    %cst_20 = arith.constant dense<0.000000e+00> : vector<8x48xf32>
    %40 = tpu.matmul %1, %39, %cst_20 {dimension_numbers = #tpu.dot_dimension_numbers<[1], [0], [0], [1], [0, 0, 1, 1], [], []>} : vector<8x32xbf16>, vector<32x48xbf16>, vector<8x48xf32> -> vector<8x48xf32>
    %c1_21 = arith.constant 1 : index
    %c0_22 = arith.constant 0 : index
    %c0_23 = arith.constant 0 : index
    %41 = vector.load %arg4[%c1_21, %c0_22, %c0_23] : memref<2x1x48xf32, #tpu.memory_space<vmem>>, vector<1x1x48xf32>
    %42 = vector.shape_cast %41 : vector<1x1x48xf32> to vector<1x48xf32>
    %43 = vector.broadcast %42 : vector<1x48xf32> to vector<8x48xf32>
    %44 = arith.addf %40, %43 : vector<8x48xf32>
    %45 = arith.truncf %44 : vector<8x48xf32> to vector<8x48xbf16>
    %46 = vector.extract_strided_slice %45 {offsets = [0, 0], sizes = [8, 16], strides = [1, 1]} : vector<8x48xbf16> to vector<8x16xbf16>
    %47 = vector.extract_strided_slice %45 {offsets = [0, 16], sizes = [8, 16], strides = [1, 1]} : vector<8x48xbf16> to vector<8x16xbf16>
    %48 = vector.extract_strided_slice %45 {offsets = [0, 32], sizes = [8, 16], strides = [1, 1]} : vector<8x48xbf16> to vector<8x16xbf16>
    %cst_24 = arith.constant dense<0.000000e+00> : vector<8x8xf32>
    %49 = tpu.matmul %46, %47, %cst_24 {dimension_numbers = #tpu.dot_dimension_numbers<[1], [1], [0], [0], [0, 0, 1, 0], [], []>} : vector<8x16xbf16>, vector<8x16xbf16>, vector<8x8xf32> -> vector<8x8xf32>
    %cst_25 = arith.constant 2.500000e-01 : f32
    %50 = vector.broadcast %cst_25 : f32 to vector<8x8xf32>
    %51 = arith.mulf %49, %50 : vector<8x8xf32>
    %52 = vector.broadcast %8 : vector<1x8xf32> to vector<8x8xf32>
    %53 = arith.addf %51, %52 : vector<8x8xf32>
    %cst_26 = arith.constant dense<0xFF800000> : vector<8xf32>
    %54 = vector.multi_reduction <maximumf>, %53, %cst_26 [1] : vector<8x8xf32> to vector<8xf32>
    %55 = vector.shape_cast %54 : vector<8xf32> to vector<8x1xf32>
    %56 = vector.broadcast %55 : vector<8x1xf32> to vector<8x8xf32>
    %57 = arith.subf %53, %56 : vector<8x8xf32>
    %58 = math.exp %57 : vector<8x8xf32>
    %cst_27 = arith.constant dense<0.000000e+00> : vector<8xf32>
    %59 = vector.multi_reduction <add>, %58, %cst_27 [1] : vector<8x8xf32> to vector<8xf32>
    %60 = vector.shape_cast %59 : vector<8xf32> to vector<8x1xf32>
    %61 = tpu.reciprocal %60 {approx = true} : vector<8x1xf32> -> vector<8x1xf32>
    %62 = vector.broadcast %61 : vector<8x1xf32> to vector<8x8xf32>
    %63 = arith.mulf %58, %62 : vector<8x8xf32>
    %64 = arith.truncf %63 : vector<8x8xf32> to vector<8x8xbf16>
    %cst_28 = arith.constant dense<0.000000e+00> : vector<8x16xf32>
    %65 = tpu.matmul %64, %48, %cst_28 {dimension_numbers = #tpu.dot_dimension_numbers<[1], [0], [0], [1], [0, 0, 1, 1], [], []>} : vector<8x8xbf16>, vector<8x16xbf16>, vector<8x16xf32> -> vector<8x16xf32>
    %66 = arith.truncf %65 : vector<8x16xf32> to vector<8x16xbf16>
    %67 = tpu.concatenate %37, %66 in 1 : vector<8x16xbf16>, vector<8x16xbf16> -> vector<8x32xbf16>
    %c0_29 = arith.constant 0 : index
    %c0_30 = arith.constant 0 : index
    %68 = vector.load %arg5[%c0_29, %c0_30] : memref<32x32xbf16, #tpu.memory_space<vmem>>, vector<32x32xbf16>
    %cst_31 = arith.constant dense<0.000000e+00> : vector<8x32xf32>
    %69 = tpu.matmul %67, %68, %cst_31 {dimension_numbers = #tpu.dot_dimension_numbers<[1], [0], [0], [1], [0, 0, 1, 1], [], []>} : vector<8x32xbf16>, vector<32x32xbf16>, vector<8x32xf32> -> vector<8x32xf32>
    %c0_32 = arith.constant 0 : index
    %c0_33 = arith.constant 0 : index
    %70 = vector.load %arg6[%c0_32, %c0_33] : memref<1x32xf32, #tpu.memory_space<vmem>>, vector<1x32xf32>
    %71 = vector.broadcast %70 : vector<1x32xf32> to vector<8x32xf32>
    %72 = arith.addf %69, %71 : vector<8x32xf32>
    %73 = arith.addf %72, %2 : vector<8x32xf32>
    %c0_34 = arith.constant 0 : index
    %c0_35 = arith.constant 0 : index
    %74 = vector.load %arg7[%c0_34, %c0_35] : memref<1x32xf32, #tpu.memory_space<vmem>>, vector<1x32xf32>
    %c0_36 = arith.constant 0 : index
    %c0_37 = arith.constant 0 : index
    %75 = vector.load %arg8[%c0_36, %c0_37] : memref<1x32xf32, #tpu.memory_space<vmem>>, vector<1x32xf32>
    %cst_38 = arith.constant dense<0.000000e+00> : vector<8xf32>
    %76 = vector.multi_reduction <add>, %73, %cst_38 [1] : vector<8x32xf32> to vector<8xf32>
    %77 = vector.shape_cast %76 : vector<8xf32> to vector<8x1xf32>
    %cst_39 = arith.constant 3.200000e+01 : f32
    %78 = vector.broadcast %cst_39 : f32 to vector<8x1xf32>
    %79 = arith.divf %77, %78 : vector<8x1xf32>
    %80 = vector.broadcast %79 : vector<8x1xf32> to vector<8x32xf32>
    %81 = arith.subf %73, %80 : vector<8x32xf32>
    %82 = arith.mulf %81, %81 : vector<8x32xf32>
    %cst_40 = arith.constant dense<0.000000e+00> : vector<8xf32>
    %83 = vector.multi_reduction <add>, %82, %cst_40 [1] : vector<8x32xf32> to vector<8xf32>
    %84 = vector.shape_cast %83 : vector<8xf32> to vector<8x1xf32>
    %cst_41 = arith.constant 3.200000e+01 : f32
    %85 = vector.broadcast %cst_41 : f32 to vector<8x1xf32>
    %86 = arith.divf %84, %85 : vector<8x1xf32>
    %cst_42 = arith.constant 9.99999996E-13 : f32
    %87 = vector.broadcast %cst_42 : f32 to vector<8x1xf32>
    %88 = arith.addf %86, %87 : vector<8x1xf32>
    %89 = math.rsqrt %88 : vector<8x1xf32>
    %90 = vector.broadcast %89 : vector<8x1xf32> to vector<8x32xf32>
    %91 = arith.mulf %81, %90 : vector<8x32xf32>
    %92 = vector.broadcast %74 : vector<1x32xf32> to vector<8x32xf32>
    %93 = arith.mulf %91, %92 : vector<8x32xf32>
    %94 = vector.broadcast %75 : vector<1x32xf32> to vector<8x32xf32>
    %95 = arith.addf %93, %94 : vector<8x32xf32>
    %96 = arith.truncf %95 : vector<8x32xf32> to vector<8x32xbf16>
    %c0_43 = arith.constant 0 : index
    %c0_44 = arith.constant 0 : index
    %97 = vector.load %arg9[%c0_43, %c0_44] : memref<32x64xbf16, #tpu.memory_space<vmem>>, vector<32x64xbf16>
    %cst_45 = arith.constant dense<0.000000e+00> : vector<8x64xf32>
    %98 = tpu.matmul %96, %97, %cst_45 {dimension_numbers = #tpu.dot_dimension_numbers<[1], [0], [0], [1], [0, 0, 1, 1], [], []>} : vector<8x32xbf16>, vector<32x64xbf16>, vector<8x64xf32> -> vector<8x64xf32>
    %c0_46 = arith.constant 0 : index
    %c0_47 = arith.constant 0 : index
    %99 = vector.load %arg10[%c0_46, %c0_47] : memref<1x64xf32, #tpu.memory_space<vmem>>, vector<1x64xf32>
    %100 = vector.broadcast %99 : vector<1x64xf32> to vector<8x64xf32>
    %101 = arith.addf %98, %100 : vector<8x64xf32>
    %102 = arith.mulf %101, %101 : vector<8x64xf32>
    %103 = arith.mulf %101, %102 : vector<8x64xf32>
    %cst_48 = arith.constant 4.471500e-02 : f32
    %104 = vector.broadcast %cst_48 : f32 to vector<8x64xf32>
    %105 = arith.mulf %104, %103 : vector<8x64xf32>
    %106 = arith.addf %101, %105 : vector<8x64xf32>
    %cst_49 = arith.constant 0.797884583 : f32
    %107 = vector.broadcast %cst_49 : f32 to vector<8x64xf32>
    %108 = arith.mulf %107, %106 : vector<8x64xf32>
    %109 = math.tanh %108 : vector<8x64xf32>
    %cst_50 = arith.constant 1.000000e+00 : f32
    %110 = vector.broadcast %cst_50 : f32 to vector<8x64xf32>
    %111 = arith.addf %110, %109 : vector<8x64xf32>
    %cst_51 = arith.constant 5.000000e-01 : f32
    %112 = vector.broadcast %cst_51 : f32 to vector<8x64xf32>
    %113 = arith.mulf %112, %111 : vector<8x64xf32>
    %114 = arith.mulf %101, %113 : vector<8x64xf32>
    %115 = arith.truncf %114 : vector<8x64xf32> to vector<8x64xbf16>
    %c0_52 = arith.constant 0 : index
    %c0_53 = arith.constant 0 : index
    %116 = vector.load %arg11[%c0_52, %c0_53] : memref<64x32xbf16, #tpu.memory_space<vmem>>, vector<64x32xbf16>
    %cst_54 = arith.constant dense<0.000000e+00> : vector<8x32xf32>
    %117 = tpu.matmul %115, %116, %cst_54 {dimension_numbers = #tpu.dot_dimension_numbers<[1], [0], [0], [1], [0, 0, 1, 1], [], []>} : vector<8x64xbf16>, vector<64x32xbf16>, vector<8x32xf32> -> vector<8x32xf32>
    %c0_55 = arith.constant 0 : index
    %c0_56 = arith.constant 0 : index
    %118 = vector.load %arg12[%c0_55, %c0_56] : memref<1x32xf32, #tpu.memory_space<vmem>>, vector<1x32xf32>
    %119 = vector.broadcast %118 : vector<1x32xf32> to vector<8x32xf32>
    %120 = arith.addf %117, %119 : vector<8x32xf32>
    %121 = arith.addf %120, %95 : vector<8x32xf32>
    %c0_57 = arith.constant 0 : index
    %c0_58 = arith.constant 0 : index
    %122 = vector.load %arg13[%c0_57, %c0_58] : memref<1x32xf32, #tpu.memory_space<vmem>>, vector<1x32xf32>
    %c0_59 = arith.constant 0 : index
    %c0_60 = arith.constant 0 : index
    %123 = vector.load %arg14[%c0_59, %c0_60] : memref<1x32xf32, #tpu.memory_space<vmem>>, vector<1x32xf32>
    %cst_61 = arith.constant dense<0.000000e+00> : vector<8xf32>
    %124 = vector.multi_reduction <add>, %121, %cst_61 [1] : vector<8x32xf32> to vector<8xf32>
    %125 = vector.shape_cast %124 : vector<8xf32> to vector<8x1xf32>
    %cst_62 = arith.constant 3.200000e+01 : f32
    %126 = vector.broadcast %cst_62 : f32 to vector<8x1xf32>
    %127 = arith.divf %125, %126 : vector<8x1xf32>
    %128 = vector.broadcast %127 : vector<8x1xf32> to vector<8x32xf32>
    %129 = arith.subf %121, %128 : vector<8x32xf32>
    %130 = arith.mulf %129, %129 : vector<8x32xf32>
    %cst_63 = arith.constant dense<0.000000e+00> : vector<8xf32>
    %131 = vector.multi_reduction <add>, %130, %cst_63 [1] : vector<8x32xf32> to vector<8xf32>
    %132 = vector.shape_cast %131 : vector<8xf32> to vector<8x1xf32>
    %cst_64 = arith.constant 3.200000e+01 : f32
    %133 = vector.broadcast %cst_64 : f32 to vector<8x1xf32>
    %134 = arith.divf %132, %133 : vector<8x1xf32>
    %cst_65 = arith.constant 9.99999996E-13 : f32
    %135 = vector.broadcast %cst_65 : f32 to vector<8x1xf32>
    %136 = arith.addf %134, %135 : vector<8x1xf32>
    %137 = math.rsqrt %136 : vector<8x1xf32>
    %138 = vector.broadcast %137 : vector<8x1xf32> to vector<8x32xf32>
    %139 = arith.mulf %129, %138 : vector<8x32xf32>
    %140 = vector.broadcast %122 : vector<1x32xf32> to vector<8x32xf32>
    %141 = arith.mulf %139, %140 : vector<8x32xf32>
    %142 = vector.broadcast %123 : vector<1x32xf32> to vector<8x32xf32>
    %143 = arith.addf %141, %142 : vector<8x32xf32>
    %144 = arith.truncf %143 : vector<8x32xf32> to vector<8x32xbf16>
    %c0_66 = arith.constant 0 : index
    %c0_67 = arith.constant 0 : index
    %c0_68 = arith.constant 0 : index
    %145 = vector.load %arg15[%c0_66, %c0_67, %c0_68] : memref<1x8x32xbf16, #tpu.memory_space<vmem>>, vector<1x8x32xbf16>
    %146 = vector.shape_cast %145 : vector<1x8x32xbf16> to vector<8x32xbf16>
    %147 = vector.shape_cast %144 : vector<8x32xbf16> to vector<1x8x32xbf16>
    tpu.vector_store %arg15[%c0_66, %c0_67, %c0_68], %147 {strides = array<i32>} : memref<1x8x32xbf16, #tpu.memory_space<vmem>>, vector<1x8x32xbf16>,
    return
  }
  func.func @transform_0(%arg0: i32) -> (i32, i32, i32) {
    %c0_i32 = arith.constant 0 : i32
    %c0_i32_0 = arith.constant 0 : i32
    %c0_i32_1 = arith.constant 0 : i32
    return %arg0, %c0_i32, %c0_i32_0 : i32, i32, i32
  }
  func.func @transform_1(%arg0: i32) -> (i32, i32, i32) {
    %c0_i32 = arith.constant 0 : i32
    %c0_i32_0 = arith.constant 0 : i32
    %c0_i32_1 = arith.constant 0 : i32
    return %arg0, %c0_i32, %c0_i32_0 : i32, i32, i32
  }
  func.func @transform_2(%arg0: i32) -> (i32, i32, i32) {
    %c0_i32 = arith.constant 0 : i32
    %c0_i32_0 = arith.constant 0 : i32
    %c0_i32_1 = arith.constant 0 : i32
    %c0_i32_2 = arith.constant 0 : i32
    return %c0_i32, %c0_i32_0, %c0_i32_1 : i32, i32, i32
  }
  func.func @transform_3(%arg0: i32) -> (i32, i32, i32) {
    %c0_i32 = arith.constant 0 : i32
    %c0_i32_0 = arith.constant 0 : i32
    %c0_i32_1 = arith.constant 0 : i32
    %c0_i32_2 = arith.constant 0 : i32
    return %c0_i32, %c0_i32_0, %c0_i32_1 : i32, i32, i32
  }
  func.func @transform_4(%arg0: i32) -> (i32, i32) {
    %c0_i32 = arith.constant 0 : i32
    %c0_i32_0 = arith.constant 0 : i32
    %c0_i32_1 = arith.constant 0 : i32
    return %c0_i32, %c0_i32_0 : i32, i32
  }
  func.func @transform_5(%arg0: i32) -> (i32, i32) {
    %c0_i32 = arith.constant 0 : i32
    %c0_i32_0 = arith.constant 0 : i32
    %c0_i32_1 = arith.constant 0 : i32
    return %c0_i32, %c0_i32_0 : i32, i32
  }
  func.func @transform_6(%arg0: i32) -> (i32, i32) {
    %c0_i32 = arith.constant 0 : i32
    %c0_i32_0 = arith.constant 0 : i32
    %c0_i32_1 = arith.constant 0 : i32
    return %c0_i32, %c0_i32_0 : i32, i32
  }
  func.func @transform_7(%arg0: i32) -> (i32, i32) {
    %c0_i32 = arith.constant 0 : i32
    %c0_i32_0 = arith.constant 0 : i32
    %c0_i32_1 = arith.constant 0 : i32
    return %c0_i32, %c0_i32_0 : i32, i32
  }
  func.func @transform_8(%arg0: i32) -> (i32, i32) {
    %c0_i32 = arith.constant 0 : i32
    %c0_i32_0 = arith.constant 0 : i32
    %c0_i32_1 = arith.constant 0 : i32
    return %c0_i32, %c0_i32_0 : i32, i32
  }
  func.func @transform_9(%arg0: i32) -> (i32, i32) {
    %c0_i32 = arith.constant 0 : i32
    %c0_i32_0 = arith.constant 0 : i32
    %c0_i32_1 = arith.constant 0 : i32
    return %c0_i32, %c0_i32_0 : i32, i32
  }
  func.func @transform_10(%arg0: i32) -> (i32, i32) {
    %c0_i32 = arith.constant 0 : i32
    %c0_i32_0 = arith.constant 0 : i32
    %c0_i32_1 = arith.constant 0 : i32
    return %c0_i32, %c0_i32_0 : i32, i32
  }
  func.func @transform_11(%arg0: i32) -> (i32, i32) {
    %c0_i32 = arith.constant 0 : i32
    %c0_i32_0 = arith.constant 0 : i32
    %c0_i32_1 = arith.constant 0 : i32
    return %c0_i32, %c0_i32_0 : i32, i32
  }
  func.func @transform_12(%arg0: i32) -> (i32, i32) {
    %c0_i32 = arith.constant 0 : i32
    %c0_i32_0 = arith.constant 0 : i32
    %c0_i32_1 = arith.constant 0 : i32
    return %c0_i32, %c0_i32_0 : i32, i32
  }
  func.func @transform_13(%arg0: i32) -> (i32, i32) {
    %c0_i32 = arith.constant 0 : i32
    %c0_i32_0 = arith.constant 0 : i32
    %c0_i32_1 = arith.constant 0 : i32
    return %c0_i32, %c0_i32_0 : i32, i32
  }
  func.func @transform_14(%arg0: i32) -> (i32, i32, i32) {
    %c0_i32 = arith.constant 0 : i32
    %c0_i32_0 = arith.constant 0 : i32
    %c0_i32_1 = arith.constant 0 : i32
    return %arg0, %c0_i32, %c0_i32_0 : i32, i32, i32
  }
}

module attributes {stable_mosaic.version = 11 : i64} {
  func.func @_encoder_layer_kernel(%arg0: i32, %arg1: memref<1x8x32xbf16, #tpu.memory_space<vmem>>, %arg2: memref<1x1x8xf32, #tpu.memory_space<vmem>>, %arg3: memref<2x32x48xbf16, #tpu.memory_space<vmem>>, %arg4: memref<2x1x48xf32, #tpu.memory_space<vmem>>, %arg5: memref<32x32xbf16, #tpu.memory_space<vmem>>, %arg6: memref<1x32xf32, #tpu.memory_space<vmem>>, %arg7: memref<1x32xf32, #tpu.memory_space<vmem>>, %arg8: memref<1x32xf32, #tpu.memory_space<vmem>>, %arg9: memref<32x64xbf16, #tpu.memory_space<vmem>>, %arg10: memref<1x64xf32, #tpu.memory_space<vmem>>, %arg11: memref<64x32xbf16, #tpu.memory_space<vmem>>, %arg12: memref<1x32xf32, #tpu.memory_space<vmem>>, %arg13: memref<1x32xf32, #tpu.memory_space<vmem>>, %arg14: memref<1x32xf32, #tpu.memory_space<vmem>>, %arg15: memref<1x8x32xbf16, #tpu.memory_space<vmem>>) attributes {dimension_semantics = [#tpu.dimension_semantics<parallel>], iteration_bounds = array<i64: 2>, scalar_prefetch = 0 : i64, scratch_operands = 0 : i64, tpu.core_type = #tpu.core_type<tc>, window_params = [{transform_indices = @transform_0, window_bounds = array<i64: 1, 8, 32>}, {transform_indices = @transform_1, window_bounds = array<i64: 1, 1, 8>}, {pipeline_mode = #tpu.pipeline_mode<synchronous>, transform_indices = @transform_2, window_bounds = array<i64: 2, 32, 48>}, {pipeline_mode = #tpu.pipeline_mode<synchronous>, transform_indices = @transform_3, window_bounds = array<i64: 2, 1, 48>}, {pipeline_mode = #tpu.pipeline_mode<synchronous>, transform_indices = @transform_4, window_bounds = array<i64: 32, 32>}, {pipeline_mode = #tpu.pipeline_mode<synchronous>, transform_indices = @transform_5, window_bounds = array<i64: 1, 32>}, {pipeline_mode = #tpu.pipeline_mode<synchronous>, transform_indices = @transform_6, window_bounds = array<i64: 1, 32>}, {pipeline_mode = #tpu.pipeline_mode<synchronous>, transform_indices = @transform_7, window_bounds = array<i64: 1, 32>}, {pipeline_mode = #tpu.pipeline_mode<synchronous>, transform_indices = @transform_8, window_bounds = array<i64: 32, 64>}, {pipeline_mode = #tpu.pipeline_mode<synchronous>, transform_indices = @transform_9, window_bounds = array<i64: 1, 64>}, {pipeline_mode = #tpu.pipeline_mode<synchronous>, transform_indices = @transform_10, window_bounds = array<i64: 64, 32>}, {pipeline_mode = #tpu.pipeline_mode<synchronous>, transform_indices = @transform_11, window_bounds = array<i64: 1, 32>}, {pipeline_mode = #tpu.pipeline_mode<synchronous>, transform_indices = @transform_12, window_bounds = array<i64: 1, 32>}, {pipeline_mode = #tpu.pipeline_mode<synchronous>, transform_indices = @transform_13, window_bounds = array<i64: 1, 32>}, {transform_indices = @transform_14, window_bounds = array<i64: 1, 8, 32>}]} {
    %c0 = arith.constant 0 : index
    %c0_0 = arith.constant 0 : index
    %c0_1 = arith.constant 0 : index
    %0 = vector.load %arg1[%c0, %c0_0, %c0_1] : memref<1x8x32xbf16, #tpu.memory_space<vmem>>, vector<1x8x32xbf16>
    %1 = vector.shape_cast %0 : vector<1x8x32xbf16> to vector<8x32xbf16>
    %2 = arith.extf %1 : vector<8x32xbf16> to vector<8x32xf32>
    %c0_2 = arith.constant 0 : index
    %c0_3 = arith.constant 0 : index
    %c0_4 = arith.constant 0 : index
    %3 = vector.load %arg2[%c0_2, %c0_3, %c0_4] : memref<1x1x8xf32, #tpu.memory_space<vmem>>, vector<1x1x8xf32>
    %4 = vector.shape_cast %3 : vector<1x1x8xf32> to vector<1x8xf32>
    %cst = arith.constant 1.000000e+00 : f32
    %5 = vector.broadcast %cst : f32 to vector<1x8xf32>
    %6 = arith.subf %5, %4 : vector<1x8xf32>
    %cst_5 = arith.constant -1.000000e+09 : f32
    %7 = vector.broadcast %cst_5 : f32 to vector<1x8xf32>
    %8 = arith.mulf %6, %7 : vector<1x8xf32>
    %c0_6 = arith.constant 0 : index
    %c0_7 = arith.constant 0 : index
    %c0_8 = arith.constant 0 : index
    %9 = vector.load %arg3[%c0_6, %c0_7, %c0_8] : memref<2x32x48xbf16, #tpu.memory_space<vmem>>, vector<1x32x48xbf16>
    %10 = vector.shape_cast %9 : vector<1x32x48xbf16> to vector<32x48xbf16>
    %cst_9 = arith.constant dense<0.000000e+00> : vector<8x48xf32>
    %11 = tpu.matmul %1, %10, %cst_9 {dimension_numbers = #tpu.dot_dimension_numbers<[1], [0], [0], [1], [0, 0, 1, 1], [], []>} : vector<8x32xbf16>, vector<32x48xbf16>, vector<8x48xf32> -> vector<8x48xf32>
    %c0_10 = arith.constant 0 : index
    %c0_11 = arith.constant 0 : index
    %c0_12 = arith.constant 0 : index
    %12 = vector.load %arg4[%c0_10, %c0_11, %c0_12] : memref<2x1x48xf32, #tpu.memory_space<vmem>>, vector<1x1x48xf32>
    %13 = vector.shape_cast %12 : vector<1x1x48xf32> to vector<1x48xf32>
    %14 = vector.broadcast %13 : vector<1x48xf32> to vector<8x48xf32>
    %15 = arith.addf %11, %14 : vector<8x48xf32>
    %16 = arith.truncf %15 : vector<8x48xf32> to vector<8x48xbf16>
    %17 = vector.extract_strided_slice %16 {offsets = [0, 0], sizes = [8, 16], strides = [1, 1]} : vector<8x48xbf16> to vector<8x16xbf16>
    %18 = vector.extract_strided_slice %16 {offsets = [0, 16], sizes = [8, 16], strides = [1, 1]} : vector<8x48xbf16> to vector<8x16xbf16>
    %19 = vector.extract_strided_slice %16 {offsets = [0, 32], sizes = [8, 16], strides = [1, 1]} : vector<8x48xbf16> to vector<8x16xbf16>
    %cst_13 = arith.constant dense<0.000000e+00> : vector<8x8xf32>
    %20 = tpu.matmul %17, %18, %cst_13 {dimension_numbers = #tpu.dot_dimension_numbers<[1], [1], [0], [0], [0, 0, 1, 0], [], []>} : vector<8x16xbf16>, vector<8x16xbf16>, vector<8x8xf32> -> vector<8x8xf32>
    %cst_14 = arith.constant 2.500000e-01 : f32
    %21 = vector.broadcast %cst_14 : f32 to vector<8x8xf32>
    %22 = arith.mulf %20, %21 : vector<8x8xf32>
    %23 = vector.broadcast %8 : vector<1x8xf32> to vector<8x8xf32>
    %24 = arith.addf %22, %23 : vector<8x8xf32>
    %cst_15 = arith.constant dense<0xFF800000> : vector<8xf32>
    %25 = vector.multi_reduction <maximumf>, %24, %cst_15 [1] : vector<8x8xf32> to vector<8xf32>
    %26 = vector.shape_cast %25 : vector<8xf32> to vector<8x1xf32>
    %27 = vector.broadcast %26 : vector<8x1xf32> to vector<8x8xf32>
    %28 = arith.subf %24, %27 : vector<8x8xf32>
    %29 = math.exp %28 : vector<8x8xf32>
    %cst_16 = arith.constant dense<0.000000e+00> : vector<8xf32>
    %30 = vector.multi_reduction <add>, %29, %cst_16 [1] : vector<8x8xf32> to vector<8xf32>
    %31 = vector.shape_cast %30 : vector<8xf32> to vector<8x1xf32>
    %32 = tpu.reciprocal %31 {approx = true} : vector<8x1xf32> -> vector<8x1xf32>
    %33 = vector.broadcast %32 : vector<8x1xf32> to vector<8x8xf32>
    %34 = arith.mulf %29, %33 : vector<8x8xf32>
    %35 = arith.truncf %34 : vector<8x8xf32> to vector<8x8xbf16>
    %cst_17 = arith.constant dense<0.000000e+00> : vector<8x16xf32>
    %36 = tpu.matmul %35, %19, %cst_17 {dimension_numbers = #tpu.dot_dimension_numbers<[1], [0], [0], [1], [0, 0, 1, 1], [], []>} : vector<8x8xbf16>, vector<8x16xbf16>, vector<8x16xf32> -> vector<8x16xf32>
    %37 = arith.truncf %36 : vector<8x16xf32> to vector<8x16xbf16>
    %c1 = arith.constant 1 : index
    %c0_18 = arith.constant 0 : index
    %c0_19 = arith.constant 0 : index
    %38 = vector.load %arg3[%c1, %c0_18, %c0_19] : memref<2x32x48xbf16, #tpu.memory_space<vmem>>, vector<1x32x48xbf16>
    %39 = vector.shape_cast %38 : vector<1x32x48xbf16> to vector<32x48xbf16>
    %cst_20 = arith.constant dense<0.000000e+00> : vector<8x48xf32>
    %40 = tpu.matmul %1, %39, %cst_20 {dimension_numbers = #tpu.dot_dimension_numbers<[1], [0], [0], [1], [0, 0, 1, 1], [], []>} : vector<8x32xbf16>, vector<32x48xbf16>, vector<8x48xf32> -> vector<8x48xf32>
    %c1_21 = arith.constant 1 : index
    %c0_22 = arith.constant 0 : index
    %c0_23 = arith.constant 0 : index
    %41 = vector.load %arg4[%c1_21, %c0_22, %c0_23] : memref<2x1x48xf32, #tpu.memory_space<vmem>>, vector<1x1x48xf32>
    %42 = vector.shape_cast %41 : vector<1x1x48xf32> to vector<1x48xf32>
    %43 = vector.broadcast %42 : vector<1x48xf32> to vector<8x48xf32>
    %44 = arith.addf %40, %43 : vector<8x48xf32>
    %45 = arith.truncf %44 : vector<8x48xf32> to vector<8x48xbf16>
    %46 = vector.extract_strided_slice %45 {offsets = [0, 0], sizes = [8, 16], strides = [1, 1]} : vector<8x48xbf16> to vector<8x16xbf16>
    %47 = vector.extract_strided_slice %45 {offsets = [0, 16], sizes = [8, 16], strides = [1, 1]} : vector<8x48xbf16> to vector<8x16xbf16>
    %48 = vector.extract_strided_slice %45 {offsets = [0, 32], sizes = [8, 16], strides = [1, 1]} : vector<8x48xbf16> to vector<8x16xbf16>
    %cst_24 = arith.constant dense<0.000000e+00> : vector<8x8xf32>
    %49 = tpu.matmul %46, %47, %cst_24 {dimension_numbers = #tpu.dot_dimension_numbers<[1], [1], [0], [0], [0, 0, 1, 0], [], []>} : vector<8x16xbf16>, vector<8x16xbf16>, vector<8x8xf32> -> vector<8x8xf32>
    %cst_25 = arith.constant 2.500000e-01 : f32
    %50 = vector.broadcast %cst_25 : f32 to vector<8x8xf32>
    %51 = arith.mulf %49, %50 : vector<8x8xf32>
    %52 = vector.broadcast %8 : vector<1x8xf32> to vector<8x8xf32>
    %53 = arith.addf %51, %52 : vector<8x8xf32>
    %cst_26 = arith.constant dense<0xFF800000> : vector<8xf32>
    %54 = vector.multi_reduction <maximumf>, %53, %cst_26 [1] : vector<8x8xf32> to vector<8xf32>
    %55 = vector.shape_cast %54 : vector<8xf32> to vector<8x1xf32>
    %56 = vector.broadcast %55 : vector<8x1xf32> to vector<8x8xf32>
    %57 = arith.subf %53, %56 : vector<8x8xf32>
    %58 = math.exp %57 : vector<8x8xf32>
    %cst_27 = arith.constant dense<0.000000e+00> : vector<8xf32>
    %59 = vector.multi_reduction <add>, %58, %cst_27 [1] : vector<8x8xf32> to vector<8xf32>
    %60 = vector.shape_cast %59 : vector<8xf32> to vector<8x1xf32>
    %61 = tpu.reciprocal %60 {approx = true} : vector<8x1xf32> -> vector<8x1xf32>
    %62 = vector.broadcast %61 : vector<8x1xf32> to vector<8x8xf32>
    %63 = arith.mulf %58, %62 : vector<8x8xf32>
    %64 = arith.truncf %63 : vector<8x8xf32> to vector<8x8xbf16>
    %cst_28 = arith.constant dense<0.000000e+00> : vector<8x16xf32>
    %65 = tpu.matmul %64, %48, %cst_28 {dimension_numbers = #tpu.dot_dimension_numbers<[1], [0], [0], [1], [0, 0, 1, 1], [], []>} : vector<8x8xbf16>, vector<8x16xbf16>, vector<8x16xf32> -> vector<8x16xf32>
    %66 = arith.truncf %65 : vector<8x16xf32> to vector<8x16xbf16>
    %67 = tpu.concatenate %37, %66 in 1 : vector<8x16xbf16>, vector<8x16xbf16> -> vector<8x32xbf16>
    %c0_29 = arith.constant 0 : index
    %c0_30 = arith.constant 0 : index
    %68 = vector.load %arg5[%c0_29, %c0_30] : memref<32x32xbf16, #tpu.memory_space<vmem>>, vector<32x32xbf16>
    %cst_31 = arith.constant dense<0.000000e+00> : vector<8x32xf32>
    %69 = tpu.matmul %67, %68, %cst_31 {dimension_numbers = #tpu.dot_dimension_numbers<[1], [0], [0], [1], [0, 0, 1, 1], [], []>} : vector<8x32xbf16>, vector<32x32xbf16>, vector<8x32xf32> -> vector<8x32xf32>
    %c0_32 = arith.constant 0 : index
    %c0_33 = arith.constant 0 : index
    %70 = vector.load %arg6[%c0_32, %c0_33] : memref<1x32xf32, #tpu.memory_space<vmem>>, vector<1x32xf32>
    %71 = vector.broadcast %70 : vector<1x32xf32> to vector<8x32xf32>
    %72 = arith.addf %69, %71 : vector<8x32xf32>
    %73 = arith.addf %72, %2 : vector<8x32xf32>
    %c0_34 = arith.constant 0 : index
    %c0_35 = arith.constant 0 : index
    %74 = vector.load %arg7[%c0_34, %c0_35] : memref<1x32xf32, #tpu.memory_space<vmem>>, vector<1x32xf32>
    %c0_36 = arith.constant 0 : index
    %c0_37 = arith.constant 0 : index
    %75 = vector.load %arg8[%c0_36, %c0_37] : memref<1x32xf32, #tpu.memory_space<vmem>>, vector<1x32xf32>
    %cst_38 = arith.constant dense<0.000000e+00> : vector<8xf32>
    %76 = vector.multi_reduction <add>, %73, %cst_38 [1] : vector<8x32xf32> to vector<8xf32>
    %77 = vector.shape_cast %76 : vector<8xf32> to vector<8x1xf32>
    %cst_39 = arith.constant 3.200000e+01 : f32
    %78 = vector.broadcast %cst_39 : f32 to vector<8x1xf32>
    %79 = arith.divf %77, %78 : vector<8x1xf32>
    %80 = vector.broadcast %79 : vector<8x1xf32> to vector<8x32xf32>
    %81 = arith.subf %73, %80 : vector<8x32xf32>
    %82 = arith.mulf %81, %81 : vector<8x32xf32>
    %cst_40 = arith.constant dense<0.000000e+00> : vector<8xf32>
    %83 = vector.multi_reduction <add>, %82, %cst_40 [1] : vector<8x32xf32> to vector<8xf32>
    %84 = vector.shape_cast %83 : vector<8xf32> to vector<8x1xf32>
    %cst_41 = arith.constant 3.200000e+01 : f32
    %85 = vector.broadcast %cst_41 : f32 to vector<8x1xf32>
    %86 = arith.divf %84, %85 : vector<8x1xf32>
    %cst_42 = arith.constant 9.99999996E-13 : f32
    %87 = vector.broadcast %cst_42 : f32 to vector<8x1xf32>
    %88 = arith.addf %86, %87 : vector<8x1xf32>
    %89 = math.rsqrt %88 : vector<8x1xf32>
    %90 = vector.broadcast %89 : vector<8x1xf32> to vector<8x32xf32>
    %91 = arith.mulf %81, %90 : vector<8x32xf32>
    %92 = vector.broadcast %74 : vector<1x32xf32> to vector<8x32xf32>
    %93 = arith.mulf %91, %92 : vector<8x32xf32>
    %94 = vector.broadcast %75 : vector<1x32xf32> to vector<8x32xf32>
    %95 = arith.addf %93, %94 : vector<8x32xf32>
    %96 = arith.truncf %95 : vector<8x32xf32> to vector<8x32xbf16>
    %c0_43 = arith.constant 0 : index
    %c0_44 = arith.constant 0 : index
    %97 = vector.load %arg9[%c0_43, %c0_44] : memref<32x64xbf16, #tpu.memory_space<vmem>>, vector<32x64xbf16>
    %cst_45 = arith.constant dense<0.000000e+00> : vector<8x64xf32>
    %98 = tpu.matmul %96, %97, %cst_45 {dimension_numbers = #tpu.dot_dimension_numbers<[1], [0], [0], [1], [0, 0, 1, 1], [], []>} : vector<8x32xbf16>, vector<32x64xbf16>, vector<8x64xf32> -> vector<8x64xf32>
    %c0_46 = arith.constant 0 : index
    %c0_47 = arith.constant 0 : index
    %99 = vector.load %arg10[%c0_46, %c0_47] : memref<1x64xf32, #tpu.memory_space<vmem>>, vector<1x64xf32>
    %100 = vector.broadcast %99 : vector<1x64xf32> to vector<8x64xf32>
    %101 = arith.addf %98, %100 : vector<8x64xf32>
    %102 = arith.mulf %101, %101 : vector<8x64xf32>
    %103 = arith.mulf %101, %102 : vector<8x64xf32>
    %cst_48 = arith.constant 4.471500e-02 : f32
    %104 = vector.broadcast %cst_48 : f32 to vector<8x64xf32>
    %105 = arith.mulf %104, %103 : vector<8x64xf32>
    %106 = arith.addf %101, %105 : vector<8x64xf32>
    %cst_49 = arith.constant 0.797884583 : f32
    %107 = vector.broadcast %cst_49 : f32 to vector<8x64xf32>
    %108 = arith.mulf %107, %106 : vector<8x64xf32>
    %109 = math.tanh %108 : vector<8x64xf32>
    %cst_50 = arith.constant 1.000000e+00 : f32
    %110 = vector.broadcast %cst_50 : f32 to vector<8x64xf32>
    %111 = arith.addf %110, %109 : vector<8x64xf32>
    %cst_51 = arith.constant 5.000000e-01 : f32
    %112 = vector.broadcast %cst_51 : f32 to vector<8x64xf32>
    %113 = arith.mulf %112, %111 : vector<8x64xf32>
    %114 = arith.mulf %101, %113 : vector<8x64xf32>
    %115 = arith.truncf %114 : vector<8x64xf32> to vector<8x64xbf16>
    %c0_52 = arith.constant 0 : index
    %c0_53 = arith.constant 0 : index
    %116 = vector.load %arg11[%c0_52, %c0_53] : memref<64x32xbf16, #tpu.memory_space<vmem>>, vector<64x32xbf16>
    %cst_54 = arith.constant dense<0.000000e+00> : vector<8x32xf32>
    %117 = tpu.matmul %115, %116, %cst_54 {dimension_numbers = #tpu.dot_dimension_numbers<[1], [0], [0], [1], [0, 0, 1, 1], [], []>} : vector<8x64xbf16>, vector<64x32xbf16>, vector<8x32xf32> -> vector<8x32xf32>
    %c0_55 = arith.constant 0 : index
    %c0_56 = arith.constant 0 : index
    %118 = vector.load %arg12[%c0_55, %c0_56] : memref<1x32xf32, #tpu.memory_space<vmem>>, vector<1x32xf32>
    %119 = vector.broadcast %118 : vector<1x32xf32> to vector<8x32xf32>
    %120 = arith.addf %117, %119 : vector<8x32xf32>
    %121 = arith.addf %120, %95 : vector<8x32xf32>
    %c0_57 = arith.constant 0 : index
    %c0_58 = arith.constant 0 : index
    %122 = vector.load %arg13[%c0_57, %c0_58] : memref<1x32xf32, #tpu.memory_space<vmem>>, vector<1x32xf32>
    %c0_59 = arith.constant 0 : index
    %c0_60 = arith.constant 0 : index
    %123 = vector.load %arg14[%c0_59, %c0_60] : memref<1x32xf32, #tpu.memory_space<vmem>>, vector<1x32xf32>
    %cst_61 = arith.constant dense<0.000000e+00> : vector<8xf32>
    %124 = vector.multi_reduction <add>, %121, %cst_61 [1] : vector<8x32xf32> to vector<8xf32>
    %125 = vector.shape_cast %124 : vector<8xf32> to vector<8x1xf32>
    %cst_62 = arith.constant 3.200000e+01 : f32
    %126 = vector.broadcast %cst_62 : f32 to vector<8x1xf32>
    %127 = arith.divf %125, %126 : vector<8x1xf32>
    %128 = vector.broadcast %127 : vector<8x1xf32> to vector<8x32xf32>
    %129 = arith.subf %121, %128 : vector<8x32xf32>
    %130 = arith.mulf %129, %129 : vector<8x32xf32>
    %cst_63 = arith.constant dense<0.000000e+00> : vector<8xf32>
    %131 = vector.multi_reduction <add>, %130, %cst_63 [1] : vector<8x32xf32> to vector<8xf32>
    %132 = vector.shape_cast %131 : vector<8xf32> to vector<8x1xf32>
    %cst_64 = arith.constant 3.200000e+01 : f32
    %133 = vector.broadcast %cst_64 : f32 to vector<8x1xf32>
    %134 = arith.divf %132, %133 : vector<8x1xf32>
    %cst_65 = arith.constant 9.99999996E-13 : f32
    %135 = vector.broadcast %cst_65 : f32 to vector<8x1xf32>
    %136 = arith.addf %134, %135 : vector<8x1xf32>
    %137 = math.rsqrt %136 : vector<8x1xf32>
    %138 = vector.broadcast %137 : vector<8x1xf32> to vector<8x32xf32>
    %139 = arith.mulf %129, %138 : vector<8x32xf32>
    %140 = vector.broadcast %122 : vector<1x32xf32> to vector<8x32xf32>
    %141 = arith.mulf %139, %140 : vector<8x32xf32>
    %142 = vector.broadcast %123 : vector<1x32xf32> to vector<8x32xf32>
    %143 = arith.addf %141, %142 : vector<8x32xf32>
    %144 = arith.truncf %143 : vector<8x32xf32> to vector<8x32xbf16>
    %c0_66 = arith.constant 0 : index
    %c0_67 = arith.constant 0 : index
    %c0_68 = arith.constant 0 : index
    %145 = vector.load %arg15[%c0_66, %c0_67, %c0_68] : memref<1x8x32xbf16, #tpu.memory_space<vmem>>, vector<1x8x32xbf16>
    %146 = vector.shape_cast %145 : vector<1x8x32xbf16> to vector<8x32xbf16>
    %147 = vector.shape_cast %144 : vector<8x32xbf16> to vector<1x8x32xbf16>
    tpu.vector_store %arg15[%c0_66, %c0_67, %c0_68], %147 {strides = array<i32>} : memref<1x8x32xbf16, #tpu.memory_space<vmem>>, vector<1x8x32xbf16>,
    return
  }
  func.func @transform_0(%arg0: i32) -> (i32, i32, i32) {
    %c0_i32 = arith.constant 0 : i32
    %c0_i32_0 = arith.constant 0 : i32
    %c0_i32_1 = arith.constant 0 : i32
    return %arg0, %c0_i32, %c0_i32_0 : i32, i32, i32
  }
  func.func @transform_1(%arg0: i32) -> (i32, i32, i32) {
    %c0_i32 = arith.constant 0 : i32
    %c0_i32_0 = arith.constant 0 : i32
    %c0_i32_1 = arith.constant 0 : i32
    return %arg0, %c0_i32, %c0_i32_0 : i32, i32, i32
  }
  func.func @transform_2(%arg0: i32) -> (i32, i32, i32) {
    %c0_i32 = arith.constant 0 : i32
    %c0_i32_0 = arith.constant 0 : i32
    %c0_i32_1 = arith.constant 0 : i32
    %c0_i32_2 = arith.constant 0 : i32
    return %c0_i32, %c0_i32_0, %c0_i32_1 : i32, i32, i32
  }
  func.func @transform_3(%arg0: i32) -> (i32, i32, i32) {
    %c0_i32 = arith.constant 0 : i32
    %c0_i32_0 = arith.constant 0 : i32
    %c0_i32_1 = arith.constant 0 : i32
    %c0_i32_2 = arith.constant 0 : i32
    return %c0_i32, %c0_i32_0, %c0_i32_1 : i32, i32, i32
  }
  func.func @transform_4(%arg0: i32) -> (i32, i32) {
    %c0_i32 = arith.constant 0 : i32
    %c0_i32_0 = arith.constant 0 : i32
    %c0_i32_1 = arith.constant 0 : i32
    return %c0_i32, %c0_i32_0 : i32, i32
  }
  func.func @transform_5(%arg0: i32) -> (i32, i32) {
    %c0_i32 = arith.constant 0 : i32
    %c0_i32_0 = arith.constant 0 : i32
    %c0_i32_1 = arith.constant 0 : i32
    return %c0_i32, %c0_i32_0 : i32, i32
  }
  func.func @transform_6(%arg0: i32) -> (i32, i32) {
    %c0_i32 = arith.constant 0 : i32
    %c0_i32_0 = arith.constant 0 : i32
    %c0_i32_1 = arith.constant 0 : i32
    return %c0_i32, %c0_i32_0 : i32, i32
  }
  func.func @transform_7(%arg0: i32) -> (i32, i32) {
    %c0_i32 = arith.constant 0 : i32
    %c0_i32_0 = arith.constant 0 : i32
    %c0_i32_1 = arith.constant 0 : i32
    return %c0_i32, %c0_i32_0 : i32, i32
  }
  func.func @transform_8(%arg0: i32) -> (i32, i32) {
    %c0_i32 = arith.constant 0 : i32
    %c0_i32_0 = arith.constant 0 : i32
    %c0_i32_1 = arith.constant 0 : i32
    return %c0_i32, %c0_i32_0 : i32, i32
  }
  func.func @transform_9(%arg0: i32) -> (i32, i32) {
    %c0_i32 = arith.constant 0 : i32
    %c0_i32_0 = arith.constant 0 : i32
    %c0_i32_1 = arith.constant 0 : i32
    return %c0_i32, %c0_i32_0 : i32, i32
  }
  func.func @transform_10(%arg0: i32) -> (i32, i32) {
    %c0_i32 = arith.constant 0 : i32
    %c0_i32_0 = arith.constant 0 : i32
    %c0_i32_1 = arith.constant 0 : i32
    return %c0_i32, %c0_i32_0 : i32, i32
  }
  func.func @transform_11(%arg0: i32) -> (i32, i32) {
    %c0_i32 = arith.constant 0 : i32
    %c0_i32_0 = arith.constant 0 : i32
    %c0_i32_1 = arith.constant 0 : i32
    return %c0_i32, %c0_i32_0 : i32, i32
  }
  func.func @transform_12(%arg0: i32) -> (i32, i32) {
    %c0_i32 = arith.constant 0 : i32
    %c0_i32_0 = arith.constant 0 : i32
    %c0_i32_1 = arith.constant 0 : i32
    return %c0_i32, %c0_i32_0 : i32, i32
  }
  func.func @transform_13(%arg0: i32) -> (i32, i32) {
    %c0_i32 = arith.constant 0 : i32
    %c0_i32_0 = arith.constant 0 : i32
    %c0_i32_1 = arith.constant 0 : i32
    return %c0_i32, %c0_i32_0 : i32, i32
  }
  func.func @transform_14(%arg0: i32) -> (i32, i32, i32) {
    %c0_i32 = arith.constant 0 : i32
    %c0_i32_0 = arith.constant 0 : i32
    %c0_i32_1 = arith.constant 0 : i32
    return %arg0, %c0_i32, %c0_i32_0 : i32, i32, i32
  }
}

</mosaic_0001>

<llo_original>
// kernel: my_model_forward.5
$region0: #{my_model_forward.5}
  #allocation0 [shape = 'u32[]', space=smem, size = 0x4, offset = 0x4, fixed_abs, tag = 'smem constant byte address 0x4 - core index']
  #allocation1 [shape = 'u32[72,128]{1,0:T(1,128)}', space=vmem, size = 0x9000, scoped, tag = 'internal scratch']
  %s0 = inlined_call_operand.vmem [shape: bf16[2,8,32], index: 0, kind: input, shape index: {}]
  %s1 = inlined_call_operand.vmem [shape: bf16[2,8,32], index: 1, kind: input, shape index: {}]
  %s2 = inlined_call_operand.vmem [shape: bf16[1,8,32], index: 2, kind: input, shape index: {}]
  %s3 = inlined_call_operand.vmem [shape: f32[1,32], index: 3, kind: input, shape index: {}]
  %s4 = inlined_call_operand.vmem [shape: f32[1,32], index: 4, kind: input, shape index: {}]
  %s5 = inlined_call_operand.vmem [shape: bf16[2,8,32], index: 5, kind: output, shape index: {}]
  %s6 = sld [smem:[#allocation0]]
  $region53: #{my_model_forward.5} parent=0
    _
  %s8 = ssub.s32 1, %s6
  %s9 = scalar_select 0, %s8, %s6
  loop: start=0, step=1, limit=4
  $region2: #{my_model_forward.5} parent=0 // loop_pre_header
    _
  $region3: #{my_model_forward.5} parent=0 // loop_header
    %s11 = sphi 0, %s15
    %p12 = scmp.ge.s32.totalorder %s11, 4
    %s21 = sphi 0, %s23
    %s24 = sphi 0, %s21
    %s25 = sphi 0, %s24
    %s41 = sphi 0, %s25
    %s47 = sphi 0, %s49
    %s50 = sphi 0, %s47
    %s51 = sphi 0, %s50
    %s67 = sphi 0, %s51
    %s71 = sphi 0, %s71
    %s73 = sphi 0, %s71
    %s74 = sphi 0, %s73
    %s88 = sphi 0, %s74
    %s92 = sphi 0, %s92
    %s94 = sphi 0, %s92
    %s95 = sphi 0, %s94
    %s109 = sphi 0, %s95
    %s113 = sphi 0, %s113
    %s115 = sphi 0, %s113
    %s116 = sphi 0, %s115
    %s130 = sphi 0, %s116
    %s136 = sphi 0, %s138
    %s139 = sphi 0, %s136
    %s140 = sphi 0, %s139
    %s156 = sphi 0, %s140
  $region4: #{my_model_forward.5} parent=0 // loop_header_branch
    %14 = sbr.rel (%p12) target = $region8
  $region5: #{my_model_forward.5} parent=0 // loop_body
    %s16 = ssub.s32 %s11, 1
    %s17 = ssub.s32 %s11, 2
    %s18 = sadd.s32 %s11, 1
    %s19 = ssub.s32 %s11, %s18
    %p20 = scmp.eq.s32.totalorder %s19, 0
    %s22 = sadd.s32 %s21, 1
    %s23 = scalar_select %p20, %s21, %s22
    %p26 = pneg %p20
    %p27 = scmp.eq.s32.totalorder %s11, 1
    %p28 = por %p26, %p27
    %p29 = scmp.ne.s32.totalorder %s21, %s24
    %p30 = scmp.eq.s32.totalorder %s11, 0
    %p31 = por %p29, %p30
    %p32 = scmp.ne.s32.totalorder %s21, %s24
    %p33 = scmp.eq.s32.totalorder %s16, 1
    %p34 = por %p32, %p33
    %p35 = scmp.ne.s32.totalorder %s24, %s25
    %p36 = scmp.eq.s32.totalorder %s16, 0
    %p37 = por %p35, %p36
    %p38 = scmp.ne.s32.totalorder %s24, %s25
    %p39 = scmp.eq.s32.totalorder %s17, 1
    %p40 = por %p38, %p39
    %p42 = scmp.ne.s32.totalorder %s25, %s41
    %p43 = scmp.eq.s32.totalorder %s17, 0
    %p44 = por %p42, %p43
    %s45 = ssub.s32 %s11, %s18
    %p46 = scmp.eq.s32.totalorder %s45, 0
    %s48 = sadd.s32 %s47, 1
    %s49 = scalar_select %p46, %s47, %s48
    %p52 = pneg %p46
    %p53 = scmp.eq.s32.totalorder %s11, 1
    %p54 = por %p52, %p53
    %p55 = scmp.ne.s32.totalorder %s47, %s50
    %p56 = scmp.eq.s32.totalorder %s11, 0
    %p57 = por %p55, %p56
    %p58 = scmp.ne.s32.totalorder %s47, %s50
    %p59 = scmp.eq.s32.totalorder %s16, 1
    %p60 = por %p58, %p59
    %p61 = scmp.ne.s32.totalorder %s50, %s51
    %p62 = scmp.eq.s32.totalorder %s16, 0
    %p63 = por %p61, %p62
    %p64 = scmp.ne.s32.totalorder %s50, %s51
    %p65 = scmp.eq.s32.totalorder %s17, 1
    %p66 = por %p64, %p65
    %p68 = scmp.ne.s32.totalorder %s51, %s67
    %p69 = scmp.eq.s32.totalorder %s17, 0
    %p70 = por %p68, %p69
    %s72 = sadd.s32 %s71, 1
    %p75 = scmp.eq.s32.totalorder %s11, 1
    %p76 = scmp.ne.s32.totalorder %s71, %s73
    %p77 = scmp.eq.s32.totalorder %s11, 0
    %p78 = por %p76, %p77
    %p79 = scmp.ne.s32.totalorder %s71, %s73
    %p80 = scmp.eq.s32.totalorder %s16, 1
    %p81 = por %p79, %p80
    %p82 = scmp.ne.s32.totalorder %s73, %s74
    %p83 = scmp.eq.s32.totalorder %s16, 0
    %p84 = por %p82, %p83
    %p85 = scmp.ne.s32.totalorder %s73, %s74
    %p86 = scmp.eq.s32.totalorder %s17, 1
    %p87 = por %p85, %p86
    %p89 = scmp.ne.s32.totalorder %s74, %s88
    %p90 = scmp.eq.s32.totalorder %s17, 0
    %p91 = por %p89, %p90
    %s93 = sadd.s32 %s92, 1
    %p96 = scmp.eq.s32.totalorder %s11, 1
    %p97 = scmp.ne.s32.totalorder %s92, %s94
    %p98 = scmp.eq.s32.totalorder %s11, 0
    %p99 = por %p97, %p98
    %p100 = scmp.ne.s32.totalorder %s92, %s94
    %p101 = scmp.eq.s32.totalorder %s16, 1
    %p102 = por %p100, %p101
    %p103 = scmp.ne.s32.totalorder %s94, %s95
    %p104 = scmp.eq.s32.totalorder %s16, 0
    %p105 = por %p103, %p104
    %p106 = scmp.ne.s32.totalorder %s94, %s95
    %p107 = scmp.eq.s32.totalorder %s17, 1
    %p108 = por %p106, %p107
    %p110 = scmp.ne.s32.totalorder %s95, %s109
    %p111 = scmp.eq.s32.totalorder %s17, 0
    %p112 = por %p110, %p111
    %s114 = sadd.s32 %s113, 1
    %p117 = scmp.eq.s32.totalorder %s11, 1
    %p118 = scmp.ne.s32.totalorder %s113, %s115
    %p119 = scmp.eq.s32.totalorder %s11, 0
    %p120 = por %p118, %p119
    %p121 = scmp.ne.s32.totalorder %s113, %s115
    %p122 = scmp.eq.s32.totalorder %s16, 1
    %p123 = por %p121, %p122
    %p124 = scmp.ne.s32.totalorder %s115, %s116
    %p125 = scmp.eq.s32.totalorder %s16, 0
    %p126 = por %p124, %p125
    %p127 = scmp.ne.s32.totalorder %s115, %s116
    %p128 = scmp.eq.s32.totalorder %s17, 1
    %p129 = por %p127, %p128
    %p131 = scmp.ne.s32.totalorder %s116, %s130
    %p132 = scmp.eq.s32.totalorder %s17, 0
    %p133 = por %p131, %p132
    %s134 = ssub.s32 %s11, %s18
    %p135 = scmp.eq.s32.totalorder %s134, 0
    %s137 = sadd.s32 %s136, 1
    %s138 = scalar_select %p135, %s136, %s137
    %p141 = pneg %p135
    %p142 = scmp.eq.s32.totalorder %s11, 1
    %p143 = por %p141, %p142
    %p144 = scmp.ne.s32.totalorder %s136, %s139
    %p145 = scmp.eq.s32.totalorder %s11, 0
    %p146 = por %p144, %p145
    %p147 = scmp.ne.s32.totalorder %s136, %s139
    %p148 = scmp.eq.s32.totalorder %s16, 1
    %p149 = por %p147, %p148
    %p150 = scmp.ne.s32.totalorder %s139, %s140
    %p151 = scmp.eq.s32.totalorder %s16, 0
    %p152 = por %p150, %p151
    %p153 = scmp.ne.s32.totalorder %s139, %s140
    %p154 = scmp.eq.s32.totalorder %s17, 1
    %p155 = por %p153, %p154
    %p157 = scmp.ne.s32.totalorder %s140, %s156
    %p158 = scmp.eq.s32.totalorder %s17, 0
    %p159 = por %p157, %p158
    %p160 = scmp.le.s32.totalorder 1, %s11
    %p161 = scmp.lt.s32.totalorder %s11, 3
    %p162 = pnand %p160, %p161
    %p163 = pneg %p162
    // Predicated region
    $region9: #{my_model_forward.5} parent=5 // pred_check
      _
    $region10: #{my_model_forward.5} parent=5 // pred_check_branch
      %165 = sbr.rel (%p162) target = $region12
    $region11: #{my_model_forward.5} parent=5 // pred_region
      %s166 = ssub.s32 %s11, 1
      // Predicated region
      $region13: #{my_model_forward.5} parent=11 // pred_check
        %p167 = pneg %p84
      $region14: #{my_model_forward.5} parent=11 // pred_check_branch
        %169 = sbr.rel (%p167) target = $region16
      $region15: #{my_model_forward.5} parent=11 // pred_region
        _
      $region16: #{my_model_forward.5} parent=11 // pred_fallthru
        _
      // Predicated region
      $region17: #{my_model_forward.5} parent=11 // pred_check
        %p170 = pneg %p105
      $region18: #{my_model_forward.5} parent=11 // pred_check_branch
        %172 = sbr.rel (%p170) target = $region20
      $region19: #{my_model_forward.5} parent=11 // pred_region
        _
      $region20: #{my_model_forward.5} parent=11 // pred_fallthru
        _
      // Predicated region
      $region21: #{my_model_forward.5} parent=11 // pred_check
        %p173 = pneg %p126
      $region22: #{my_model_forward.5} parent=11 // pred_check_branch
        %175 = sbr.rel (%p173) target = $region24
      $region23: #{my_model_forward.5} parent=11 // pred_region
        _
      $region24: #{my_model_forward.5} parent=11 // pred_fallthru
        _
    $region12: #{my_model_forward.5} parent=5 // pred_fallthru
      _
    %p176 = scmp.lt.s32.totalorder %s11, 2
    // Predicated region
    $region25: #{my_model_forward.5} parent=5 // pred_check
      %p177 = pneg %p176
    $region26: #{my_model_forward.5} parent=5 // pred_check_branch
      %179 = sbr.rel (%p177) target = $region28
    $region27: #{my_model_forward.5} parent=5 // pred_region
      // Predicated region
      $region29: #{my_model_forward.5} parent=27 // pred_check
        %p180 = pneg %p31
      $region30: #{my_model_forward.5} parent=27 // pred_check_branch
        %182 = sbr.rel (%p180) target = $region32
      $region31: #{my_model_forward.5} parent=27 // pred_region
        %p183 = scmp.lt.s32.totalorder %s11, 1
        %s184 = scalar_select %p183, %s11, 1
        %s185 = smul.addr %s184, 4
        %s186 = scalar_lea.vmem %s0, %s185
      $region32: #{my_model_forward.5} parent=27 // pred_fallthru
        _
      // Predicated region
      $region33: #{my_model_forward.5} parent=27 // pred_check
        %p187 = pneg %p57
      $region34: #{my_model_forward.5} parent=27 // pred_check_branch
        %189 = sbr.rel (%p187) target = $region36
      $region35: #{my_model_forward.5} parent=27 // pred_region
        %p190 = scmp.lt.s32.totalorder %s11, 1
        %s191 = scalar_select %p190, %s11, 1
        %s192 = smul.addr %s191, 4
        %s193 = scalar_lea.vmem %s1, %s192
      $region36: #{my_model_forward.5} parent=27 // pred_fallthru
        _
    $region28: #{my_model_forward.5} parent=5 // pred_fallthru
      _
    %p194 = scmp.le.s32.totalorder 1, %s11
    %p195 = scmp.lt.s32.totalorder %s11, 3
    %p196 = pnand %p194, %p195
    %p197 = pneg %p196
    // Predicated region
    $region37: #{my_model_forward.5} parent=5 // pred_check
      _
    $region38: #{my_model_forward.5} parent=5 // pred_check_branch
      %199 = sbr.rel (%p196) target = $region40
    $region39: #{my_model_forward.5} parent=5 // pred_region
      %s200 = ssub.s32 %s11, 1
      %p201 = scmp.lt.s32.totalorder %s16, 1
      %s202 = scalar_select %p201, %s16, 1
      %s203 = smul.addr %s202, 4
      %s204 = scalar_lea.vmem %s0, %s203
      %p205 = pneg %p37
      %p206 = pneg %p34
      %p207 = scmp.lt.s32.totalorder %s16, 1
      %s208 = scalar_select %p207, %s16, 1
      %s209 = smul.addr %s208, 4
      %s210 = scalar_lea.vmem %s1, %s209
      %p211 = pneg %p63
      %p212 = pneg %p60
      %p213 = pneg %p84
      %p214 = pneg %p81
      %p215 = pneg %p105
      %p216 = pneg %p102
      %p217 = pneg %p126
      %p218 = pneg %p123
      %p219 = pneg %p152
      %p220 = pneg %p149
      %p221 = scmp.lt.s32.totalorder %s16, 1
      %s222 = scalar_select %p221, %s16, 1
      %s223 = smul.addr %s222, 4
      %s224 = scalar_lea.vmem %s5, %s223
      %p225 = scmp.lt.s32.totalorder %s16, 1
      %s226 = scalar_select %p225, %s16, 1
      %s227 = smul.addr %s226, 4
      %s228 = scalar_lea.vmem %s0, %s227
      %p229 = scmp.lt.s32.totalorder %s16, 1
      %s230 = scalar_select %p229, %s16, 1
      %s231 = smul.addr %s230, 4
      %s232 = scalar_lea.vmem %s1, %s231
      %p233 = scmp.lt.s32.totalorder %s16, 1
      %s234 = scalar_select %p233, %s16, 1
      %s235 = smul.addr %s234, 4
      %s236 = scalar_lea.vmem %s5, %s235
      %v237 = vld [vmem:[%s228] sm:$0xf]
      %v238 = vunpack.c.l.bf16 %v237
      %v239 = vld [vmem:[%s232] sm:$0xf]
      %v240 = vunpack.c.l.bf16 %v239
      %v241 = vadd.f32 %v238, %v240
      %v242 = vld [vmem:[%s2] sm:$0xf]
      %v243 = vunpack.c.l.bf16 %v242
      %v244 = vadd.f32 %v241, %v243
      %v245 = vld [vmem:[%s3] sm:$0x1]
      %v246 = vld [vmem:[%s4] sm:$0x1]
      %vm247 = vcmask 261120
      %v248 = vsel %vm247, %v244, 0.0
      %249 = vadd.xlane.f32.xlu0 %v248
      %v250 = vpop.xlane.xlu0 %249
      %v251 = vrcp.pop 32.0
      %v252 = vmul.f32 32.0, %v251
      %v253 = vsub.f32 1.0, %v252
      %v254 = vmul.f32 %v251, %v253
      %v255 = vadd.f32 %v251, %v254
      %vm256 = vweird.f32 %v251
      %v257 = vsel %vm256, %v251, %v255
      %v258 = vmul.f32 %v250, %v257
      %v259 = vsub.f32 %v244, %v258
      %v260 = vmul.f32 %v259, %v259
      %v261 = vsel %vm247, %v260, 0.0
      %262 = vadd.xlane.f32.xlu0 %v261
      %v263 = vpop.xlane.xlu0 %262
      %v264 = vmul.f32 %v263, %v257
      %v265 = vadd.f32 %v264, 1e-12
      %v266 = vrsqrt.pop %v265
      %v267 = vmul.f32 %v266, %v265
      %v268 = vmul.f32 %v267, %v266
      %v269 = vmul.f32 0.5, %v268
      %v270 = vsub.f32 1.5, %v269
      %v271 = vmul.f32 %v266, %v270
      %vm272 = vweird.f32 %v265
      %vm273 = vweird.f32 %v266
      %vm274 = vmor %vm272, %vm273
      %v275 = vsel %vm274, %v266, %v271
      %v276 = vmul.f32 %v259, %v275
      %v278 = vperm.slane %v245, 0
      %v280 = vmul.f32 %v276, %v278
      %v282 = vperm.slane %v246, 0
      %v284 = vadd.f32 %v280, %v282
      %v285 = vpack.c.bf16 %v284, %v284
      %vm286 = vcmask 257024
      %287 = vst.msk [vmem:[%s236] sm:$0xf] %vm286, %v285
      %p288 = scmp.lt.s32.totalorder %s16, 1
      %s289 = scalar_select %p288, %s16, 1
      %s290 = smul.addr %s289, 4
      %s291 = scalar_lea.vmem %s5, %s290
      // Predicated region
      $region41: #{my_model_forward.5} parent=39 // pred_check
        %p292 = pneg %p149
      $region42: #{my_model_forward.5} parent=39 // pred_check_branch
        %294 = sbr.rel (%p292) target = $region44
      $region43: #{my_model_forward.5} parent=39 // pred_region
        _
      $region44: #{my_model_forward.5} parent=39 // pred_fallthru
        _
    $region40: #{my_model_forward.5} parent=5 // pred_fallthru
      _
    %p295 = scmp.le.s32.totalorder 2, %s11
    // Predicated region
    $region45: #{my_model_forward.5} parent=5 // pred_check
      %p296 = pneg %p295
    $region46: #{my_model_forward.5} parent=5 // pred_check_branch
      %298 = sbr.rel (%p296) target = $region48
    $region47: #{my_model_forward.5} parent=5 // pred_region
      %s299 = ssub.s32 %s11, 2
      // Predicated region
      $region49: #{my_model_forward.5} parent=47 // pred_check
        %p300 = pneg %p155
      $region50: #{my_model_forward.5} parent=47 // pred_check_branch
        %302 = sbr.rel (%p300) target = $region52
      $region51: #{my_model_forward.5} parent=47 // pred_region
        %p303 = scmp.lt.s32.totalorder %s17, 1
        %s304 = scalar_select %p303, %s17, 1
        %s305 = smul.addr %s304, 4
        %s306 = scalar_lea.vmem %s5, %s305
      $region52: #{my_model_forward.5} parent=47 // pred_fallthru
        _
    $region48: #{my_model_forward.5} parent=5 // pred_fallthru
      _
  $region6: #{my_model_forward.5} parent=0 // loop_footer
    %s15 = sadd.s32 1, %s11
  $region7: #{my_model_forward.5} parent=0 // loop_footer_branch
    %10 = sbr.rel target = $region3
  $region8: #{my_model_forward.5} parent=0 // loop_exit
    _

// kernel: my_model_forward.8
$region0: #{my_model_forward.8}
  #allocation0 [shape = 'u32[]', space=smem, size = 0x4, offset = 0x4, fixed_abs, tag = 'smem constant byte address 0x4 - core index']
  #allocation1 [shape = 'u32[72,128]{1,0:T(1,128)}', space=vmem, size = 0x9000, scoped, tag = 'internal scratch']
  %s0 = inlined_call_operand.vmem [shape: bf16[2,8,32], index: 0, kind: input, shape index: {}]
  %s1 = inlined_call_operand.vmem [shape: f32[2,1,8], index: 1, kind: input, shape index: {}]
  %s2 = inlined_call_operand.vmem [shape: bf16[2,32,48], index: 2, kind: input, shape index: {}]
  %s3 = inlined_call_operand.vmem [shape: f32[2,1,48], index: 3, kind: input, shape index: {}]
  %s4 = inlined_call_operand.vmem [shape: bf16[32,32], index: 4, kind: input, shape index: {}]
  %s5 = inlined_call_operand.vmem [shape: f32[1,32], index: 5, kind: input, shape index: {}]
  %s6 = inlined_call_operand.hbm [shape: f32[1,32], index: 6, kind: input, shape index: {}]
  %s7 = inlined_call_operand.hbm [shape: f32[1,32], index: 7, kind: input, shape index: {}]
  %s8 = inlined_call_operand.vmem [shape: bf16[32,64], index: 8, kind: input, shape index: {}]
  %s9 = inlined_call_operand.hbm [shape: f32[1,64], index: 9, kind: input, shape index: {}]
  %s10 = inlined_call_operand.vmem [shape: bf16[64,32], index: 10, kind: input, shape index: {}]
  %s11 = inlined_call_operand.hbm [shape: f32[1,32], index: 11, kind: input, shape index: {}]
  %s12 = inlined_call_operand.hbm [shape: f32[1,32], index: 12, kind: input, shape index: {}]
  %s13 = inlined_call_operand.hbm [shape: f32[1,32], index: 13, kind: input, shape index: {}]
  %s14 = inlined_call_operand.vmem [shape: bf16[2,8,32], index: 14, kind: output, shape index: {}]
  %s15 = sld [smem:[#allocation0]]
  $region113: #{my_model_forward.8} parent=0
    _
  %s17 = ssub.s32 1, %s15
  %s18 = scalar_select 0, %s17, %s15
  $region1: #{my_model_forward.8} parent=0
    #allocation2 [shape = 'u8[512]{0}', space=vmem, size = 0x400, scoped, tag = 'input window, operand 6, single buffered']
    #allocation3 [shape = 's32[2]{0}', space=sflag, size = 0x8, scoped, tag = 'scoped memory for my_model_forward.8']
    #allocation4 [shape = 'u8[512]{0}', space=vmem, size = 0x400, scoped, tag = 'input window, operand 7, single buffered']
    #allocation5 [shape = 's32[1]{0}', space=sflag, size = 0x4, scoped, tag = 'scoped memory for my_model_forward.8']
    #allocation6 [shape = 'u8[512]{0}', space=vmem, size = 0x400, scoped, tag = 'input window, operand 9, single buffered']
    #allocation7 [shape = 'u8[512]{0}', space=vmem, size = 0x400, scoped, tag = 'input window, operand 11, single buffered']
    #allocation8 [shape = 's32[1]{0}', space=sflag, size = 0x4, scoped, tag = 'scoped memory for my_model_forward.8']
    #allocation9 [shape = 'u8[512]{0}', space=vmem, size = 0x400, scoped, tag = 'input window, operand 12, single buffered']
    #allocation10 [shape = 'u8[512]{0}', space=vmem, size = 0x400, scoped, tag = 'input window, operand 13, single buffered']
    #allocation11 [shape = 's32[1]{0}', space=sflag, size = 0x4, scoped, tag = 'scoped memory for my_model_forward.8']
    %19 = vsyncpa [#allocation3], 0
    %20 = vsyncpa [#allocation5], 0
    %21 = vsyncpa [#allocation8], 0
    %22 = vsyncpa [#allocation11], 0
    loop: start=0, step=1, limit=4
    $region2: #{my_model_forward.8} parent=1 // loop_pre_header
      _
    $region3: #{my_model_forward.8} parent=1 // loop_header
      %s24 = sphi 0, %s28
      %p25 = scmp.ge.s32.totalorder %s24, 4
      %s34 = sphi 0, %s36
      %s37 = sphi 0, %s34
      %s38 = sphi 0, %s37
      %s54 = sphi 0, %s38
      %s60 = sphi 0, %s62
      %s63 = sphi 0, %s60
      %s64 = sphi 0, %s63
      %s80 = sphi 0, %s64
      %s84 = sphi 0, %s84
      %s86 = sphi 0, %s84
      %s87 = sphi 0, %s86
      %s101 = sphi 0, %s87
      %s105 = sphi 0, %s105
      %s107 = sphi 0, %s105
      %s108 = sphi 0, %s107
      %s122 = sphi 0, %s108
      %s126 = sphi 0, %s126
      %s128 = sphi 0, %s126
      %s129 = sphi 0, %s128
      %s143 = sphi 0, %s129
      %s147 = sphi 0, %s147
      %s149 = sphi 0, %s147
      %s150 = sphi 0, %s149
      %s164 = sphi 0, %s150
      %s168 = sphi 0, %s168
      %s170 = sphi 0, %s168
      %s171 = sphi 0, %s170
      %s185 = sphi 0, %s171
      %s189 = sphi 0, %s189
      %s191 = sphi 0, %s189
      %s192 = sphi 0, %s191
      %s206 = sphi 0, %s192
      %s210 = sphi 0, %s210
      %s212 = sphi 0, %s210
      %s213 = sphi 0, %s212
      %s227 = sphi 0, %s213
      %s231 = sphi 0, %s231
      %s233 = sphi 0, %s231
      %s234 = sphi 0, %s233
      %s248 = sphi 0, %s234
      %s252 = sphi 0, %s252
      %s254 = sphi 0, %s252
      %s255 = sphi 0, %s254
      %s269 = sphi 0, %s255
      %s273 = sphi 0, %s273
      %s275 = sphi 0, %s273
      %s276 = sphi 0, %s275
      %s290 = sphi 0, %s276
      %s294 = sphi 0, %s294
      %s296 = sphi 0, %s294
      %s297 = sphi 0, %s296
      %s311 = sphi 0, %s297
      %s315 = sphi 0, %s315
      %s317 = sphi 0, %s315
      %s318 = sphi 0, %s317
      %s332 = sphi 0, %s318
      %s338 = sphi 0, %s340
      %s341 = sphi 0, %s338
      %s342 = sphi 0, %s341
      %s358 = sphi 0, %s342
    $region4: #{my_model_forward.8} parent=1 // loop_header_branch
      %27 = sbr.rel (%p25) target = $region8
    $region5: #{my_model_forward.8} parent=1 // loop_body
      %s29 = ssub.s32 %s24, 1
      %s30 = ssub.s32 %s24, 2
      %s31 = sadd.s32 %s24, 1
      %s32 = ssub.s32 %s24, %s31
      %p33 = scmp.eq.s32.totalorder %s32, 0
      %s35 = sadd.s32 %s34, 1
      %s36 = scalar_select %p33, %s34, %s35
      %p39 = pneg %p33
      %p40 = scmp.eq.s32.totalorder %s24, 1
      %p41 = por %p39, %p40
      %p42 = scmp.ne.s32.totalorder %s34, %s37
      %p43 = scmp.eq.s32.totalorder %s24, 0
      %p44 = por %p42, %p43
      %p45 = scmp.ne.s32.totalorder %s34, %s37
      %p46 = scmp.eq.s32.totalorder %s29, 1
      %p47 = por %p45, %p46
      %p48 = scmp.ne.s32.totalorder %s37, %s38
      %p49 = scmp.eq.s32.totalorder %s29, 0
      %p50 = por %p48, %p49
      %p51 = scmp.ne.s32.totalorder %s37, %s38
      %p52 = scmp.eq.s32.totalorder %s30, 1
      %p53 = por %p51, %p52
      %p55 = scmp.ne.s32.totalorder %s38, %s54
      %p56 = scmp.eq.s32.totalorder %s30, 0
      %p57 = por %p55, %p56
      %s58 = ssub.s32 %s24, %s31
      %p59 = scmp.eq.s32.totalorder %s58, 0
      %s61 = sadd.s32 %s60, 1
      %s62 = scalar_select %p59, %s60, %s61
      %p65 = pneg %p59
      %p66 = scmp.eq.s32.totalorder %s24, 1
      %p67 = por %p65, %p66
      %p68 = scmp.ne.s32.totalorder %s60, %s63
      %p69 = scmp.eq.s32.totalorder %s24, 0
      %p70 = por %p68, %p69
      %p71 = scmp.ne.s32.totalorder %s60, %s63
      %p72 = scmp.eq.s32.totalorder %s29, 1
      %p73 = por %p71, %p72
      %p74 = scmp.ne.s32.totalorder %s63, %s64
      %p75 = scmp.eq.s32.totalorder %s29, 0
      %p76 = por %p74, %p75
      %p77 = scmp.ne.s32.totalorder %s63, %s64
      %p78 = scmp.eq.s32.totalorder %s30, 1
      %p79 = por %p77, %p78
      %p81 = scmp.ne.s32.totalorder %s64, %s80
      %p82 = scmp.eq.s32.totalorder %s30, 0
      %p83 = por %p81, %p82
      %s85 = sadd.s32 %s84, 1
      %p88 = scmp.eq.s32.totalorder %s24, 1
      %p89 = scmp.ne.s32.totalorder %s84, %s86
      %p90 = scmp.eq.s32.totalorder %s24, 0
      %p91 = por %p89, %p90
      %p92 = scmp.ne.s32.totalorder %s84, %s86
      %p93 = scmp.eq.s32.totalorder %s29, 1
      %p94 = por %p92, %p93
      %p95 = scmp.ne.s32.totalorder %s86, %s87
      %p96 = scmp.eq.s32.totalorder %s29, 0
      %p97 = por %p95, %p96
      %p98 = scmp.ne.s32.totalorder %s86, %s87
      %p99 = scmp.eq.s32.totalorder %s30, 1
      %p100 = por %p98, %p99
      %p102 = scmp.ne.s32.totalorder %s87, %s101
      %p103 = scmp.eq.s32.totalorder %s30, 0
      %p104 = por %p102, %p103
      %s106 = sadd.s32 %s105, 1
      %p109 = scmp.eq.s32.totalorder %s24, 1
      %p110 = scmp.ne.s32.totalorder %s105, %s107
      %p111 = scmp.eq.s32.totalorder %s24, 0
      %p112 = por %p110, %p111
      %p113 = scmp.ne.s32.totalorder %s105, %s107
      %p114 = scmp.eq.s32.totalorder %s29, 1
      %p115 = por %p113, %p114
      %p116 = scmp.ne.s32.totalorder %s107, %s108
      %p117 = scmp.eq.s32.totalorder %s29, 0
      %p118 = por %p116, %p117
      %p119 = scmp.ne.s32.totalorder %s107, %s108
      %p120 = scmp.eq.s32.totalorder %s30, 1
      %p121 = por %p119, %p120
      %p123 = scmp.ne.s32.totalorder %s108, %s122
      %p124 = scmp.eq.s32.totalorder %s30, 0
      %p125 = por %p123, %p124
      %s127 = sadd.s32 %s126, 1
      %p130 = scmp.eq.s32.totalorder %s24, 1
      %p131 = scmp.ne.s32.totalorder %s126, %s128
      %p132 = scmp.eq.s32.totalorder %s24, 0
      %p133 = por %p131, %p132
      %p134 = scmp.ne.s32.totalorder %s126, %s128
      %p135 = scmp.eq.s32.totalorder %s29, 1
      %p136 = por %p134, %p135
      %p137 = scmp.ne.s32.totalorder %s128, %s129
      %p138 = scmp.eq.s32.totalorder %s29, 0
      %p139 = por %p137, %p138
      %p140 = scmp.ne.s32.totalorder %s128, %s129
      %p141 = scmp.eq.s32.totalorder %s30, 1
      %p142 = por %p140, %p141
      %p144 = scmp.ne.s32.totalorder %s129, %s143
      %p145 = scmp.eq.s32.totalorder %s30, 0
      %p146 = por %p144, %p145
      %s148 = sadd.s32 %s147, 1
      %p151 = scmp.eq.s32.totalorder %s24, 1
      %p152 = scmp.ne.s32.totalorder %s147, %s149
      %p153 = scmp.eq.s32.totalorder %s24, 0
      %p154 = por %p152, %p153
      %p155 = scmp.ne.s32.totalorder %s147, %s149
      %p156 = scmp.eq.s32.totalorder %s29, 1
      %p157 = por %p155, %p156
      %p158 = scmp.ne.s32.totalorder %s149, %s150
      %p159 = scmp.eq.s32.totalorder %s29, 0
      %p160 = por %p158, %p159
      %p161 = scmp.ne.s32.totalorder %s149, %s150
      %p162 = scmp.eq.s32.totalorder %s30, 1
      %p163 = por %p161, %p162
      %p165 = scmp.ne.s32.totalorder %s150, %s164
      %p166 = scmp.eq.s32.totalorder %s30, 0
      %p167 = por %p165, %p166
      %s169 = sadd.s32 %s168, 1
      %p172 = scmp.eq.s32.totalorder %s24, 1
      %p173 = scmp.ne.s32.totalorder %s168, %s170
      %p174 = scmp.eq.s32.totalorder %s24, 0
      %p175 = por %p173, %p174
      %p176 = scmp.ne.s32.totalorder %s168, %s170
      %p177 = scmp.eq.s32.totalorder %s29, 1
      %p178 = por %p176, %p177
      %p179 = scmp.ne.s32.totalorder %s170, %s171
      %p180 = scmp.eq.s32.totalorder %s29, 0
      %p181 = por %p179, %p180
      %p182 = scmp.ne.s32.totalorder %s170, %s171
      %p183 = scmp.eq.s32.totalorder %s30, 1
      %p184 = por %p182, %p183
      %p186 = scmp.ne.s32.totalorder %s171, %s185
      %p187 = scmp.eq.s32.totalorder %s30, 0
      %p188 = por %p186, %p187
      %s190 = sadd.s32 %s189, 1
      %p193 = scmp.eq.s32.totalorder %s24, 1
      %p194 = scmp.ne.s32.totalorder %s189, %s191
      %p195 = scmp.eq.s32.totalorder %s24, 0
      %p196 = por %p194, %p195
      %p197 = scmp.ne.s32.totalorder %s189, %s191
      %p198 = scmp.eq.s32.totalorder %s29, 1
      %p199 = por %p197, %p198
      %p200 = scmp.ne.s32.totalorder %s191, %s192
      %p201 = scmp.eq.s32.totalorder %s29, 0
      %p202 = por %p200, %p201
      %p203 = scmp.ne.s32.totalorder %s191, %s192
      %p204 = scmp.eq.s32.totalorder %s30, 1
      %p205 = por %p203, %p204
      %p207 = scmp.ne.s32.totalorder %s192, %s206
      %p208 = scmp.eq.s32.totalorder %s30, 0
      %p209 = por %p207, %p208
      %s211 = sadd.s32 %s210, 1
      %p214 = scmp.eq.s32.totalorder %s24, 1
      %p215 = scmp.ne.s32.totalorder %s210, %s212
      %p216 = scmp.eq.s32.totalorder %s24, 0
      %p217 = por %p215, %p216
      %p218 = scmp.ne.s32.totalorder %s210, %s212
      %p219 = scmp.eq.s32.totalorder %s29, 1
      %p220 = por %p218, %p219
      %p221 = scmp.ne.s32.totalorder %s212, %s213
      %p222 = scmp.eq.s32.totalorder %s29, 0
      %p223 = por %p221, %p222
      %p224 = scmp.ne.s32.totalorder %s212, %s213
      %p225 = scmp.eq.s32.totalorder %s30, 1
      %p226 = por %p224, %p225
      %p228 = scmp.ne.s32.totalorder %s213, %s227
      %p229 = scmp.eq.s32.totalorder %s30, 0
      %p230 = por %p228, %p229
      %s232 = sadd.s32 %s231, 1
      %p235 = scmp.eq.s32.totalorder %s24, 1
      %p236 = scmp.ne.s32.totalorder %s231, %s233
      %p237 = scmp.eq.s32.totalorder %s24, 0
      %p238 = por %p236, %p237
      %p239 = scmp.ne.s32.totalorder %s231, %s233
      %p240 = scmp.eq.s32.totalorder %s29, 1
      %p241 = por %p239, %p240
      %p242 = scmp.ne.s32.totalorder %s233, %s234
      %p243 = scmp.eq.s32.totalorder %s29, 0
      %p244 = por %p242, %p243
      %p245 = scmp.ne.s32.totalorder %s233, %s234
      %p246 = scmp.eq.s32.totalorder %s30, 1
      %p247 = por %p245, %p246
      %p249 = scmp.ne.s32.totalorder %s234, %s248
      %p250 = scmp.eq.s32.totalorder %s30, 0
      %p251 = por %p249, %p250
      %s253 = sadd.s32 %s252, 1
      %p256 = scmp.eq.s32.totalorder %s24, 1
      %p257 = scmp.ne.s32.totalorder %s252, %s254
      %p258 = scmp.eq.s32.totalorder %s24, 0
      %p259 = por %p257, %p258
      %p260 = scmp.ne.s32.totalorder %s252, %s254
      %p261 = scmp.eq.s32.totalorder %s29, 1
      %p262 = por %p260, %p261
      %p263 = scmp.ne.s32.totalorder %s254, %s255
      %p264 = scmp.eq.s32.totalorder %s29, 0
      %p265 = por %p263, %p264
      %p266 = scmp.ne.s32.totalorder %s254, %s255
      %p267 = scmp.eq.s32.totalorder %s30, 1
      %p268 = por %p266, %p267
      %p270 = scmp.ne.s32.totalorder %s255, %s269
      %p271 = scmp.eq.s32.totalorder %s30, 0
      %p272 = por %p270, %p271
      %s274 = sadd.s32 %s273, 1
      %p277 = scmp.eq.s32.totalorder %s24, 1
      %p278 = scmp.ne.s32.totalorder %s273, %s275
      %p279 = scmp.eq.s32.totalorder %s24, 0
      %p280 = por %p278, %p279
      %p281 = scmp.ne.s32.totalorder %s273, %s275
      %p282 = scmp.eq.s32.totalorder %s29, 1
      %p283 = por %p281, %p282
      %p284 = scmp.ne.s32.totalorder %s275, %s276
      %p285 = scmp.eq.s32.totalorder %s29, 0
      %p286 = por %p284, %p285
      %p287 = scmp.ne.s32.totalorder %s275, %s276
      %p288 = scmp.eq.s32.totalorder %s30, 1
      %p289 = por %p287, %p288
      %p291 = scmp.ne.s32.totalorder %s276, %s290
      %p292 = scmp.eq.s32.totalorder %s30, 0
      %p293 = por %p291, %p292
      %s295 = sadd.s32 %s294, 1
      %p298 = scmp.eq.s32.totalorder %s24, 1
      %p299 = scmp.ne.s32.totalorder %s294, %s296
      %p300 = scmp.eq.s32.totalorder %s24, 0
      %p301 = por %p299, %p300
      %p302 = scmp.ne.s32.totalorder %s294, %s296
      %p303 = scmp.eq.s32.totalorder %s29, 1
      %p304 = por %p302, %p303
      %p305 = scmp.ne.s32.totalorder %s296, %s297
      %p306 = scmp.eq.s32.totalorder %s29, 0
      %p307 = por %p305, %p306
      %p308 = scmp.ne.s32.totalorder %s296, %s297
      %p309 = scmp.eq.s32.totalorder %s30, 1
      %p310 = por %p308, %p309
      %p312 = scmp.ne.s32.totalorder %s297, %s311
      %p313 = scmp.eq.s32.totalorder %s30, 0
      %p314 = por %p312, %p313
      %s316 = sadd.s32 %s315, 1
      %p319 = scmp.eq.s32.totalorder %s24, 1
      %p320 = scmp.ne.s32.totalorder %s315, %s317
      %p321 = scmp.eq.s32.totalorder %s24, 0
      %p322 = por %p320, %p321
      %p323 = scmp.ne.s32.totalorder %s315, %s317
      %p324 = scmp.eq.s32.totalorder %s29, 1
      %p325 = por %p323, %p324
      %p326 = scmp.ne.s32.totalorder %s317, %s318
      %p327 = scmp.eq.s32.totalorder %s29, 0
      %p328 = por %p326, %p327
      %p329 = scmp.ne.s32.totalorder %s317, %s318
      %p330 = scmp.eq.s32.totalorder %s30, 1
      %p331 = por %p329, %p330
      %p333 = scmp.ne.s32.totalorder %s318, %s332
      %p334 = scmp.eq.s32.totalorder %s30, 0
      %p335 = por %p333, %p334
      %s336 = ssub.s32 %s24, %s31
      %p337 = scmp.eq.s32.totalorder %s336, 0
      %s339 = sadd.s32 %s338, 1
      %s340 = scalar_select %p337, %s338, %s339
      %p343 = pneg %p337
      %p344 = scmp.eq.s32.totalorder %s24, 1
      %p345 = por %p343, %p344
      %p346 = scmp.ne.s32.totalorder %s338, %s341
      %p347 = scmp.eq.s32.totalorder %s24, 0
      %p348 = por %p346, %p347
      %p349 = scmp.ne.s32.totalorder %s338, %s341
      %p350 = scmp.eq.s32.totalorder %s29, 1
      %p351 = por %p349, %p350
      %p352 = scmp.ne.s32.totalorder %s341, %s342
      %p353 = scmp.eq.s32.totalorder %s29, 0
      %p354 = por %p352, %p353
      %p355 = scmp.ne.s32.totalorder %s341, %s342
      %p356 = scmp.eq.s32.totalorder %s30, 1
      %p357 = por %p355, %p356
      %p359 = scmp.ne.s32.totalorder %s342, %s358
      %p360 = scmp.eq.s32.totalorder %s30, 0
      %p361 = por %p359, %p360
      %p362 = scmp.le.s32.totalorder 1, %s24
      %p363 = scmp.lt.s32.totalorder %s24, 3
      %p364 = pnand %p362, %p363
      %p365 = pneg %p364
      // Predicated region
      $region9: #{my_model_forward.8} parent=5 // pred_check
        _
      $region10: #{my_model_forward.8} parent=5 // pred_check_branch
        %367 = sbr.rel (%p364) target = $region12
      $region11: #{my_model_forward.8} parent=5 // pred_region
        %s368 = ssub.s32 %s24, 1
        // Predicated region
        $region13: #{my_model_forward.8} parent=11 // pred_check
          %p369 = pneg %p97
        $region14: #{my_model_forward.8} parent=11 // pred_check_branch
          %371 = sbr.rel (%p369) target = $region16
        $region15: #{my_model_forward.8} parent=11 // pred_region
          _
        $region16: #{my_model_forward.8} parent=11 // pred_fallthru
          _
        // Predicated region
        $region17: #{my_model_forward.8} parent=11 // pred_check
          %p372 = pneg %p118
        $region18: #{my_model_forward.8} parent=11 // pred_check_branch
          %374 = sbr.rel (%p372) target = $region20
        $region19: #{my_model_forward.8} parent=11 // pred_region
          _
        $region20: #{my_model_forward.8} parent=11 // pred_fallthru
          _
        // Predicated region
        $region21: #{my_model_forward.8} parent=11 // pred_check
          %p375 = pneg %p139
        $region22: #{my_model_forward.8} parent=11 // pred_check_branch
          %377 = sbr.rel (%p375) target = $region24
        $region23: #{my_model_forward.8} parent=11 // pred_region
          _
        $region24: #{my_model_forward.8} parent=11 // pred_fallthru
          _
        // Predicated region
        $region25: #{my_model_forward.8} parent=11 // pred_check
          %p378 = pneg %p160
        $region26: #{my_model_forward.8} parent=11 // pred_check_branch
          %380 = sbr.rel (%p378) target = $region28
        $region27: #{my_model_forward.8} parent=11 // pred_region
          _
        $region28: #{my_model_forward.8} parent=11 // pred_fallthru
          _
        // Predicated region
        $region29: #{my_model_forward.8} parent=11 // pred_check
          %p381 = pneg %p181
        $region30: #{my_model_forward.8} parent=11 // pred_check_branch
          %383 = sbr.rel (%p381) target = $region32
        $region31: #{my_model_forward.8} parent=11 // pred_region
          %385 = vsyncadd [#allocation3], 0
          %s387 = sshll.u32 %s6, 4
          %s388 = int_to_ptr.hbm [resolvable:$true] %s387
          %s389 = sshll.u32 [#allocation2], 4
          %s390 = int_to_ptr.vmem [resolvable:$true] %s389
          %392 = dma.hbm_to_vmem [thread:$0]  %s388, 16, %s390, [#allocation3]
        $region32: #{my_model_forward.8} parent=11 // pred_fallthru
          _
        // Predicated region
        $region33: #{my_model_forward.8} parent=11 // pred_check
          %p393 = pneg %p202
        $region34: #{my_model_forward.8} parent=11 // pred_check_branch
          %395 = sbr.rel (%p393) target = $region36
        $region35: #{my_model_forward.8} parent=11 // pred_region
          %397 = vsyncadd [#allocation5], 0
          %s399 = sshll.u32 %s7, 4
          %s400 = int_to_ptr.hbm [resolvable:$true] %s399
          %s401 = sshll.u32 [#allocation4], 4
          %s402 = int_to_ptr.vmem [resolvable:$true] %s401
          %404 = dma.hbm_to_vmem [thread:$0]  %s400, 16, %s402, [#allocation5]
        $region36: #{my_model_forward.8} parent=11 // pred_fallthru
          _
        // Predicated region
        $region37: #{my_model_forward.8} parent=11 // pred_check
          %p405 = pneg %p223
        $region38: #{my_model_forward.8} parent=11 // pred_check_branch
          %407 = sbr.rel (%p405) target = $region40
        $region39: #{my_model_forward.8} parent=11 // pred_region
          _
        $region40: #{my_model_forward.8} parent=11 // pred_fallthru
          _
        // Predicated region
        $region41: #{my_model_forward.8} parent=11 // pred_check
          %p408 = pneg %p244
        $region42: #{my_model_forward.8} parent=11 // pred_check_branch
          %410 = sbr.rel (%p408) target = $region44
        $region43: #{my_model_forward.8} parent=11 // pred_region
          %412 = vsyncadd [#allocation5], 0
          %s414 = sshll.u32 %s9, 4
          %s415 = int_to_ptr.hbm [resolvable:$true] %s414
          %s416 = sshll.u32 [#allocation6], 4
          %s417 = int_to_ptr.vmem [resolvable:$true] %s416
          %419 = dma.hbm_to_vmem [thread:$0]  %s415, 16, %s417, [#allocation5]
        $region44: #{my_model_forward.8} parent=11 // pred_fallthru
          _
        // Predicated region
        $region45: #{my_model_forward.8} parent=11 // pred_check
          %p420 = pneg %p265
        $region46: #{my_model_forward.8} parent=11 // pred_check_branch
          %422 = sbr.rel (%p420) target = $region48
        $region47: #{my_model_forward.8} parent=11 // pred_region
          _
        $region48: #{my_model_forward.8} parent=11 // pred_fallthru
          _
        // Predicated region
        $region49: #{my_model_forward.8} parent=11 // pred_check
          %p423 = pneg %p286
        $region50: #{my_model_forward.8} parent=11 // pred_check_branch
          %425 = sbr.rel (%p423) target = $region52
        $region51: #{my_model_forward.8} parent=11 // pred_region
          %427 = vsyncadd [#allocation8], 0
          %s429 = sshll.u32 %s11, 4
          %s430 = int_to_ptr.hbm [resolvable:$true] %s429
          %s431 = sshll.u32 [#allocation7], 4
          %s432 = int_to_ptr.vmem [resolvable:$true] %s431
          %434 = dma.hbm_to_vmem [thread:$0]  %s430, 16, %s432, [#allocation8]
        $region52: #{my_model_forward.8} parent=11 // pred_fallthru
          _
        // Predicated region
        $region53: #{my_model_forward.8} parent=11 // pred_check
          %p435 = pneg %p307
        $region54: #{my_model_forward.8} parent=11 // pred_check_branch
          %437 = sbr.rel (%p435) target = $region56
        $region55: #{my_model_forward.8} parent=11 // pred_region
          %439 = vsyncadd [#allocation8], 0
          %s441 = sshll.u32 %s12, 4
          %s442 = int_to_ptr.hbm [resolvable:$true] %s441
          %s443 = sshll.u32 [#allocation9], 4
          %s444 = int_to_ptr.vmem [resolvable:$true] %s443
          %446 = dma.hbm_to_vmem [thread:$0]  %s442, 16, %s444, [#allocation8]
        $region56: #{my_model_forward.8} parent=11 // pred_fallthru
          _
        // Predicated region
        $region57: #{my_model_forward.8} parent=11 // pred_check
          %p447 = pneg %p328
        $region58: #{my_model_forward.8} parent=11 // pred_check_branch
          %449 = sbr.rel (%p447) target = $region60
        $region59: #{my_model_forward.8} parent=11 // pred_region
          %451 = vsyncadd [#allocation11], 0
          %s453 = sshll.u32 %s13, 4
          %s454 = int_to_ptr.hbm [resolvable:$true] %s453
          %s455 = sshll.u32 [#allocation10], 4
          %s456 = int_to_ptr.vmem [resolvable:$true] %s455
          %458 = dma.hbm_to_vmem [thread:$0]  %s454, 16, %s456, [#allocation11]
        $region60: #{my_model_forward.8} parent=11 // pred_fallthru
          _
      $region12: #{my_model_forward.8} parent=5 // pred_fallthru
        _
      %p459 = scmp.lt.s32.totalorder %s24, 2
      // Predicated region
      $region61: #{my_model_forward.8} parent=5 // pred_check
        %p460 = pneg %p459
      $region62: #{my_model_forward.8} parent=5 // pred_check_branch
        %462 = sbr.rel (%p460) target = $region64
      $region63: #{my_model_forward.8} parent=5 // pred_region
        // Predicated region
        $region65: #{my_model_forward.8} parent=63 // pred_check
          %p463 = pneg %p44
        $region66: #{my_model_forward.8} parent=63 // pred_check_branch
          %465 = sbr.rel (%p463) target = $region68
        $region67: #{my_model_forward.8} parent=63 // pred_region
          %p466 = scmp.lt.s32.totalorder %s24, 1
          %s467 = scalar_select %p466, %s24, 1
          %s468 = smul.addr %s467, 4
          %s469 = scalar_lea.vmem %s0, %s468
        $region68: #{my_model_forward.8} parent=63 // pred_fallthru
          _
        // Predicated region
        $region69: #{my_model_forward.8} parent=63 // pred_check
          %p470 = pneg %p70
        $region70: #{my_model_forward.8} parent=63 // pred_check_branch
          %472 = sbr.rel (%p470) target = $region72
        $region71: #{my_model_forward.8} parent=63 // pred_region
          %p473 = scmp.lt.s32.totalorder %s24, 1
          %s474 = scalar_select %p473, %s24, 1
          %s475 = scalar_lea.vmem %s1, %s474
        $region72: #{my_model_forward.8} parent=63 // pred_fallthru
          _
      $region64: #{my_model_forward.8} parent=5 // pred_fallthru
        _
      %p476 = scmp.le.s32.totalorder 1, %s24
      %p477 = scmp.lt.s32.totalorder %s24, 3
      %p478 = pnand %p476, %p477
      %p479 = pneg %p478
      // Predicated region
      $region73: #{my_model_forward.8} parent=5 // pred_check
        _
      $region74: #{my_model_forward.8} parent=5 // pred_check_branch
        %481 = sbr.rel (%p478) target = $region76
      $region75: #{my_model_forward.8} parent=5 // pred_region
        %s482 = ssub.s32 %s24, 1
        // Predicated region
        $region77: #{my_model_forward.8} parent=75 // pred_check
          %p483 = pneg %p181
        $region78: #{my_model_forward.8} parent=75 // pred_check_branch
          %485 = sbr.rel (%p483) target = $region80
        $region79: #{my_model_forward.8} parent=75 // pred_region
          %487 = dma.done [#allocation3], 16
        $region80: #{my_model_forward.8} parent=75 // pred_fallthru
          _
        // Predicated region
        $region81: #{my_model_forward.8} parent=75 // pred_check
          %p488 = pneg %p202
        $region82: #{my_model_forward.8} parent=75 // pred_check_branch
          %490 = sbr.rel (%p488) target = $region84
        $region83: #{my_model_forward.8} parent=75 // pred_region
          %492 = dma.done [#allocation5], 16
        $region84: #{my_model_forward.8} parent=75 // pred_fallthru
          _
        // Predicated region
        $region85: #{my_model_forward.8} parent=75 // pred_check
          %p493 = pneg %p244
        $region86: #{my_model_forward.8} parent=75 // pred_check_branch
          %495 = sbr.rel (%p493) target = $region88
        $region87: #{my_model_forward.8} parent=75 // pred_region
          %497 = dma.done [#allocation5], 16
        $region88: #{my_model_forward.8} parent=75 // pred_fallthru
          _
        // Predicated region
        $region89: #{my_model_forward.8} parent=75 // pred_check
          %p498 = pneg %p286
        $region90: #{my_model_forward.8} parent=75 // pred_check_branch
          %500 = sbr.rel (%p498) target = $region92
        $region91: #{my_model_forward.8} parent=75 // pred_region
          %502 = dma.done [#allocation8], 16
        $region92: #{my_model_forward.8} parent=75 // pred_fallthru
          _
        // Predicated region
        $region93: #{my_model_forward.8} parent=75 // pred_check
          %p503 = pneg %p307
        $region94: #{my_model_forward.8} parent=75 // pred_check_branch
          %505 = sbr.rel (%p503) target = $region96
        $region95: #{my_model_forward.8} parent=75 // pred_region
          %507 = dma.done [#allocation8], 16
        $region96: #{my_model_forward.8} parent=75 // pred_fallthru
          _
        // Predicated region
        $region97: #{my_model_forward.8} parent=75 // pred_check
          %p508 = pneg %p328
        $region98: #{my_model_forward.8} parent=75 // pred_check_branch
          %510 = sbr.rel (%p508) target = $region100
        $region99: #{my_model_forward.8} parent=75 // pred_region
          %512 = dma.done [#allocation11], 16
        $region100: #{my_model_forward.8} parent=75 // pred_fallthru
          _
        %p513 = scmp.lt.s32.totalorder %s29, 1
        %s514 = scalar_select %p513, %s29, 1
        %s515 = smul.addr %s514, 4
        %s516 = scalar_lea.vmem %s0, %s515
        %p517 = pneg %p50
        %p518 = pneg %p47
        %p519 = scmp.lt.s32.totalorder %s29, 1
        %s520 = scalar_select %p519, %s29, 1
        %s521 = scalar_lea.vmem %s1, %s520
        %p522 = pneg %p76
        %p523 = pneg %p73
        %p524 = pneg %p97
        %p525 = pneg %p94
        %p526 = pneg %p118
        %p527 = pneg %p115
        %p528 = pneg %p139
        %p529 = pneg %p136
        %p530 = pneg %p160
        %p531 = pneg %p157
        %p532 = pneg %p181
        %p533 = pneg %p178
        %p534 = pneg %p202
        %p535 = pneg %p199
        %p536 = pneg %p223
        %p537 = pneg %p220
        %p538 = pneg %p244
        %p539 = pneg %p241
        %p540 = pneg %p265
        %p541 = pneg %p262
        %p542 = pneg %p286
        %p543 = pneg %p283
        %p544 = pneg %p307
        %p545 = pneg %p304
        %p546 = pneg %p328
        %p547 = pneg %p325
        %p548 = pneg %p354
        %p549 = pneg %p351
        %p550 = scmp.lt.s32.totalorder %s29, 1
        %s551 = scalar_select %p550, %s29, 1
        %s552 = smul.addr %s551, 4
        %s553 = scalar_lea.vmem %s14, %s552
        %p554 = scmp.lt.s32.totalorder %s29, 1
        %s555 = scalar_select %p554, %s29, 1
        %s556 = smul.addr %s555, 4
        %s557 = scalar_lea.vmem %s0, %s556
        %p558 = scmp.lt.s32.totalorder %s29, 1
        %s559 = scalar_select %p558, %s29, 1
        %s560 = scalar_lea.vmem %s1, %s559
        %p561 = scmp.lt.s32.totalorder %s29, 1
        %s562 = scalar_select %p561, %s29, 1
        %s563 = smul.addr %s562, 4
        %s564 = scalar_lea.vmem %s14, %s563
        %v566 = vld [vmem:[%s557] sm:$0xf]
        %v567 = vunpack.c.l.bf16 %v566
        %v568 = vld [vmem:[%s560] sm:$0x1]
        %v569 = vsub.f32 1.0, %v568
        %v570 = vmul.f32 %v569, -1e+09
        %v571 = vld [vmem:[%s2] sm:$0xf]
        %v572 = vld [vmem:[%s2 + $0x4] sm:$0xf]
        %v573 = vld [vmem:[%s2 + $0x8] sm:$0xf]
        %v574 = vld [vmem:[%s2 + $0xc] sm:$0xf]
        %v575 = vld [vmem:[%s3] sm:$0x1]
        %v577 = vperm.slane %v575, 0
        %v583 = vunpack.c.l.b16 %v571
        %v584 = vunpack.c.l.b16 %v572
        %v585 = vunpack.c.l.b16 %v573
        %v586 = vunpack.c.l.b16 %v574
        %v587 = vpack.c.b16 %v584, %v583
        %v588 = vpack.c.b16 %v586, %v585
        %vm591 = vcmask 261120
        %v593 = vsel %vm591, %v566, 0
        %595 = vmatpush.bf16.msra.mxu0 0
        %596 = vmatpush.bf16.msra.mxu0 0
        %597 = vmatpush.bf16.msra.mxu0 0
        %598 = vmatpush.bf16.msra.mxu0 0
        %599 = vmatpush.bf16.msra.mxu0 0
        %600 = vmatpush.bf16.msra.mxu0 0
        %601 = vmatpush.bf16.msra.mxu0 %v588
        %602 = vmatpush.bf16.msra.mxu0 %v587
        %603 = vmatmul.bf16.gmra.mxu0 %v593
        %v604 = vpop.f32.mrf.mxu0
        %v605 = vadd.f32 %v577, %v604
        %v606 = vpop.f32.mrf.mxu0
        %607 = vdwg.mxu0
        %v608 = vpack.c.bf16 %v605, %v605
        %v610 = vunpack.c.l.b16 %v608
        %v611 = vpack.c.b16 %v610, %v610
        %612 = vrot.lane.b32.xlu0 %v611, 112
        %v613 = vpop.permute.xlu0 %612
        %vm614 = vcmask 130048
        %v616 = vsel %vm614, %v608, 0
        %v619 = vsel %vm614, %v613, 0
        %621 = vmatpush.bf16.xpose.msra.mxu0 0
        %622 = vmatpush.bf16.xpose.msra.mxu0 0
        %623 = vmatpush.bf16.xpose.msra.mxu0 0
        %624 = vmatpush.bf16.xpose.msra.mxu0 0
        %625 = vmatpush.bf16.xpose.msra.mxu0 0
        %626 = vmatpush.bf16.xpose.msra.mxu0 0
        %627 = vmatpush.bf16.xpose.msra.mxu0 0
        %628 = vmatpush.bf16.xpose.msra.mxu0 %v619
        %629 = vmatmul.bf16.gmra.mxu0 %v616
        %v630 = vpop.f32.mrf.mxu0
        %v631 = vadd.f32 0.0, %v630
        %v632 = vpop.f32.mrf.mxu0
        %633 = vdwg.mxu0
        %v634 = vmul.f32 %v631, 0.25
        %v636 = vperm.slane %v570, 0
        %v638 = vadd.f32 %v634, %v636
        %vm639 = vcmask 64512
        %v640 = vsel %vm639, %v638, -inf
        %641 = vmax.xlane.f32.xlu0 %v640
        %v642 = vpop.xlane.xlu0 %641
        %v643 = vsub.f32 %v638, %v642
        %v644 = vmul.f32 %v643, 1.442695
        %v645 = vpow.pop %v644
        %v646 = vsel %vm639, %v645, 0.0
        %647 = vadd.xlane.f32.xlu0 %v646
        %v648 = vpop.xlane.xlu0 %647
        %v649 = vrcp.pop %v648
        %v650 = vmul.f32 %v645, %v649
        %v651 = vpack.c.bf16 %v650, %v650
        %652 = vrot.lane.b32.xlu0 %v611, 96
        %v653 = vpop.permute.xlu0 %652
        %v655 = vsel %vm639, %v651, 0
        %vm657 = vcmask 1043456
        %v659 = vsel %vm657, %v653, 0
        %661 = vmatpush.bf16.msra.mxu0 0
        %662 = vmatpush.bf16.msra.mxu0 0
        %663 = vmatpush.bf16.msra.mxu0 0
        %664 = vmatpush.bf16.msra.mxu0 0
        %665 = vmatpush.bf16.msra.mxu0 0
        %666 = vmatpush.bf16.msra.mxu0 0
        %667 = vmatpush.bf16.msra.mxu0 0
        %668 = vmatpush.bf16.msra.mxu0 %v659
        %669 = vmatmul.bf16.gmra.mxu0 %v655
        %v670 = vpop.f32.mrf.mxu0
        %v671 = vadd.f32 0.0, %v670
        %v672 = vpop.f32.mrf.mxu0
        %673 = vdwg.mxu0
        %v674 = vpack.c.bf16 %v671, %v671
        %s675 = scalar_lea.vmem %s2, 16
        %v676 = vld [vmem:[%s675] sm:$0xf]
        %v677 = vld [vmem:[%s675 + $0x4] sm:$0xf]
        %v678 = vld [vmem:[%s675 + $0x8] sm:$0xf]
        %v679 = vld [vmem:[%s675 + $0xc] sm:$0xf]
        %s680 = scalar_lea.vmem %s3, 1
        %v681 = vld [vmem:[%s680] sm:$0x1]
        %v683 = vperm.slane %v681, 0
        %v689 = vunpack.c.l.b16 %v676
        %v690 = vunpack.c.l.b16 %v677
        %v691 = vunpack.c.l.b16 %v678
        %v692 = vunpack.c.l.b16 %v679
        %v693 = vpack.c.b16 %v690, %v689
        %v694 = vpack.c.b16 %v692, %v691
        %697 = vmatpush.bf16.msra.mxu0 0
        %698 = vmatpush.bf16.msra.mxu0 0
        %699 = vmatpush.bf16.msra.mxu0 0
        %700 = vmatpush.bf16.msra.mxu0 0
        %701 = vmatpush.bf16.msra.mxu0 0
        %702 = vmatpush.bf16.msra.mxu0 0
        %703 = vmatpush.bf16.msra.mxu0 %v694
        %704 = vmatpush.bf16.msra.mxu0 %v693
        %705 = vmatmul.bf16.gmra.mxu0 %v593
        %v706 = vpop.f32.mrf.mxu0
        %v707 = vadd.f32 %v683, %v706
        %v708 = vpop.f32.mrf.mxu0
        %709 = vdwg.mxu0
        %v710 = vpack.c.bf16 %v707, %v707
        %v712 = vunpack.c.l.b16 %v710
        %v713 = vpack.c.b16 %v712, %v712
        %714 = vrot.lane.b32.xlu0 %v713, 112
        %v715 = vpop.permute.xlu0 %714
        %v717 = vsel %vm614, %v710, 0
        %v720 = vsel %vm614, %v715, 0
        %722 = vmatpush.bf16.xpose.msra.mxu0 0
        %723 = vmatpush.bf16.xpose.msra.mxu0 0
        %724 = vmatpush.bf16.xpose.msra.mxu0 0
        %725 = vmatpush.bf16.xpose.msra.mxu0 0
        %726 = vmatpush.bf16.xpose.msra.mxu0 0
        %727 = vmatpush.bf16.xpose.msra.mxu0 0
        %728 = vmatpush.bf16.xpose.msra.mxu0 0
        %729 = vmatpush.bf16.xpose.msra.mxu0 %v720
        %730 = vmatmul.bf16.gmra.mxu0 %v717
        %v731 = vpop.f32.mrf.mxu0
        %v732 = vadd.f32 0.0, %v731
        %v733 = vpop.f32.mrf.mxu0
        %734 = vdwg.mxu0
        %v735 = vmul.f32 %v732, 0.25
        %v736 = vadd.f32 %v735, %v636
        %v737 = vsel %vm639, %v736, -inf
        %738 = vmax.xlane.f32.xlu0 %v737
        %v739 = vpop.xlane.xlu0 %738
        %v740 = vsub.f32 %v736, %v739
        %v741 = vmul.f32 %v740, 1.442695
        %v742 = vpow.pop %v741
        %v743 = vsel %vm639, %v742, 0.0
        %744 = vadd.xlane.f32.xlu0 %v743
        %v745 = vpop.xlane.xlu0 %744
        %v746 = vrcp.pop %v745
        %v747 = vmul.f32 %v742, %v746
        %v748 = vpack.c.bf16 %v747, %v747
        %749 = vrot.lane.b32.xlu0 %v713, 96
        %v750 = vpop.permute.xlu0 %749
        %v752 = vsel %vm639, %v748, 0
        %v755 = vsel %vm657, %v750, 0
        %757 = vmatpush.bf16.msra.mxu0 0
        %758 = vmatpush.bf16.msra.mxu0 0
        %759 = vmatpush.bf16.msra.mxu0 0
        %760 = vmatpush.bf16.msra.mxu0 0
        %761 = vmatpush.bf16.msra.mxu0 0
        %762 = vmatpush.bf16.msra.mxu0 0
        %763 = vmatpush.bf16.msra.mxu0 0
        %764 = vmatpush.bf16.msra.mxu0 %v755
        %765 = vmatmul.bf16.gmra.mxu0 %v752
        %v766 = vpop.f32.mrf.mxu0
        %v767 = vadd.f32 0.0, %v766
        %v768 = vpop.f32.mrf.mxu0
        %769 = vdwg.mxu0
        %v770 = vpack.c.bf16 %v767, %v767
        %v772 = vunpack.c.l.b16 %v770
        %v773 = vpack.c.b16 %v772, %v772
        %774 = vrot.lane.b32.xlu0 %v773, 16
        %v775 = vpop.permute.xlu0 %774
        %v778 = vsel %vm614, %v674, %v775
        %v779 = vld [vmem:[%s4] sm:$0xf]
        %v780 = vld [vmem:[%s4 + $0x4] sm:$0xf]
        %v781 = vld [vmem:[%s4 + $0x8] sm:$0xf]
        %v782 = vld [vmem:[%s4 + $0xc] sm:$0xf]
        %v783 = vld [vmem:[%s5] sm:$0x1]
        %v785 = vperm.slane %v783, 0
        %v791 = vunpack.c.l.b16 %v779
        %v792 = vunpack.c.l.b16 %v780
        %v793 = vunpack.c.l.b16 %v781
        %v794 = vunpack.c.l.b16 %v782
        %v795 = vpack.c.b16 %v792, %v791
        %v796 = vpack.c.b16 %v794, %v793
        %v799 = vsel %vm591, %v778, 0
        %801 = vmatpush.bf16.msra.mxu0 0
        %802 = vmatpush.bf16.msra.mxu0 0
        %803 = vmatpush.bf16.msra.mxu0 0
        %804 = vmatpush.bf16.msra.mxu0 0
        %805 = vmatpush.bf16.msra.mxu0 0
        %806 = vmatpush.bf16.msra.mxu0 0
        %807 = vmatpush.bf16.msra.mxu0 %v796
        %808 = vmatpush.bf16.msra.mxu0 %v795
        %809 = vmatmul.bf16.gmra.mxu0 %v799
        %v810 = vpop.f32.mrf.mxu0
        %v811 = vadd.f32 %v785, %v810
        %v812 = vpop.f32.mrf.mxu0
        %813 = vdwg.mxu0
        %v814 = vadd.f32 %v811, %v567
        %v815 = vld [vmem:[#allocation2] sm:$0x1]
        %v816 = vld [vmem:[#allocation4] sm:$0x1]
        %v817 = vsel %vm591, %v814, 0.0
        %818 = vadd.xlane.f32.xlu0 %v817
        %v819 = vpop.xlane.xlu0 %818
        %v820 = vrcp.pop 32.0
        %v821 = vmul.f32 32.0, %v820
        %v822 = vsub.f32 1.0, %v821
        %v823 = vmul.f32 %v820, %v822
        %v824 = vadd.f32 %v820, %v823
        %vm825 = vweird.f32 %v820
        %v826 = vsel %vm825, %v820, %v824
        %v827 = vmul.f32 %v819, %v826
        %v828 = vsub.f32 %v814, %v827
        %v829 = vmul.f32 %v828, %v828
        %v830 = vsel %vm591, %v829, 0.0
        %831 = vadd.xlane.f32.xlu0 %v830
        %v832 = vpop.xlane.xlu0 %831
        %v833 = vmul.f32 %v832, %v826
        %v834 = vadd.f32 %v833, 1e-12
        %v835 = vrsqrt.pop %v834
        %v836 = vmul.f32 %v835, %v834
        %v837 = vmul.f32 %v836, %v835
        %v838 = vmul.f32 0.5, %v837
        %v839 = vsub.f32 1.5, %v838
        %v840 = vmul.f32 %v835, %v839
        %vm841 = vweird.f32 %v834
        %vm842 = vweird.f32 %v835
        %vm843 = vmor %vm841, %vm842
        %v844 = vsel %vm843, %v835, %v840
        %v845 = vmul.f32 %v828, %v844
        %v847 = vperm.slane %v815, 0
        %v849 = vmul.f32 %v845, %v847
        %v851 = vperm.slane %v816, 0
        %v853 = vadd.f32 %v849, %v851
        %v854 = vpack.c.bf16 %v853, %v853
        %v855 = vld [vmem:[%s8] sm:$0xf]
        %v856 = vld [vmem:[%s8 + $0x4] sm:$0xf]
        %v857 = vld [vmem:[%s8 + $0x8] sm:$0xf]
        %v858 = vld [vmem:[%s8 + $0xc] sm:$0xf]
        %v859 = vld [vmem:[#allocation6] sm:$0x1]
        %v861 = vperm.slane %v859, 0
        %v867 = vunpack.c.l.b16 %v855
        %v868 = vunpack.c.l.b16 %v856
        %v869 = vunpack.c.l.b16 %v857
        %v870 = vunpack.c.l.b16 %v858
        %v871 = vpack.c.b16 %v868, %v867
        %v872 = vpack.c.b16 %v870, %v869
        %v876 = vsel %vm591, %v854, 0
        %878 = vmatpush.bf16.msra.mxu0 0
        %879 = vmatpush.bf16.msra.mxu0 0
        %880 = vmatpush.bf16.msra.mxu0 0
        %881 = vmatpush.bf16.msra.mxu0 0
        %882 = vmatpush.bf16.msra.mxu0 0
        %883 = vmatpush.bf16.msra.mxu0 0
        %884 = vmatpush.bf16.msra.mxu0 %v872
        %885 = vmatpush.bf16.msra.mxu0 %v871
        %886 = vmatmul.bf16.gmra.mxu0 %v876
        %v887 = vpop.f32.mrf.mxu0
        %v888 = vadd.f32 %v861, %v887
        %v889 = vpop.f32.mrf.mxu0
        %890 = vdwg.mxu0
        %v891 = vmul.f32 %v888, %v888
        %v892 = vmul.f32 %v888, %v891
        %v893 = vmul.f32 %v892, 0.044715
        %v894 = vadd.f32 %v888, %v893
        %v895 = vmul.f32 %v894, 0.7978846
        %v896 = vtanh.pop %v895
        %v897 = vadd.f32 %v896, 1.0
        %v898 = vmul.f32 %v897, 0.5
        %v899 = vmul.f32 %v888, %v898
        %v900 = vpack.c.bf16 %v899, %v899
        %v901 = vld [vmem:[%s10] sm:$0xf]
        %v902 = vld [vmem:[%s10 + $0x4] sm:$0xf]
        %v903 = vld [vmem:[%s10 + $0x8] sm:$0xf]
        %v904 = vld [vmem:[%s10 + $0xc] sm:$0xf]
        %v905 = vld [vmem:[%s10 + $0x10] sm:$0xf]
        %v906 = vld [vmem:[%s10 + $0x14] sm:$0xf]
        %v907 = vld [vmem:[%s10 + $0x18] sm:$0xf]
        %v908 = vld [vmem:[%s10 + $0x1c] sm:$0xf]
        %v909 = vld [vmem:[#allocation7] sm:$0x1]
        %v911 = vperm.slane %v909, 0
        %v921 = vunpack.c.l.b16 %v901
        %v922 = vunpack.c.l.b16 %v902
        %v923 = vunpack.c.l.b16 %v903
        %v924 = vunpack.c.l.b16 %v904
        %v925 = vunpack.c.l.b16 %v905
        %v926 = vunpack.c.l.b16 %v906
        %v927 = vunpack.c.l.b16 %v907
        %v928 = vunpack.c.l.b16 %v908
        %v929 = vpack.c.b16 %v922, %v921
        %v930 = vpack.c.b16 %v924, %v923
        %v931 = vpack.c.b16 %v926, %v925
        %v932 = vpack.c.b16 %v928, %v927
        %vm937 = vcmask 523264
        %v939 = vsel %vm937, %v900, 0
        %941 = vmatpush.bf16.msra.mxu0 0
        %942 = vmatpush.bf16.msra.mxu0 0
        %943 = vmatpush.bf16.msra.mxu0 0
        %944 = vmatpush.bf16.msra.mxu0 0
        %945 = vmatpush.bf16.msra.mxu0 %v932
        %946 = vmatpush.bf16.msra.mxu0 %v931
        %947 = vmatpush.bf16.msra.mxu0 %v930
        %948 = vmatpush.bf16.msra.mxu0 %v929
        %949 = vmatmul.bf16.gmra.mxu0 %v939
        %v950 = vpop.f32.mrf.mxu0
        %v951 = vadd.f32 %v911, %v950
        %v952 = vpop.f32.mrf.mxu0
        %953 = vdwg.mxu0
        %v954 = vadd.f32 %v951, %v853
        %v955 = vld [vmem:[#allocation9] sm:$0x1]
        %v956 = vld [vmem:[#allocation10] sm:$0x1]
        %v957 = vsel %vm591, %v954, 0.0
        %958 = vadd.xlane.f32.xlu0 %v957
        %v959 = vpop.xlane.xlu0 %958
        %v960 = vmul.f32 %v959, %v826
        %v961 = vsub.f32 %v954, %v960
        %v962 = vmul.f32 %v961, %v961
        %v963 = vsel %vm591, %v962, 0.0
        %964 = vadd.xlane.f32.xlu0 %v963
        %v965 = vpop.xlane.xlu0 %964
        %v966 = vmul.f32 %v965, %v826
        %v967 = vadd.f32 %v966, 1e-12
        %v968 = vrsqrt.pop %v967
        %v969 = vmul.f32 %v968, %v967
        %v970 = vmul.f32 %v969, %v968
        %v971 = vmul.f32 0.5, %v970
        %v972 = vsub.f32 1.5, %v971
        %v973 = vmul.f32 %v968, %v972
        %vm974 = vweird.f32 %v967
        %vm975 = vweird.f32 %v968
        %vm976 = vmor %vm974, %vm975
        %v977 = vsel %vm976, %v968, %v973
        %v978 = vmul.f32 %v961, %v977
        %v980 = vperm.slane %v955, 0
        %v982 = vmul.f32 %v978, %v980
        %v984 = vperm.slane %v956, 0
        %v986 = vadd.f32 %v982, %v984
        %v987 = vpack.c.bf16 %v986, %v986
        %vm988 = vcmask 257024
        %989 = vst.msk [vmem:[%s564] sm:$0xf] %vm988, %v987
        %p990 = scmp.lt.s32.totalorder %s29, 1
        %s991 = scalar_select %p990, %s29, 1
        %s992 = smul.addr %s991, 4
        %s993 = scalar_lea.vmem %s14, %s992
        // Predicated region
        $region101: #{my_model_forward.8} parent=75 // pred_check
          %p994 = pneg %p351
        $region102: #{my_model_forward.8} parent=75 // pred_check_branch
          %996 = sbr.rel (%p994) target = $region104
        $region103: #{my_model_forward.8} parent=75 // pred_region
          _
        $region104: #{my_model_forward.8} parent=75 // pred_fallthru
          _
      $region76: #{my_model_forward.8} parent=5 // pred_fallthru
        _
      %p997 = scmp.le.s32.totalorder 2, %s24
      // Predicated region
      $region105: #{my_model_forward.8} parent=5 // pred_check
        %p998 = pneg %p997
      $region106: #{my_model_forward.8} parent=5 // pred_check_branch
        %1000 = sbr.rel (%p998) target = $region108
      $region107: #{my_model_forward.8} parent=5 // pred_region
        %s1001 = ssub.s32 %s24, 2
        // Predicated region
        $region109: #{my_model_forward.8} parent=107 // pred_check
          %p1002 = pneg %p357
        $region110: #{my_model_forward.8} parent=107 // pred_check_branch
          %1004 = sbr.rel (%p1002) target = $region112
        $region111: #{my_model_forward.8} parent=107 // pred_region
          %p1005 = scmp.lt.s32.totalorder %s30, 1
          %s1006 = scalar_select %p1005, %s30, 1
          %s1007 = smul.addr %s1006, 4
          %s1008 = scalar_lea.vmem %s14, %s1007
        $region112: #{my_model_forward.8} parent=107 // pred_fallthru
          _
      $region108: #{my_model_forward.8} parent=5 // pred_fallthru
        _
    $region6: #{my_model_forward.8} parent=1 // loop_footer
      %s28 = sadd.s32 1, %s24
    $region7: #{my_model_forward.8} parent=1 // loop_footer_branch
      %23 = sbr.rel target = $region3
    $region8: #{my_model_forward.8} parent=1 // loop_exit
      _
    %1009 = vsyncpa [#allocation3], 1
    %s1010 = scalar_lea.sflag [#allocation3], 1
    %1011 = vsyncpa %s1010, 1
    %1012 = vsyncpa [#allocation5], 1
    %1013 = vsyncpa [#allocation8], 1
    %1014 = vsyncpa [#allocation11], 1

// kernel: my_model_forward.6
$region0: #{my_model_forward.6}
  #allocation0 [shape = 'u32[]', space=smem, size = 0x4, offset = 0x4, fixed_abs, tag = 'smem constant byte address 0x4 - core index']
  #allocation1 [shape = 'u32[72,128]{1,0:T(1,128)}', space=vmem, size = 0x9000, scoped, tag = 'internal scratch']
  %s0 = inlined_call_operand.vmem [shape: bf16[2,8,32], index: 0, kind: input, shape index: {}]
  %s1 = inlined_call_operand.vmem [shape: f32[2,1,8], index: 1, kind: input, shape index: {}]
  %s2 = inlined_call_operand.vmem [shape: bf16[2,32,48], index: 2, kind: input, shape index: {}]
  %s3 = inlined_call_operand.vmem [shape: f32[2,1,48], index: 3, kind: input, shape index: {}]
  %s4 = inlined_call_operand.vmem [shape: bf16[32,32], index: 4, kind: input, shape index: {}]
  %s5 = inlined_call_operand.vmem [shape: f32[1,32], index: 5, kind: input, shape index: {}]
  %s6 = inlined_call_operand.vmem [shape: f32[1,32], index: 6, kind: input, shape index: {}]
  %s7 = inlined_call_operand.vmem [shape: f32[1,32], index: 7, kind: input, shape index: {}]
  %s8 = inlined_call_operand.vmem [shape: bf16[32,64], index: 8, kind: input, shape index: {}]
  %s9 = inlined_call_operand.vmem [shape: f32[1,64], index: 9, kind: input, shape index: {}]
  %s10 = inlined_call_operand.vmem [shape: bf16[64,32], index: 10, kind: input, shape index: {}]
  %s11 = inlined_call_operand.vmem [shape: f32[1,32], index: 11, kind: input, shape index: {}]
  %s12 = inlined_call_operand.vmem [shape: f32[1,32], index: 12, kind: input, shape index: {}]
  %s13 = inlined_call_operand.vmem [shape: f32[1,32], index: 13, kind: input, shape index: {}]
  %s14 = inlined_call_operand.vmem [shape: bf16[2,8,32], index: 14, kind: output, shape index: {}]
  %s15 = sld [smem:[#allocation0]]
  $region89: #{my_model_forward.6} parent=0
    _
  %s17 = ssub.s32 1, %s15
  %s18 = scalar_select 0, %s17, %s15
  loop: start=0, step=1, limit=4
  $region2: #{my_model_forward.6} parent=0 // loop_pre_header
    _
  $region3: #{my_model_forward.6} parent=0 // loop_header
    %s20 = sphi 0, %s24
    %p21 = scmp.ge.s32.totalorder %s20, 4
    %s30 = sphi 0, %s32
    %s33 = sphi 0, %s30
    %s34 = sphi 0, %s33
    %s50 = sphi 0, %s34
    %s56 = sphi 0, %s58
    %s59 = sphi 0, %s56
    %s60 = sphi 0, %s59
    %s76 = sphi 0, %s60
    %s80 = sphi 0, %s80
    %s82 = sphi 0, %s80
    %s83 = sphi 0, %s82
    %s97 = sphi 0, %s83
    %s101 = sphi 0, %s101
    %s103 = sphi 0, %s101
    %s104 = sphi 0, %s103
    %s118 = sphi 0, %s104
    %s122 = sphi 0, %s122
    %s124 = sphi 0, %s122
    %s125 = sphi 0, %s124
    %s139 = sphi 0, %s125
    %s143 = sphi 0, %s143
    %s145 = sphi 0, %s143
    %s146 = sphi 0, %s145
    %s160 = sphi 0, %s146
    %s164 = sphi 0, %s164
    %s166 = sphi 0, %s164
    %s167 = sphi 0, %s166
    %s181 = sphi 0, %s167
    %s185 = sphi 0, %s185
    %s187 = sphi 0, %s185
    %s188 = sphi 0, %s187
    %s202 = sphi 0, %s188
    %s206 = sphi 0, %s206
    %s208 = sphi 0, %s206
    %s209 = sphi 0, %s208
    %s223 = sphi 0, %s209
    %s227 = sphi 0, %s227
    %s229 = sphi 0, %s227
    %s230 = sphi 0, %s229
    %s244 = sphi 0, %s230
    %s248 = sphi 0, %s248
    %s250 = sphi 0, %s248
    %s251 = sphi 0, %s250
    %s265 = sphi 0, %s251
    %s269 = sphi 0, %s269
    %s271 = sphi 0, %s269
    %s272 = sphi 0, %s271
    %s286 = sphi 0, %s272
    %s290 = sphi 0, %s290
    %s292 = sphi 0, %s290
    %s293 = sphi 0, %s292
    %s307 = sphi 0, %s293
    %s311 = sphi 0, %s311
    %s313 = sphi 0, %s311
    %s314 = sphi 0, %s313
    %s328 = sphi 0, %s314
    %s334 = sphi 0, %s336
    %s337 = sphi 0, %s334
    %s338 = sphi 0, %s337
    %s354 = sphi 0, %s338
  $region4: #{my_model_forward.6} parent=0 // loop_header_branch
    %23 = sbr.rel (%p21) target = $region8
  $region5: #{my_model_forward.6} parent=0 // loop_body
    %s25 = ssub.s32 %s20, 1
    %s26 = ssub.s32 %s20, 2
    %s27 = sadd.s32 %s20, 1
    %s28 = ssub.s32 %s20, %s27
    %p29 = scmp.eq.s32.totalorder %s28, 0
    %s31 = sadd.s32 %s30, 1
    %s32 = scalar_select %p29, %s30, %s31
    %p35 = pneg %p29
    %p36 = scmp.eq.s32.totalorder %s20, 1
    %p37 = por %p35, %p36
    %p38 = scmp.ne.s32.totalorder %s30, %s33
    %p39 = scmp.eq.s32.totalorder %s20, 0
    %p40 = por %p38, %p39
    %p41 = scmp.ne.s32.totalorder %s30, %s33
    %p42 = scmp.eq.s32.totalorder %s25, 1
    %p43 = por %p41, %p42
    %p44 = scmp.ne.s32.totalorder %s33, %s34
    %p45 = scmp.eq.s32.totalorder %s25, 0
    %p46 = por %p44, %p45
    %p47 = scmp.ne.s32.totalorder %s33, %s34
    %p48 = scmp.eq.s32.totalorder %s26, 1
    %p49 = por %p47, %p48
    %p51 = scmp.ne.s32.totalorder %s34, %s50
    %p52 = scmp.eq.s32.totalorder %s26, 0
    %p53 = por %p51, %p52
    %s54 = ssub.s32 %s20, %s27
    %p55 = scmp.eq.s32.totalorder %s54, 0
    %s57 = sadd.s32 %s56, 1
    %s58 = scalar_select %p55, %s56, %s57
    %p61 = pneg %p55
    %p62 = scmp.eq.s32.totalorder %s20, 1
    %p63 = por %p61, %p62
    %p64 = scmp.ne.s32.totalorder %s56, %s59
    %p65 = scmp.eq.s32.totalorder %s20, 0
    %p66 = por %p64, %p65
    %p67 = scmp.ne.s32.totalorder %s56, %s59
    %p68 = scmp.eq.s32.totalorder %s25, 1
    %p69 = por %p67, %p68
    %p70 = scmp.ne.s32.totalorder %s59, %s60
    %p71 = scmp.eq.s32.totalorder %s25, 0
    %p72 = por %p70, %p71
    %p73 = scmp.ne.s32.totalorder %s59, %s60
    %p74 = scmp.eq.s32.totalorder %s26, 1
    %p75 = por %p73, %p74
    %p77 = scmp.ne.s32.totalorder %s60, %s76
    %p78 = scmp.eq.s32.totalorder %s26, 0
    %p79 = por %p77, %p78
    %s81 = sadd.s32 %s80, 1
    %p84 = scmp.eq.s32.totalorder %s20, 1
    %p85 = scmp.ne.s32.totalorder %s80, %s82
    %p86 = scmp.eq.s32.totalorder %s20, 0
    %p87 = por %p85, %p86
    %p88 = scmp.ne.s32.totalorder %s80, %s82
    %p89 = scmp.eq.s32.totalorder %s25, 1
    %p90 = por %p88, %p89
    %p91 = scmp.ne.s32.totalorder %s82, %s83
    %p92 = scmp.eq.s32.totalorder %s25, 0
    %p93 = por %p91, %p92
    %p94 = scmp.ne.s32.totalorder %s82, %s83
    %p95 = scmp.eq.s32.totalorder %s26, 1
    %p96 = por %p94, %p95
    %p98 = scmp.ne.s32.totalorder %s83, %s97
    %p99 = scmp.eq.s32.totalorder %s26, 0
    %p100 = por %p98, %p99
    %s102 = sadd.s32 %s101, 1
    %p105 = scmp.eq.s32.totalorder %s20, 1
    %p106 = scmp.ne.s32.totalorder %s101, %s103
    %p107 = scmp.eq.s32.totalorder %s20, 0
    %p108 = por %p106, %p107
    %p109 = scmp.ne.s32.totalorder %s101, %s103
    %p110 = scmp.eq.s32.totalorder %s25, 1
    %p111 = por %p109, %p110
    %p112 = scmp.ne.s32.totalorder %s103, %s104
    %p113 = scmp.eq.s32.totalorder %s25, 0
    %p114 = por %p112, %p113
    %p115 = scmp.ne.s32.totalorder %s103, %s104
    %p116 = scmp.eq.s32.totalorder %s26, 1
    %p117 = por %p115, %p116
    %p119 = scmp.ne.s32.totalorder %s104, %s118
    %p120 = scmp.eq.s32.totalorder %s26, 0
    %p121 = por %p119, %p120
    %s123 = sadd.s32 %s122, 1
    %p126 = scmp.eq.s32.totalorder %s20, 1
    %p127 = scmp.ne.s32.totalorder %s122, %s124
    %p128 = scmp.eq.s32.totalorder %s20, 0
    %p129 = por %p127, %p128
    %p130 = scmp.ne.s32.totalorder %s122, %s124
    %p131 = scmp.eq.s32.totalorder %s25, 1
    %p132 = por %p130, %p131
    %p133 = scmp.ne.s32.totalorder %s124, %s125
    %p134 = scmp.eq.s32.totalorder %s25, 0
    %p135 = por %p133, %p134
    %p136 = scmp.ne.s32.totalorder %s124, %s125
    %p137 = scmp.eq.s32.totalorder %s26, 1
    %p138 = por %p136, %p137
    %p140 = scmp.ne.s32.totalorder %s125, %s139
    %p141 = scmp.eq.s32.totalorder %s26, 0
    %p142 = por %p140, %p141
    %s144 = sadd.s32 %s143, 1
    %p147 = scmp.eq.s32.totalorder %s20, 1
    %p148 = scmp.ne.s32.totalorder %s143, %s145
    %p149 = scmp.eq.s32.totalorder %s20, 0
    %p150 = por %p148, %p149
    %p151 = scmp.ne.s32.totalorder %s143, %s145
    %p152 = scmp.eq.s32.totalorder %s25, 1
    %p153 = por %p151, %p152
    %p154 = scmp.ne.s32.totalorder %s145, %s146
    %p155 = scmp.eq.s32.totalorder %s25, 0
    %p156 = por %p154, %p155
    %p157 = scmp.ne.s32.totalorder %s145, %s146
    %p158 = scmp.eq.s32.totalorder %s26, 1
    %p159 = por %p157, %p158
    %p161 = scmp.ne.s32.totalorder %s146, %s160
    %p162 = scmp.eq.s32.totalorder %s26, 0
    %p163 = por %p161, %p162
    %s165 = sadd.s32 %s164, 1
    %p168 = scmp.eq.s32.totalorder %s20, 1
    %p169 = scmp.ne.s32.totalorder %s164, %s166
    %p170 = scmp.eq.s32.totalorder %s20, 0
    %p171 = por %p169, %p170
    %p172 = scmp.ne.s32.totalorder %s164, %s166
    %p173 = scmp.eq.s32.totalorder %s25, 1
    %p174 = por %p172, %p173
    %p175 = scmp.ne.s32.totalorder %s166, %s167
    %p176 = scmp.eq.s32.totalorder %s25, 0
    %p177 = por %p175, %p176
    %p178 = scmp.ne.s32.totalorder %s166, %s167
    %p179 = scmp.eq.s32.totalorder %s26, 1
    %p180 = por %p178, %p179
    %p182 = scmp.ne.s32.totalorder %s167, %s181
    %p183 = scmp.eq.s32.totalorder %s26, 0
    %p184 = por %p182, %p183
    %s186 = sadd.s32 %s185, 1
    %p189 = scmp.eq.s32.totalorder %s20, 1
    %p190 = scmp.ne.s32.totalorder %s185, %s187
    %p191 = scmp.eq.s32.totalorder %s20, 0
    %p192 = por %p190, %p191
    %p193 = scmp.ne.s32.totalorder %s185, %s187
    %p194 = scmp.eq.s32.totalorder %s25, 1
    %p195 = por %p193, %p194
    %p196 = scmp.ne.s32.totalorder %s187, %s188
    %p197 = scmp.eq.s32.totalorder %s25, 0
    %p198 = por %p196, %p197
    %p199 = scmp.ne.s32.totalorder %s187, %s188
    %p200 = scmp.eq.s32.totalorder %s26, 1
    %p201 = por %p199, %p200
    %p203 = scmp.ne.s32.totalorder %s188, %s202
    %p204 = scmp.eq.s32.totalorder %s26, 0
    %p205 = por %p203, %p204
    %s207 = sadd.s32 %s206, 1
    %p210 = scmp.eq.s32.totalorder %s20, 1
    %p211 = scmp.ne.s32.totalorder %s206, %s208
    %p212 = scmp.eq.s32.totalorder %s20, 0
    %p213 = por %p211, %p212
    %p214 = scmp.ne.s32.totalorder %s206, %s208
    %p215 = scmp.eq.s32.totalorder %s25, 1
    %p216 = por %p214, %p215
    %p217 = scmp.ne.s32.totalorder %s208, %s209
    %p218 = scmp.eq.s32.totalorder %s25, 0
    %p219 = por %p217, %p218
    %p220 = scmp.ne.s32.totalorder %s208, %s209
    %p221 = scmp.eq.s32.totalorder %s26, 1
    %p222 = por %p220, %p221
    %p224 = scmp.ne.s32.totalorder %s209, %s223
    %p225 = scmp.eq.s32.totalorder %s26, 0
    %p226 = por %p224, %p225
    %s228 = sadd.s32 %s227, 1
    %p231 = scmp.eq.s32.totalorder %s20, 1
    %p232 = scmp.ne.s32.totalorder %s227, %s229
    %p233 = scmp.eq.s32.totalorder %s20, 0
    %p234 = por %p232, %p233
    %p235 = scmp.ne.s32.totalorder %s227, %s229
    %p236 = scmp.eq.s32.totalorder %s25, 1
    %p237 = por %p235, %p236
    %p238 = scmp.ne.s32.totalorder %s229, %s230
    %p239 = scmp.eq.s32.totalorder %s25, 0
    %p240 = por %p238, %p239
    %p241 = scmp.ne.s32.totalorder %s229, %s230
    %p242 = scmp.eq.s32.totalorder %s26, 1
    %p243 = por %p241, %p242
    %p245 = scmp.ne.s32.totalorder %s230, %s244
    %p246 = scmp.eq.s32.totalorder %s26, 0
    %p247 = por %p245, %p246
    %s249 = sadd.s32 %s248, 1
    %p252 = scmp.eq.s32.totalorder %s20, 1
    %p253 = scmp.ne.s32.totalorder %s248, %s250
    %p254 = scmp.eq.s32.totalorder %s20, 0
    %p255 = por %p253, %p254
    %p256 = scmp.ne.s32.totalorder %s248, %s250
    %p257 = scmp.eq.s32.totalorder %s25, 1
    %p258 = por %p256, %p257
    %p259 = scmp.ne.s32.totalorder %s250, %s251
    %p260 = scmp.eq.s32.totalorder %s25, 0
    %p261 = por %p259, %p260
    %p262 = scmp.ne.s32.totalorder %s250, %s251
    %p263 = scmp.eq.s32.totalorder %s26, 1
    %p264 = por %p262, %p263
    %p266 = scmp.ne.s32.totalorder %s251, %s265
    %p267 = scmp.eq.s32.totalorder %s26, 0
    %p268 = por %p266, %p267
    %s270 = sadd.s32 %s269, 1
    %p273 = scmp.eq.s32.totalorder %s20, 1
    %p274 = scmp.ne.s32.totalorder %s269, %s271
    %p275 = scmp.eq.s32.totalorder %s20, 0
    %p276 = por %p274, %p275
    %p277 = scmp.ne.s32.totalorder %s269, %s271
    %p278 = scmp.eq.s32.totalorder %s25, 1
    %p279 = por %p277, %p278
    %p280 = scmp.ne.s32.totalorder %s271, %s272
    %p281 = scmp.eq.s32.totalorder %s25, 0
    %p282 = por %p280, %p281
    %p283 = scmp.ne.s32.totalorder %s271, %s272
    %p284 = scmp.eq.s32.totalorder %s26, 1
    %p285 = por %p283, %p284
    %p287 = scmp.ne.s32.totalorder %s272, %s286
    %p288 = scmp.eq.s32.totalorder %s26, 0
    %p289 = por %p287, %p288
    %s291 = sadd.s32 %s290, 1
    %p294 = scmp.eq.s32.totalorder %s20, 1
    %p295 = scmp.ne.s32.totalorder %s290, %s292
    %p296 = scmp.eq.s32.totalorder %s20, 0
    %p297 = por %p295, %p296
    %p298 = scmp.ne.s32.totalorder %s290, %s292
    %p299 = scmp.eq.s32.totalorder %s25, 1
    %p300 = por %p298, %p299
    %p301 = scmp.ne.s32.totalorder %s292, %s293
    %p302 = scmp.eq.s32.totalorder %s25, 0
    %p303 = por %p301, %p302
    %p304 = scmp.ne.s32.totalorder %s292, %s293
    %p305 = scmp.eq.s32.totalorder %s26, 1
    %p306 = por %p304, %p305
    %p308 = scmp.ne.s32.totalorder %s293, %s307
    %p309 = scmp.eq.s32.totalorder %s26, 0
    %p310 = por %p308, %p309
    %s312 = sadd.s32 %s311, 1
    %p315 = scmp.eq.s32.totalorder %s20, 1
    %p316 = scmp.ne.s32.totalorder %s311, %s313
    %p317 = scmp.eq.s32.totalorder %s20, 0
    %p318 = por %p316, %p317
    %p319 = scmp.ne.s32.totalorder %s311, %s313
    %p320 = scmp.eq.s32.totalorder %s25, 1
    %p321 = por %p319, %p320
    %p322 = scmp.ne.s32.totalorder %s313, %s314
    %p323 = scmp.eq.s32.totalorder %s25, 0
    %p324 = por %p322, %p323
    %p325 = scmp.ne.s32.totalorder %s313, %s314
    %p326 = scmp.eq.s32.totalorder %s26, 1
    %p327 = por %p325, %p326
    %p329 = scmp.ne.s32.totalorder %s314, %s328
    %p330 = scmp.eq.s32.totalorder %s26, 0
    %p331 = por %p329, %p330
    %s332 = ssub.s32 %s20, %s27
    %p333 = scmp.eq.s32.totalorder %s332, 0
    %s335 = sadd.s32 %s334, 1
    %s336 = scalar_select %p333, %s334, %s335
    %p339 = pneg %p333
    %p340 = scmp.eq.s32.totalorder %s20, 1
    %p341 = por %p339, %p340
    %p342 = scmp.ne.s32.totalorder %s334, %s337
    %p343 = scmp.eq.s32.totalorder %s20, 0
    %p344 = por %p342, %p343
    %p345 = scmp.ne.s32.totalorder %s334, %s337
    %p346 = scmp.eq.s32.totalorder %s25, 1
    %p347 = por %p345, %p346
    %p348 = scmp.ne.s32.totalorder %s337, %s338
    %p349 = scmp.eq.s32.totalorder %s25, 0
    %p350 = por %p348, %p349
    %p351 = scmp.ne.s32.totalorder %s337, %s338
    %p352 = scmp.eq.s32.totalorder %s26, 1
    %p353 = por %p351, %p352
    %p355 = scmp.ne.s32.totalorder %s338, %s354
    %p356 = scmp.eq.s32.totalorder %s26, 0
    %p357 = por %p355, %p356
    %p358 = scmp.le.s32.totalorder 1, %s20
    %p359 = scmp.lt.s32.totalorder %s20, 3
    %p360 = pnand %p358, %p359
    %p361 = pneg %p360
    // Predicated region
    $region9: #{my_model_forward.6} parent=5 // pred_check
      _
    $region10: #{my_model_forward.6} parent=5 // pred_check_branch
      %363 = sbr.rel (%p360) target = $region12
    $region11: #{my_model_forward.6} parent=5 // pred_region
      %s364 = ssub.s32 %s20, 1
      // Predicated region
      $region13: #{my_model_forward.6} parent=11 // pred_check
        %p365 = pneg %p93
      $region14: #{my_model_forward.6} parent=11 // pred_check_branch
        %367 = sbr.rel (%p365) target = $region16
      $region15: #{my_model_forward.6} parent=11 // pred_region
        _
      $region16: #{my_model_forward.6} parent=11 // pred_fallthru
        _
      // Predicated region
      $region17: #{my_model_forward.6} parent=11 // pred_check
        %p368 = pneg %p114
      $region18: #{my_model_forward.6} parent=11 // pred_check_branch
        %370 = sbr.rel (%p368) target = $region20
      $region19: #{my_model_forward.6} parent=11 // pred_region
        _
      $region20: #{my_model_forward.6} parent=11 // pred_fallthru
        _
      // Predicated region
      $region21: #{my_model_forward.6} parent=11 // pred_check
        %p371 = pneg %p135
      $region22: #{my_model_forward.6} parent=11 // pred_check_branch
        %373 = sbr.rel (%p371) target = $region24
      $region23: #{my_model_forward.6} parent=11 // pred_region
        _
      $region24: #{my_model_forward.6} parent=11 // pred_fallthru
        _
      // Predicated region
      $region25: #{my_model_forward.6} parent=11 // pred_check
        %p374 = pneg %p156
      $region26: #{my_model_forward.6} parent=11 // pred_check_branch
        %376 = sbr.rel (%p374) target = $region28
      $region27: #{my_model_forward.6} parent=11 // pred_region
        _
      $region28: #{my_model_forward.6} parent=11 // pred_fallthru
        _
      // Predicated region
      $region29: #{my_model_forward.6} parent=11 // pred_check
        %p377 = pneg %p177
      $region30: #{my_model_forward.6} parent=11 // pred_check_branch
        %379 = sbr.rel (%p377) target = $region32
      $region31: #{my_model_forward.6} parent=11 // pred_region
        _
      $region32: #{my_model_forward.6} parent=11 // pred_fallthru
        _
      // Predicated region
      $region33: #{my_model_forward.6} parent=11 // pred_check
        %p380 = pneg %p198
      $region34: #{my_model_forward.6} parent=11 // pred_check_branch
        %382 = sbr.rel (%p380) target = $region36
      $region35: #{my_model_forward.6} parent=11 // pred_region
        _
      $region36: #{my_model_forward.6} parent=11 // pred_fallthru
        _
      // Predicated region
      $region37: #{my_model_forward.6} parent=11 // pred_check
        %p383 = pneg %p219
      $region38: #{my_model_forward.6} parent=11 // pred_check_branch
        %385 = sbr.rel (%p383) target = $region40
      $region39: #{my_model_forward.6} parent=11 // pred_region
        _
      $region40: #{my_model_forward.6} parent=11 // pred_fallthru
        _
      // Predicated region
      $region41: #{my_model_forward.6} parent=11 // pred_check
        %p386 = pneg %p240
      $region42: #{my_model_forward.6} parent=11 // pred_check_branch
        %388 = sbr.rel (%p386) target = $region44
      $region43: #{my_model_forward.6} parent=11 // pred_region
        _
      $region44: #{my_model_forward.6} parent=11 // pred_fallthru
        _
      // Predicated region
      $region45: #{my_model_forward.6} parent=11 // pred_check
        %p389 = pneg %p261
      $region46: #{my_model_forward.6} parent=11 // pred_check_branch
        %391 = sbr.rel (%p389) target = $region48
      $region47: #{my_model_forward.6} parent=11 // pred_region
        _
      $region48: #{my_model_forward.6} parent=11 // pred_fallthru
        _
      // Predicated region
      $region49: #{my_model_forward.6} parent=11 // pred_check
        %p392 = pneg %p282
      $region50: #{my_model_forward.6} parent=11 // pred_check_branch
        %394 = sbr.rel (%p392) target = $region52
      $region51: #{my_model_forward.6} parent=11 // pred_region
        _
      $region52: #{my_model_forward.6} parent=11 // pred_fallthru
        _
      // Predicated region
      $region53: #{my_model_forward.6} parent=11 // pred_check
        %p395 = pneg %p303
      $region54: #{my_model_forward.6} parent=11 // pred_check_branch
        %397 = sbr.rel (%p395) target = $region56
      $region55: #{my_model_forward.6} parent=11 // pred_region
        _
      $region56: #{my_model_forward.6} parent=11 // pred_fallthru
        _
      // Predicated region
      $region57: #{my_model_forward.6} parent=11 // pred_check
        %p398 = pneg %p324
      $region58: #{my_model_forward.6} parent=11 // pred_check_branch
        %400 = sbr.rel (%p398) target = $region60
      $region59: #{my_model_forward.6} parent=11 // pred_region
        _
      $region60: #{my_model_forward.6} parent=11 // pred_fallthru
        _
    $region12: #{my_model_forward.6} parent=5 // pred_fallthru
      _
    %p401 = scmp.lt.s32.totalorder %s20, 2
    // Predicated region
    $region61: #{my_model_forward.6} parent=5 // pred_check
      %p402 = pneg %p401
    $region62: #{my_model_forward.6} parent=5 // pred_check_branch
      %404 = sbr.rel (%p402) target = $region64
    $region63: #{my_model_forward.6} parent=5 // pred_region
      // Predicated region
      $region65: #{my_model_forward.6} parent=63 // pred_check
        %p405 = pneg %p40
      $region66: #{my_model_forward.6} parent=63 // pred_check_branch
        %407 = sbr.rel (%p405) target = $region68
      $region67: #{my_model_forward.6} parent=63 // pred_region
        %p408 = scmp.lt.s32.totalorder %s20, 1
        %s409 = scalar_select %p408, %s20, 1
        %s410 = smul.addr %s409, 4
        %s411 = scalar_lea.vmem %s0, %s410
      $region68: #{my_model_forward.6} parent=63 // pred_fallthru
        _
      // Predicated region
      $region69: #{my_model_forward.6} parent=63 // pred_check
        %p412 = pneg %p66
      $region70: #{my_model_forward.6} parent=63 // pred_check_branch
        %414 = sbr.rel (%p412) target = $region72
      $region71: #{my_model_forward.6} parent=63 // pred_region
        %p415 = scmp.lt.s32.totalorder %s20, 1
        %s416 = scalar_select %p415, %s20, 1
        %s417 = scalar_lea.vmem %s1, %s416
      $region72: #{my_model_forward.6} parent=63 // pred_fallthru
        _
    $region64: #{my_model_forward.6} parent=5 // pred_fallthru
      _
    %p418 = scmp.le.s32.totalorder 1, %s20
    %p419 = scmp.lt.s32.totalorder %s20, 3
    %p420 = pnand %p418, %p419
    %p421 = pneg %p420
    // Predicated region
    $region73: #{my_model_forward.6} parent=5 // pred_check
      _
    $region74: #{my_model_forward.6} parent=5 // pred_check_branch
      %423 = sbr.rel (%p420) target = $region76
    $region75: #{my_model_forward.6} parent=5 // pred_region
      %s424 = ssub.s32 %s20, 1
      %p425 = scmp.lt.s32.totalorder %s25, 1
      %s426 = scalar_select %p425, %s25, 1
      %s427 = smul.addr %s426, 4
      %s428 = scalar_lea.vmem %s0, %s427
      %p429 = pneg %p46
      %p430 = pneg %p43
      %p431 = scmp.lt.s32.totalorder %s25, 1
      %s432 = scalar_select %p431, %s25, 1
      %s433 = scalar_lea.vmem %s1, %s432
      %p434 = pneg %p72
      %p435 = pneg %p69
      %p436 = pneg %p93
      %p437 = pneg %p90
      %p438 = pneg %p114
      %p439 = pneg %p111
      %p440 = pneg %p135
      %p441 = pneg %p132
      %p442 = pneg %p156
      %p443 = pneg %p153
      %p444 = pneg %p177
      %p445 = pneg %p174
      %p446 = pneg %p198
      %p447 = pneg %p195
      %p448 = pneg %p219
      %p449 = pneg %p216
      %p450 = pneg %p240
      %p451 = pneg %p237
      %p452 = pneg %p261
      %p453 = pneg %p258
      %p454 = pneg %p282
      %p455 = pneg %p279
      %p456 = pneg %p303
      %p457 = pneg %p300
      %p458 = pneg %p324
      %p459 = pneg %p321
      %p460 = pneg %p350
      %p461 = pneg %p347
      %p462 = scmp.lt.s32.totalorder %s25, 1
      %s463 = scalar_select %p462, %s25, 1
      %s464 = smul.addr %s463, 4
      %s465 = scalar_lea.vmem %s14, %s464
      %p466 = scmp.lt.s32.totalorder %s25, 1
      %s467 = scalar_select %p466, %s25, 1
      %s468 = smul.addr %s467, 4
      %s469 = scalar_lea.vmem %s0, %s468
      %p470 = scmp.lt.s32.totalorder %s25, 1
      %s471 = scalar_select %p470, %s25, 1
      %s472 = scalar_lea.vmem %s1, %s471
      %p473 = scmp.lt.s32.totalorder %s25, 1
      %s474 = scalar_select %p473, %s25, 1
      %s475 = smul.addr %s474, 4
      %s476 = scalar_lea.vmem %s14, %s475
      %v478 = vld [vmem:[%s469] sm:$0xf]
      %v479 = vunpack.c.l.bf16 %v478
      %v480 = vld [vmem:[%s472] sm:$0x1]
      %v481 = vsub.f32 1.0, %v480
      %v482 = vmul.f32 %v481, -1e+09
      %v483 = vld [vmem:[%s2] sm:$0xf]
      %v484 = vld [vmem:[%s2 + $0x4] sm:$0xf]
      %v485 = vld [vmem:[%s2 + $0x8] sm:$0xf]
      %v486 = vld [vmem:[%s2 + $0xc] sm:$0xf]
      %v487 = vld [vmem:[%s3] sm:$0x1]
      %v489 = vperm.slane %v487, 0
      %v495 = vunpack.c.l.b16 %v483
      %v496 = vunpack.c.l.b16 %v484
      %v497 = vunpack.c.l.b16 %v485
      %v498 = vunpack.c.l.b16 %v486
      %v499 = vpack.c.b16 %v496, %v495
      %v500 = vpack.c.b16 %v498, %v497
      %vm503 = vcmask 261120
      %v505 = vsel %vm503, %v478, 0
      %507 = vmatpush.bf16.msra.mxu0 0
      %508 = vmatpush.bf16.msra.mxu0 0
      %509 = vmatpush.bf16.msra.mxu0 0
      %510 = vmatpush.bf16.msra.mxu0 0
      %511 = vmatpush.bf16.msra.mxu0 0
      %512 = vmatpush.bf16.msra.mxu0 0
      %513 = vmatpush.bf16.msra.mxu0 %v500
      %514 = vmatpush.bf16.msra.mxu0 %v499
      %515 = vmatmul.bf16.gmra.mxu0 %v505
      %v516 = vpop.f32.mrf.mxu0
      %v517 = vadd.f32 %v489, %v516
      %v518 = vpop.f32.mrf.mxu0
      %519 = vdwg.mxu0
      %v520 = vpack.c.bf16 %v517, %v517
      %v522 = vunpack.c.l.b16 %v520
      %v523 = vpack.c.b16 %v522, %v522
      %524 = vrot.lane.b32.xlu0 %v523, 112
      %v525 = vpop.permute.xlu0 %524
      %vm526 = vcmask 130048
      %v528 = vsel %vm526, %v520, 0
      %v531 = vsel %vm526, %v525, 0
      %533 = vmatpush.bf16.xpose.msra.mxu0 0
      %534 = vmatpush.bf16.xpose.msra.mxu0 0
      %535 = vmatpush.bf16.xpose.msra.mxu0 0
      %536 = vmatpush.bf16.xpose.msra.mxu0 0
      %537 = vmatpush.bf16.xpose.msra.mxu0 0
      %538 = vmatpush.bf16.xpose.msra.mxu0 0
      %539 = vmatpush.bf16.xpose.msra.mxu0 0
      %540 = vmatpush.bf16.xpose.msra.mxu0 %v531
      %541 = vmatmul.bf16.gmra.mxu0 %v528
      %v542 = vpop.f32.mrf.mxu0
      %v543 = vadd.f32 0.0, %v542
      %v544 = vpop.f32.mrf.mxu0
      %545 = vdwg.mxu0
      %v546 = vmul.f32 %v543, 0.25
      %v548 = vperm.slane %v482, 0
      %v550 = vadd.f32 %v546, %v548
      %vm551 = vcmask 64512
      %v552 = vsel %vm551, %v550, -inf
      %553 = vmax.xlane.f32.xlu0 %v552
      %v554 = vpop.xlane.xlu0 %553
      %v555 = vsub.f32 %v550, %v554
      %v556 = vmul.f32 %v555, 1.442695
      %v557 = vpow.pop %v556
      %v558 = vsel %vm551, %v557, 0.0
      %559 = vadd.xlane.f32.xlu0 %v558
      %v560 = vpop.xlane.xlu0 %559
      %v561 = vrcp.pop %v560
      %v562 = vmul.f32 %v557, %v561
      %v563 = vpack.c.bf16 %v562, %v562
      %564 = vrot.lane.b32.xlu0 %v523, 96
      %v565 = vpop.permute.xlu0 %564
      %v567 = vsel %vm551, %v563, 0
      %vm569 = vcmask 1043456
      %v571 = vsel %vm569, %v565, 0
      %573 = vmatpush.bf16.msra.mxu0 0
      %574 = vmatpush.bf16.msra.mxu0 0
      %575 = vmatpush.bf16.msra.mxu0 0
      %576 = vmatpush.bf16.msra.mxu0 0
      %577 = vmatpush.bf16.msra.mxu0 0
      %578 = vmatpush.bf16.msra.mxu0 0
      %579 = vmatpush.bf16.msra.mxu0 0
      %580 = vmatpush.bf16.msra.mxu0 %v571
      %581 = vmatmul.bf16.gmra.mxu0 %v567
      %v582 = vpop.f32.mrf.mxu0
      %v583 = vadd.f32 0.0, %v582
      %v584 = vpop.f32.mrf.mxu0
      %585 = vdwg.mxu0
      %v586 = vpack.c.bf16 %v583, %v583
      %s587 = scalar_lea.vmem %s2, 16
      %v588 = vld [vmem:[%s587] sm:$0xf]
      %v589 = vld [vmem:[%s587 + $0x4] sm:$0xf]
      %v590 = vld [vmem:[%s587 + $0x8] sm:$0xf]
      %v591 = vld [vmem:[%s587 + $0xc] sm:$0xf]
      %s592 = scalar_lea.vmem %s3, 1
      %v593 = vld [vmem:[%s592] sm:$0x1]
      %v595 = vperm.slane %v593, 0
      %v601 = vunpack.c.l.b16 %v588
      %v602 = vunpack.c.l.b16 %v589
      %v603 = vunpack.c.l.b16 %v590
      %v604 = vunpack.c.l.b16 %v591
      %v605 = vpack.c.b16 %v602, %v601
      %v606 = vpack.c.b16 %v604, %v603
      %609 = vmatpush.bf16.msra.mxu0 0
      %610 = vmatpush.bf16.msra.mxu0 0
      %611 = vmatpush.bf16.msra.mxu0 0
      %612 = vmatpush.bf16.msra.mxu0 0
      %613 = vmatpush.bf16.msra.mxu0 0
      %614 = vmatpush.bf16.msra.mxu0 0
      %615 = vmatpush.bf16.msra.mxu0 %v606
      %616 = vmatpush.bf16.msra.mxu0 %v605
      %617 = vmatmul.bf16.gmra.mxu0 %v505
      %v618 = vpop.f32.mrf.mxu0
      %v619 = vadd.f32 %v595, %v618
      %v620 = vpop.f32.mrf.mxu0
      %621 = vdwg.mxu0
      %v622 = vpack.c.bf16 %v619, %v619
      %v624 = vunpack.c.l.b16 %v622
      %v625 = vpack.c.b16 %v624, %v624
      %626 = vrot.lane.b32.xlu0 %v625, 112
      %v627 = vpop.permute.xlu0 %626
      %v629 = vsel %vm526, %v622, 0
      %v632 = vsel %vm526, %v627, 0
      %634 = vmatpush.bf16.xpose.msra.mxu0 0
      %635 = vmatpush.bf16.xpose.msra.mxu0 0
      %636 = vmatpush.bf16.xpose.msra.mxu0 0
      %637 = vmatpush.bf16.xpose.msra.mxu0 0
      %638 = vmatpush.bf16.xpose.msra.mxu0 0
      %639 = vmatpush.bf16.xpose.msra.mxu0 0
      %640 = vmatpush.bf16.xpose.msra.mxu0 0
      %641 = vmatpush.bf16.xpose.msra.mxu0 %v632
      %642 = vmatmul.bf16.gmra.mxu0 %v629
      %v643 = vpop.f32.mrf.mxu0
      %v644 = vadd.f32 0.0, %v643
      %v645 = vpop.f32.mrf.mxu0
      %646 = vdwg.mxu0
      %v647 = vmul.f32 %v644, 0.25
      %v648 = vadd.f32 %v647, %v548
      %v649 = vsel %vm551, %v648, -inf
      %650 = vmax.xlane.f32.xlu0 %v649
      %v651 = vpop.xlane.xlu0 %650
      %v652 = vsub.f32 %v648, %v651
      %v653 = vmul.f32 %v652, 1.442695
      %v654 = vpow.pop %v653
      %v655 = vsel %vm551, %v654, 0.0
      %656 = vadd.xlane.f32.xlu0 %v655
      %v657 = vpop.xlane.xlu0 %656
      %v658 = vrcp.pop %v657
      %v659 = vmul.f32 %v654, %v658
      %v660 = vpack.c.bf16 %v659, %v659
      %661 = vrot.lane.b32.xlu0 %v625, 96
      %v662 = vpop.permute.xlu0 %661
      %v664 = vsel %vm551, %v660, 0
      %v667 = vsel %vm569, %v662, 0
      %669 = vmatpush.bf16.msra.mxu0 0
      %670 = vmatpush.bf16.msra.mxu0 0
      %671 = vmatpush.bf16.msra.mxu0 0
      %672 = vmatpush.bf16.msra.mxu0 0
      %673 = vmatpush.bf16.msra.mxu0 0
      %674 = vmatpush.bf16.msra.mxu0 0
      %675 = vmatpush.bf16.msra.mxu0 0
      %676 = vmatpush.bf16.msra.mxu0 %v667
      %677 = vmatmul.bf16.gmra.mxu0 %v664
      %v678 = vpop.f32.mrf.mxu0
      %v679 = vadd.f32 0.0, %v678
      %v680 = vpop.f32.mrf.mxu0
      %681 = vdwg.mxu0
      %v682 = vpack.c.bf16 %v679, %v679
      %v684 = vunpack.c.l.b16 %v682
      %v685 = vpack.c.b16 %v684, %v684
      %686 = vrot.lane.b32.xlu0 %v685, 16
      %v687 = vpop.permute.xlu0 %686
      %v690 = vsel %vm526, %v586, %v687
      %v691 = vld [vmem:[%s4] sm:$0xf]
      %v692 = vld [vmem:[%s4 + $0x4] sm:$0xf]
      %v693 = vld [vmem:[%s4 + $0x8] sm:$0xf]
      %v694 = vld [vmem:[%s4 + $0xc] sm:$0xf]
      %v695 = vld [vmem:[%s5] sm:$0x1]
      %v697 = vperm.slane %v695, 0
      %v703 = vunpack.c.l.b16 %v691
      %v704 = vunpack.c.l.b16 %v692
      %v705 = vunpack.c.l.b16 %v693
      %v706 = vunpack.c.l.b16 %v694
      %v707 = vpack.c.b16 %v704, %v703
      %v708 = vpack.c.b16 %v706, %v705
      %v711 = vsel %vm503, %v690, 0
      %713 = vmatpush.bf16.msra.mxu0 0
      %714 = vmatpush.bf16.msra.mxu0 0
      %715 = vmatpush.bf16.msra.mxu0 0
      %716 = vmatpush.bf16.msra.mxu0 0
      %717 = vmatpush.bf16.msra.mxu0 0
      %718 = vmatpush.bf16.msra.mxu0 0
      %719 = vmatpush.bf16.msra.mxu0 %v708
      %720 = vmatpush.bf16.msra.mxu0 %v707
      %721 = vmatmul.bf16.gmra.mxu0 %v711
      %v722 = vpop.f32.mrf.mxu0
      %v723 = vadd.f32 %v697, %v722
      %v724 = vpop.f32.mrf.mxu0
      %725 = vdwg.mxu0
      %v726 = vadd.f32 %v723, %v479
      %v727 = vld [vmem:[%s6] sm:$0x1]
      %v728 = vld [vmem:[%s7] sm:$0x1]
      %v729 = vsel %vm503, %v726, 0.0
      %730 = vadd.xlane.f32.xlu0 %v729
      %v731 = vpop.xlane.xlu0 %730
      %v732 = vrcp.pop 32.0
      %v733 = vmul.f32 32.0, %v732
      %v734 = vsub.f32 1.0, %v733
      %v735 = vmul.f32 %v732, %v734
      %v736 = vadd.f32 %v732, %v735
      %vm737 = vweird.f32 %v732
      %v738 = vsel %vm737, %v732, %v736
      %v739 = vmul.f32 %v731, %v738
      %v740 = vsub.f32 %v726, %v739
      %v741 = vmul.f32 %v740, %v740
      %v742 = vsel %vm503, %v741, 0.0
      %743 = vadd.xlane.f32.xlu0 %v742
      %v744 = vpop.xlane.xlu0 %743
      %v745 = vmul.f32 %v744, %v738
      %v746 = vadd.f32 %v745, 1e-12
      %v747 = vrsqrt.pop %v746
      %v748 = vmul.f32 %v747, %v746
      %v749 = vmul.f32 %v748, %v747
      %v750 = vmul.f32 0.5, %v749
      %v751 = vsub.f32 1.5, %v750
      %v752 = vmul.f32 %v747, %v751
      %vm753 = vweird.f32 %v746
      %vm754 = vweird.f32 %v747
      %vm755 = vmor %vm753, %vm754
      %v756 = vsel %vm755, %v747, %v752
      %v757 = vmul.f32 %v740, %v756
      %v759 = vperm.slane %v727, 0
      %v761 = vmul.f32 %v757, %v759
      %v763 = vperm.slane %v728, 0
      %v765 = vadd.f32 %v761, %v763
      %v766 = vpack.c.bf16 %v765, %v765
      %v767 = vld [vmem:[%s8] sm:$0xf]
      %v768 = vld [vmem:[%s8 + $0x4] sm:$0xf]
      %v769 = vld [vmem:[%s8 + $0x8] sm:$0xf]
      %v770 = vld [vmem:[%s8 + $0xc] sm:$0xf]
      %v771 = vld [vmem:[%s9] sm:$0x1]
      %v773 = vperm.slane %v771, 0
      %v779 = vunpack.c.l.b16 %v767
      %v780 = vunpack.c.l.b16 %v768
      %v781 = vunpack.c.l.b16 %v769
      %v782 = vunpack.c.l.b16 %v770
      %v783 = vpack.c.b16 %v780, %v779
      %v784 = vpack.c.b16 %v782, %v781
      %v788 = vsel %vm503, %v766, 0
      %790 = vmatpush.bf16.msra.mxu0 0
      %791 = vmatpush.bf16.msra.mxu0 0
      %792 = vmatpush.bf16.msra.mxu0 0
      %793 = vmatpush.bf16.msra.mxu0 0
      %794 = vmatpush.bf16.msra.mxu0 0
      %795 = vmatpush.bf16.msra.mxu0 0
      %796 = vmatpush.bf16.msra.mxu0 %v784
      %797 = vmatpush.bf16.msra.mxu0 %v783
      %798 = vmatmul.bf16.gmra.mxu0 %v788
      %v799 = vpop.f32.mrf.mxu0
      %v800 = vadd.f32 %v773, %v799
      %v801 = vpop.f32.mrf.mxu0
      %802 = vdwg.mxu0
      %v803 = vmul.f32 %v800, %v800
      %v804 = vmul.f32 %v800, %v803
      %v805 = vmul.f32 %v804, 0.044715
      %v806 = vadd.f32 %v800, %v805
      %v807 = vmul.f32 %v806, 0.7978846
      %v808 = vtanh.pop %v807
      %v809 = vadd.f32 %v808, 1.0
      %v810 = vmul.f32 %v809, 0.5
      %v811 = vmul.f32 %v800, %v810
      %v812 = vpack.c.bf16 %v811, %v811
      %v813 = vld [vmem:[%s10] sm:$0xf]
      %v814 = vld [vmem:[%s10 + $0x4] sm:$0xf]
      %v815 = vld [vmem:[%s10 + $0x8] sm:$0xf]
      %v816 = vld [vmem:[%s10 + $0xc] sm:$0xf]
      %v817 = vld [vmem:[%s10 + $0x10] sm:$0xf]
      %v818 = vld [vmem:[%s10 + $0x14] sm:$0xf]
      %v819 = vld [vmem:[%s10 + $0x18] sm:$0xf]
      %v820 = vld [vmem:[%s10 + $0x1c] sm:$0xf]
      %v821 = vld [vmem:[%s11] sm:$0x1]
      %v823 = vperm.slane %v821, 0
      %v833 = vunpack.c.l.b16 %v813
      %v834 = vunpack.c.l.b16 %v814
      %v835 = vunpack.c.l.b16 %v815
      %v836 = vunpack.c.l.b16 %v816
      %v837 = vunpack.c.l.b16 %v817
      %v838 = vunpack.c.l.b16 %v818
      %v839 = vunpack.c.l.b16 %v819
      %v840 = vunpack.c.l.b16 %v820
      %v841 = vpack.c.b16 %v834, %v833
      %v842 = vpack.c.b16 %v836, %v835
      %v843 = vpack.c.b16 %v838, %v837
      %v844 = vpack.c.b16 %v840, %v839
      %vm849 = vcmask 523264
      %v851 = vsel %vm849, %v812, 0
      %853 = vmatpush.bf16.msra.mxu0 0
      %854 = vmatpush.bf16.msra.mxu0 0
      %855 = vmatpush.bf16.msra.mxu0 0
      %856 = vmatpush.bf16.msra.mxu0 0
      %857 = vmatpush.bf16.msra.mxu0 %v844
      %858 = vmatpush.bf16.msra.mxu0 %v843
      %859 = vmatpush.bf16.msra.mxu0 %v842
      %860 = vmatpush.bf16.msra.mxu0 %v841
      %861 = vmatmul.bf16.gmra.mxu0 %v851
      %v862 = vpop.f32.mrf.mxu0
      %v863 = vadd.f32 %v823, %v862
      %v864 = vpop.f32.mrf.mxu0
      %865 = vdwg.mxu0
      %v866 = vadd.f32 %v863, %v765
      %v867 = vld [vmem:[%s12] sm:$0x1]
      %v868 = vld [vmem:[%s13] sm:$0x1]
      %v869 = vsel %vm503, %v866, 0.0
      %870 = vadd.xlane.f32.xlu0 %v869
      %v871 = vpop.xlane.xlu0 %870
      %v872 = vmul.f32 %v871, %v738
      %v873 = vsub.f32 %v866, %v872
      %v874 = vmul.f32 %v873, %v873
      %v875 = vsel %vm503, %v874, 0.0
      %876 = vadd.xlane.f32.xlu0 %v875
      %v877 = vpop.xlane.xlu0 %876
      %v878 = vmul.f32 %v877, %v738
      %v879 = vadd.f32 %v878, 1e-12
      %v880 = vrsqrt.pop %v879
      %v881 = vmul.f32 %v880, %v879
      %v882 = vmul.f32 %v881, %v880
      %v883 = vmul.f32 0.5, %v882
      %v884 = vsub.f32 1.5, %v883
      %v885 = vmul.f32 %v880, %v884
      %vm886 = vweird.f32 %v879
      %vm887 = vweird.f32 %v880
      %vm888 = vmor %vm886, %vm887
      %v889 = vsel %vm888, %v880, %v885
      %v890 = vmul.f32 %v873, %v889
      %v892 = vperm.slane %v867, 0
      %v894 = vmul.f32 %v890, %v892
      %v896 = vperm.slane %v868, 0
      %v898 = vadd.f32 %v894, %v896
      %v899 = vpack.c.bf16 %v898, %v898
      %vm900 = vcmask 257024
      %901 = vst.msk [vmem:[%s476] sm:$0xf] %vm900, %v899
      %p902 = scmp.lt.s32.totalorder %s25, 1
      %s903 = scalar_select %p902, %s25, 1
      %s904 = smul.addr %s903, 4
      %s905 = scalar_lea.vmem %s14, %s904
      // Predicated region
      $region77: #{my_model_forward.6} parent=75 // pred_check
        %p906 = pneg %p347
      $region78: #{my_model_forward.6} parent=75 // pred_check_branch
        %908 = sbr.rel (%p906) target = $region80
      $region79: #{my_model_forward.6} parent=75 // pred_region
        _
      $region80: #{my_model_forward.6} parent=75 // pred_fallthru
        _
    $region76: #{my_model_forward.6} parent=5 // pred_fallthru
      _
    %p909 = scmp.le.s32.totalorder 2, %s20
    // Predicated region
    $region81: #{my_model_forward.6} parent=5 // pred_check
      %p910 = pneg %p909
    $region82: #{my_model_forward.6} parent=5 // pred_check_branch
      %912 = sbr.rel (%p910) target = $region84
    $region83: #{my_model_forward.6} parent=5 // pred_region
      %s913 = ssub.s32 %s20, 2
      // Predicated region
      $region85: #{my_model_forward.6} parent=83 // pred_check
        %p914 = pneg %p353
      $region86: #{my_model_forward.6} parent=83 // pred_check_branch
        %916 = sbr.rel (%p914) target = $region88
      $region87: #{my_model_forward.6} parent=83 // pred_region
        %p917 = scmp.lt.s32.totalorder %s26, 1
        %s918 = scalar_select %p917, %s26, 1
        %s919 = smul.addr %s918, 4
        %s920 = scalar_lea.vmem %s14, %s919
      $region88: #{my_model_forward.6} parent=83 // pred_fallthru
        _
    $region84: #{my_model_forward.6} parent=5 // pred_fallthru
      _
  $region6: #{my_model_forward.6} parent=0 // loop_footer
    %s24 = sadd.s32 1, %s20
  $region7: #{my_model_forward.6} parent=0 // loop_footer_branch
    %19 = sbr.rel target = $region3
  $region8: #{my_model_forward.6} parent=0 // loop_exit
    _

// kernel: my_model_forward.9
$region0: #{my_model_forward.9}
  #allocation0 [shape = 'u32[]', space=smem, size = 0x4, offset = 0x4, fixed_abs, tag = 'smem constant byte address 0x4 - core index']
  #allocation1 [shape = 'u32[72,128]{1,0:T(1,128)}', space=vmem, size = 0x9000, scoped, tag = 'internal scratch']
  %s0 = inlined_call_operand.vmem [shape: bf16[2,8,32], index: 0, kind: input, shape index: {}]
  %s1 = inlined_call_operand.vmem [shape: f32[2,1,8], index: 1, kind: input, shape index: {}]
  %s2 = inlined_call_operand.vmem [shape: bf16[2,32,48], index: 2, kind: input, shape index: {}]
  %s3 = inlined_call_operand.vmem [shape: f32[2,1,48], index: 3, kind: input, shape index: {}]
  %s4 = inlined_call_operand.vmem [shape: bf16[32,32], index: 4, kind: input, shape index: {}]
  %s5 = inlined_call_operand.hbm [shape: f32[1,32], index: 5, kind: input, shape index: {}]
  %s6 = inlined_call_operand.hbm [shape: f32[1,32], index: 6, kind: input, shape index: {}]
  %s7 = inlined_call_operand.hbm [shape: f32[1,32], index: 7, kind: input, shape index: {}]
  %s8 = inlined_call_operand.vmem [shape: bf16[32,64], index: 8, kind: input, shape index: {}]
  %s9 = inlined_call_operand.hbm [shape: f32[1,64], index: 9, kind: input, shape index: {}]
  %s10 = inlined_call_operand.vmem [shape: bf16[64,32], index: 10, kind: input, shape index: {}]
  %s11 = inlined_call_operand.hbm [shape: f32[1,32], index: 11, kind: input, shape index: {}]
  %s12 = inlined_call_operand.hbm [shape: f32[1,32], index: 12, kind: input, shape index: {}]
  %s13 = inlined_call_operand.hbm [shape: f32[1,32], index: 13, kind: input, shape index: {}]
  %s14 = inlined_call_operand.vmem [shape: bf16[2,8,32], index: 14, kind: output, shape index: {}]
  %s15 = sld [smem:[#allocation0]]
  $region117: #{my_model_forward.9} parent=0
    _
  %s17 = ssub.s32 1, %s15
  %s18 = scalar_select 0, %s17, %s15
  $region1: #{my_model_forward.9} parent=0
    #allocation2 [shape = 'u8[512]{0}', space=vmem, size = 0x400, scoped, tag = 'input window, operand 5, single buffered']
    #allocation3 [shape = 's32[2]{0}', space=sflag, size = 0x8, scoped, tag = 'scoped memory for my_model_forward.9']
    #allocation4 [shape = 'u8[512]{0}', space=vmem, size = 0x400, scoped, tag = 'input window, operand 6, single buffered']
    #allocation5 [shape = 's32[1]{0}', space=sflag, size = 0x4, scoped, tag = 'scoped memory for my_model_forward.9']
    #allocation6 [shape = 'u8[512]{0}', space=vmem, size = 0x400, scoped, tag = 'input window, operand 7, single buffered']
    #allocation7 [shape = 'u8[512]{0}', space=vmem, size = 0x400, scoped, tag = 'input window, operand 9, single buffered']
    #allocation8 [shape = 's32[1]{0}', space=sflag, size = 0x4, scoped, tag = 'scoped memory for my_model_forward.9']
    #allocation9 [shape = 'u8[512]{0}', space=vmem, size = 0x400, scoped, tag = 'input window, operand 11, single buffered']
    #allocation10 [shape = 'u8[512]{0}', space=vmem, size = 0x400, scoped, tag = 'input window, operand 12, single buffered']
    #allocation11 [shape = 's32[1]{0}', space=sflag, size = 0x4, scoped, tag = 'scoped memory for my_model_forward.9']
    #allocation12 [shape = 'u8[512]{0}', space=vmem, size = 0x400, scoped, tag = 'input window, operand 13, single buffered']
    %19 = vsyncpa [#allocation3], 0
    %20 = vsyncpa [#allocation5], 0
    %21 = vsyncpa [#allocation8], 0
    %22 = vsyncpa [#allocation11], 0
    loop: start=0, step=1, limit=4
    $region2: #{my_model_forward.9} parent=1 // loop_pre_header
      _
    $region3: #{my_model_forward.9} parent=1 // loop_header
      %s24 = sphi 0, %s28
      %p25 = scmp.ge.s32.totalorder %s24, 4
      %s34 = sphi 0, %s36
      %s37 = sphi 0, %s34
      %s38 = sphi 0, %s37
      %s54 = sphi 0, %s38
      %s60 = sphi 0, %s62
      %s63 = sphi 0, %s60
      %s64 = sphi 0, %s63
      %s80 = sphi 0, %s64
      %s84 = sphi 0, %s84
      %s86 = sphi 0, %s84
      %s87 = sphi 0, %s86
      %s101 = sphi 0, %s87
      %s105 = sphi 0, %s105
      %s107 = sphi 0, %s105
      %s108 = sphi 0, %s107
      %s122 = sphi 0, %s108
      %s126 = sphi 0, %s126
      %s128 = sphi 0, %s126
      %s129 = sphi 0, %s128
      %s143 = sphi 0, %s129
      %s147 = sphi 0, %s147
      %s149 = sphi 0, %s147
      %s150 = sphi 0, %s149
      %s164 = sphi 0, %s150
      %s168 = sphi 0, %s168
      %s170 = sphi 0, %s168
      %s171 = sphi 0, %s170
      %s185 = sphi 0, %s171
      %s189 = sphi 0, %s189
      %s191 = sphi 0, %s189
      %s192 = sphi 0, %s191
      %s206 = sphi 0, %s192
      %s210 = sphi 0, %s210
      %s212 = sphi 0, %s210
      %s213 = sphi 0, %s212
      %s227 = sphi 0, %s213
      %s231 = sphi 0, %s231
      %s233 = sphi 0, %s231
      %s234 = sphi 0, %s233
      %s248 = sphi 0, %s234
      %s252 = sphi 0, %s252
      %s254 = sphi 0, %s252
      %s255 = sphi 0, %s254
      %s269 = sphi 0, %s255
      %s273 = sphi 0, %s273
      %s275 = sphi 0, %s273
      %s276 = sphi 0, %s275
      %s290 = sphi 0, %s276
      %s294 = sphi 0, %s294
      %s296 = sphi 0, %s294
      %s297 = sphi 0, %s296
      %s311 = sphi 0, %s297
      %s315 = sphi 0, %s315
      %s317 = sphi 0, %s315
      %s318 = sphi 0, %s317
      %s332 = sphi 0, %s318
      %s338 = sphi 0, %s340
      %s341 = sphi 0, %s338
      %s342 = sphi 0, %s341
      %s358 = sphi 0, %s342
    $region4: #{my_model_forward.9} parent=1 // loop_header_branch
      %27 = sbr.rel (%p25) target = $region8
    $region5: #{my_model_forward.9} parent=1 // loop_body
      %s29 = ssub.s32 %s24, 1
      %s30 = ssub.s32 %s24, 2
      %s31 = sadd.s32 %s24, 1
      %s32 = ssub.s32 %s24, %s31
      %p33 = scmp.eq.s32.totalorder %s32, 0
      %s35 = sadd.s32 %s34, 1
      %s36 = scalar_select %p33, %s34, %s35
      %p39 = pneg %p33
      %p40 = scmp.eq.s32.totalorder %s24, 1
      %p41 = por %p39, %p40
      %p42 = scmp.ne.s32.totalorder %s34, %s37
      %p43 = scmp.eq.s32.totalorder %s24, 0
      %p44 = por %p42, %p43
      %p45 = scmp.ne.s32.totalorder %s34, %s37
      %p46 = scmp.eq.s32.totalorder %s29, 1
      %p47 = por %p45, %p46
      %p48 = scmp.ne.s32.totalorder %s37, %s38
      %p49 = scmp.eq.s32.totalorder %s29, 0
      %p50 = por %p48, %p49
      %p51 = scmp.ne.s32.totalorder %s37, %s38
      %p52 = scmp.eq.s32.totalorder %s30, 1
      %p53 = por %p51, %p52
      %p55 = scmp.ne.s32.totalorder %s38, %s54
      %p56 = scmp.eq.s32.totalorder %s30, 0
      %p57 = por %p55, %p56
      %s58 = ssub.s32 %s24, %s31
      %p59 = scmp.eq.s32.totalorder %s58, 0
      %s61 = sadd.s32 %s60, 1
      %s62 = scalar_select %p59, %s60, %s61
      %p65 = pneg %p59
      %p66 = scmp.eq.s32.totalorder %s24, 1
      %p67 = por %p65, %p66
      %p68 = scmp.ne.s32.totalorder %s60, %s63
      %p69 = scmp.eq.s32.totalorder %s24, 0
      %p70 = por %p68, %p69
      %p71 = scmp.ne.s32.totalorder %s60, %s63
      %p72 = scmp.eq.s32.totalorder %s29, 1
      %p73 = por %p71, %p72
      %p74 = scmp.ne.s32.totalorder %s63, %s64
      %p75 = scmp.eq.s32.totalorder %s29, 0
      %p76 = por %p74, %p75
      %p77 = scmp.ne.s32.totalorder %s63, %s64
      %p78 = scmp.eq.s32.totalorder %s30, 1
      %p79 = por %p77, %p78
      %p81 = scmp.ne.s32.totalorder %s64, %s80
      %p82 = scmp.eq.s32.totalorder %s30, 0
      %p83 = por %p81, %p82
      %s85 = sadd.s32 %s84, 1
      %p88 = scmp.eq.s32.totalorder %s24, 1
      %p89 = scmp.ne.s32.totalorder %s84, %s86
      %p90 = scmp.eq.s32.totalorder %s24, 0
      %p91 = por %p89, %p90
      %p92 = scmp.ne.s32.totalorder %s84, %s86
      %p93 = scmp.eq.s32.totalorder %s29, 1
      %p94 = por %p92, %p93
      %p95 = scmp.ne.s32.totalorder %s86, %s87
      %p96 = scmp.eq.s32.totalorder %s29, 0
      %p97 = por %p95, %p96
      %p98 = scmp.ne.s32.totalorder %s86, %s87
      %p99 = scmp.eq.s32.totalorder %s30, 1
      %p100 = por %p98, %p99
      %p102 = scmp.ne.s32.totalorder %s87, %s101
      %p103 = scmp.eq.s32.totalorder %s30, 0
      %p104 = por %p102, %p103
      %s106 = sadd.s32 %s105, 1
      %p109 = scmp.eq.s32.totalorder %s24, 1
      %p110 = scmp.ne.s32.totalorder %s105, %s107
      %p111 = scmp.eq.s32.totalorder %s24, 0
      %p112 = por %p110, %p111
      %p113 = scmp.ne.s32.totalorder %s105, %s107
      %p114 = scmp.eq.s32.totalorder %s29, 1
      %p115 = por %p113, %p114
      %p116 = scmp.ne.s32.totalorder %s107, %s108
      %p117 = scmp.eq.s32.totalorder %s29, 0
      %p118 = por %p116, %p117
      %p119 = scmp.ne.s32.totalorder %s107, %s108
      %p120 = scmp.eq.s32.totalorder %s30, 1
      %p121 = por %p119, %p120
      %p123 = scmp.ne.s32.totalorder %s108, %s122
      %p124 = scmp.eq.s32.totalorder %s30, 0
      %p125 = por %p123, %p124
      %s127 = sadd.s32 %s126, 1
      %p130 = scmp.eq.s32.totalorder %s24, 1
      %p131 = scmp.ne.s32.totalorder %s126, %s128
      %p132 = scmp.eq.s32.totalorder %s24, 0
      %p133 = por %p131, %p132
      %p134 = scmp.ne.s32.totalorder %s126, %s128
      %p135 = scmp.eq.s32.totalorder %s29, 1
      %p136 = por %p134, %p135
      %p137 = scmp.ne.s32.totalorder %s128, %s129
      %p138 = scmp.eq.s32.totalorder %s29, 0
      %p139 = por %p137, %p138
      %p140 = scmp.ne.s32.totalorder %s128, %s129
      %p141 = scmp.eq.s32.totalorder %s30, 1
      %p142 = por %p140, %p141
      %p144 = scmp.ne.s32.totalorder %s129, %s143
      %p145 = scmp.eq.s32.totalorder %s30, 0
      %p146 = por %p144, %p145
      %s148 = sadd.s32 %s147, 1
      %p151 = scmp.eq.s32.totalorder %s24, 1
      %p152 = scmp.ne.s32.totalorder %s147, %s149
      %p153 = scmp.eq.s32.totalorder %s24, 0
      %p154 = por %p152, %p153
      %p155 = scmp.ne.s32.totalorder %s147, %s149
      %p156 = scmp.eq.s32.totalorder %s29, 1
      %p157 = por %p155, %p156
      %p158 = scmp.ne.s32.totalorder %s149, %s150
      %p159 = scmp.eq.s32.totalorder %s29, 0
      %p160 = por %p158, %p159
      %p161 = scmp.ne.s32.totalorder %s149, %s150
      %p162 = scmp.eq.s32.totalorder %s30, 1
      %p163 = por %p161, %p162
      %p165 = scmp.ne.s32.totalorder %s150, %s164
      %p166 = scmp.eq.s32.totalorder %s30, 0
      %p167 = por %p165, %p166
      %s169 = sadd.s32 %s168, 1
      %p172 = scmp.eq.s32.totalorder %s24, 1
      %p173 = scmp.ne.s32.totalorder %s168, %s170
      %p174 = scmp.eq.s32.totalorder %s24, 0
      %p175 = por %p173, %p174
      %p176 = scmp.ne.s32.totalorder %s168, %s170
      %p177 = scmp.eq.s32.totalorder %s29, 1
      %p178 = por %p176, %p177
      %p179 = scmp.ne.s32.totalorder %s170, %s171
      %p180 = scmp.eq.s32.totalorder %s29, 0
      %p181 = por %p179, %p180
      %p182 = scmp.ne.s32.totalorder %s170, %s171
      %p183 = scmp.eq.s32.totalorder %s30, 1
      %p184 = por %p182, %p183
      %p186 = scmp.ne.s32.totalorder %s171, %s185
      %p187 = scmp.eq.s32.totalorder %s30, 0
      %p188 = por %p186, %p187
      %s190 = sadd.s32 %s189, 1
      %p193 = scmp.eq.s32.totalorder %s24, 1
      %p194 = scmp.ne.s32.totalorder %s189, %s191
      %p195 = scmp.eq.s32.totalorder %s24, 0
      %p196 = por %p194, %p195
      %p197 = scmp.ne.s32.totalorder %s189, %s191
      %p198 = scmp.eq.s32.totalorder %s29, 1
      %p199 = por %p197, %p198
      %p200 = scmp.ne.s32.totalorder %s191, %s192
      %p201 = scmp.eq.s32.totalorder %s29, 0
      %p202 = por %p200, %p201
      %p203 = scmp.ne.s32.totalorder %s191, %s192
      %p204 = scmp.eq.s32.totalorder %s30, 1
      %p205 = por %p203, %p204
      %p207 = scmp.ne.s32.totalorder %s192, %s206
      %p208 = scmp.eq.s32.totalorder %s30, 0
      %p209 = por %p207, %p208
      %s211 = sadd.s32 %s210, 1
      %p214 = scmp.eq.s32.totalorder %s24, 1
      %p215 = scmp.ne.s32.totalorder %s210, %s212
      %p216 = scmp.eq.s32.totalorder %s24, 0
      %p217 = por %p215, %p216
      %p218 = scmp.ne.s32.totalorder %s210, %s212
      %p219 = scmp.eq.s32.totalorder %s29, 1
      %p220 = por %p218, %p219
      %p221 = scmp.ne.s32.totalorder %s212, %s213
      %p222 = scmp.eq.s32.totalorder %s29, 0
      %p223 = por %p221, %p222
      %p224 = scmp.ne.s32.totalorder %s212, %s213
      %p225 = scmp.eq.s32.totalorder %s30, 1
      %p226 = por %p224, %p225
      %p228 = scmp.ne.s32.totalorder %s213, %s227
      %p229 = scmp.eq.s32.totalorder %s30, 0
      %p230 = por %p228, %p229
      %s232 = sadd.s32 %s231, 1
      %p235 = scmp.eq.s32.totalorder %s24, 1
      %p236 = scmp.ne.s32.totalorder %s231, %s233
      %p237 = scmp.eq.s32.totalorder %s24, 0
      %p238 = por %p236, %p237
      %p239 = scmp.ne.s32.totalorder %s231, %s233
      %p240 = scmp.eq.s32.totalorder %s29, 1
      %p241 = por %p239, %p240
      %p242 = scmp.ne.s32.totalorder %s233, %s234
      %p243 = scmp.eq.s32.totalorder %s29, 0
      %p244 = por %p242, %p243
      %p245 = scmp.ne.s32.totalorder %s233, %s234
      %p246 = scmp.eq.s32.totalorder %s30, 1
      %p247 = por %p245, %p246
      %p249 = scmp.ne.s32.totalorder %s234, %s248
      %p250 = scmp.eq.s32.totalorder %s30, 0
      %p251 = por %p249, %p250
      %s253 = sadd.s32 %s252, 1
      %p256 = scmp.eq.s32.totalorder %s24, 1
      %p257 = scmp.ne.s32.totalorder %s252, %s254
      %p258 = scmp.eq.s32.totalorder %s24, 0
      %p259 = por %p257, %p258
      %p260 = scmp.ne.s32.totalorder %s252, %s254
      %p261 = scmp.eq.s32.totalorder %s29, 1
      %p262 = por %p260, %p261
      %p263 = scmp.ne.s32.totalorder %s254, %s255
      %p264 = scmp.eq.s32.totalorder %s29, 0
      %p265 = por %p263, %p264
      %p266 = scmp.ne.s32.totalorder %s254, %s255
      %p267 = scmp.eq.s32.totalorder %s30, 1
      %p268 = por %p266, %p267
      %p270 = scmp.ne.s32.totalorder %s255, %s269
      %p271 = scmp.eq.s32.totalorder %s30, 0
      %p272 = por %p270, %p271
      %s274 = sadd.s32 %s273, 1
      %p277 = scmp.eq.s32.totalorder %s24, 1
      %p278 = scmp.ne.s32.totalorder %s273, %s275
      %p279 = scmp.eq.s32.totalorder %s24, 0
      %p280 = por %p278, %p279
      %p281 = scmp.ne.s32.totalorder %s273, %s275
      %p282 = scmp.eq.s32.totalorder %s29, 1
      %p283 = por %p281, %p282
      %p284 = scmp.ne.s32.totalorder %s275, %s276
      %p285 = scmp.eq.s32.totalorder %s29, 0
      %p286 = por %p284, %p285
      %p287 = scmp.ne.s32.totalorder %s275, %s276
      %p288 = scmp.eq.s32.totalorder %s30, 1
      %p289 = por %p287, %p288
      %p291 = scmp.ne.s32.totalorder %s276, %s290
      %p292 = scmp.eq.s32.totalorder %s30, 0
      %p293 = por %p291, %p292
      %s295 = sadd.s32 %s294, 1
      %p298 = scmp.eq.s32.totalorder %s24, 1
      %p299 = scmp.ne.s32.totalorder %s294, %s296
      %p300 = scmp.eq.s32.totalorder %s24, 0
      %p301 = por %p299, %p300
      %p302 = scmp.ne.s32.totalorder %s294, %s296
      %p303 = scmp.eq.s32.totalorder %s29, 1
      %p304 = por %p302, %p303
      %p305 = scmp.ne.s32.totalorder %s296, %s297
      %p306 = scmp.eq.s32.totalorder %s29, 0
      %p307 = por %p305, %p306
      %p308 = scmp.ne.s32.totalorder %s296, %s297
      %p309 = scmp.eq.s32.totalorder %s30, 1
      %p310 = por %p308, %p309
      %p312 = scmp.ne.s32.totalorder %s297, %s311
      %p313 = scmp.eq.s32.totalorder %s30, 0
      %p314 = por %p312, %p313
      %s316 = sadd.s32 %s315, 1
      %p319 = scmp.eq.s32.totalorder %s24, 1
      %p320 = scmp.ne.s32.totalorder %s315, %s317
      %p321 = scmp.eq.s32.totalorder %s24, 0
      %p322 = por %p320, %p321
      %p323 = scmp.ne.s32.totalorder %s315, %s317
      %p324 = scmp.eq.s32.totalorder %s29, 1
      %p325 = por %p323, %p324
      %p326 = scmp.ne.s32.totalorder %s317, %s318
      %p327 = scmp.eq.s32.totalorder %s29, 0
      %p328 = por %p326, %p327
      %p329 = scmp.ne.s32.totalorder %s317, %s318
      %p330 = scmp.eq.s32.totalorder %s30, 1
      %p331 = por %p329, %p330
      %p333 = scmp.ne.s32.totalorder %s318, %s332
      %p334 = scmp.eq.s32.totalorder %s30, 0
      %p335 = por %p333, %p334
      %s336 = ssub.s32 %s24, %s31
      %p337 = scmp.eq.s32.totalorder %s336, 0
      %s339 = sadd.s32 %s338, 1
      %s340 = scalar_select %p337, %s338, %s339
      %p343 = pneg %p337
      %p344 = scmp.eq.s32.totalorder %s24, 1
      %p345 = por %p343, %p344
      %p346 = scmp.ne.s32.totalorder %s338, %s341
      %p347 = scmp.eq.s32.totalorder %s24, 0
      %p348 = por %p346, %p347
      %p349 = scmp.ne.s32.totalorder %s338, %s341
      %p350 = scmp.eq.s32.totalorder %s29, 1
      %p351 = por %p349, %p350
      %p352 = scmp.ne.s32.totalorder %s341, %s342
      %p353 = scmp.eq.s32.totalorder %s29, 0
      %p354 = por %p352, %p353
      %p355 = scmp.ne.s32.totalorder %s341, %s342
      %p356 = scmp.eq.s32.totalorder %s30, 1
      %p357 = por %p355, %p356
      %p359 = scmp.ne.s32.totalorder %s342, %s358
      %p360 = scmp.eq.s32.totalorder %s30, 0
      %p361 = por %p359, %p360
      %p362 = scmp.le.s32.totalorder 1, %s24
      %p363 = scmp.lt.s32.totalorder %s24, 3
      %p364 = pnand %p362, %p363
      %p365 = pneg %p364
      // Predicated region
      $region9: #{my_model_forward.9} parent=5 // pred_check
        _
      $region10: #{my_model_forward.9} parent=5 // pred_check_branch
        %367 = sbr.rel (%p364) target = $region12
      $region11: #{my_model_forward.9} parent=5 // pred_region
        %s368 = ssub.s32 %s24, 1
        // Predicated region
        $region13: #{my_model_forward.9} parent=11 // pred_check
          %p369 = pneg %p97
        $region14: #{my_model_forward.9} parent=11 // pred_check_branch
          %371 = sbr.rel (%p369) target = $region16
        $region15: #{my_model_forward.9} parent=11 // pred_region
          _
        $region16: #{my_model_forward.9} parent=11 // pred_fallthru
          _
        // Predicated region
        $region17: #{my_model_forward.9} parent=11 // pred_check
          %p372 = pneg %p118
        $region18: #{my_model_forward.9} parent=11 // pred_check_branch
          %374 = sbr.rel (%p372) target = $region20
        $region19: #{my_model_forward.9} parent=11 // pred_region
          _
        $region20: #{my_model_forward.9} parent=11 // pred_fallthru
          _
        // Predicated region
        $region21: #{my_model_forward.9} parent=11 // pred_check
          %p375 = pneg %p139
        $region22: #{my_model_forward.9} parent=11 // pred_check_branch
          %377 = sbr.rel (%p375) target = $region24
        $region23: #{my_model_forward.9} parent=11 // pred_region
          _
        $region24: #{my_model_forward.9} parent=11 // pred_fallthru
          _
        // Predicated region
        $region25: #{my_model_forward.9} parent=11 // pred_check
          %p378 = pneg %p160
        $region26: #{my_model_forward.9} parent=11 // pred_check_branch
          %380 = sbr.rel (%p378) target = $region28
        $region27: #{my_model_forward.9} parent=11 // pred_region
          %382 = vsyncadd [#allocation3], 0
          %s384 = sshll.u32 %s5, 4
          %s385 = int_to_ptr.hbm [resolvable:$true] %s384
          %s386 = sshll.u32 [#allocation2], 4
          %s387 = int_to_ptr.vmem [resolvable:$true] %s386
          %389 = dma.hbm_to_vmem [thread:$0]  %s385, 16, %s387, [#allocation3]
        $region28: #{my_model_forward.9} parent=11 // pred_fallthru
          _
        // Predicated region
        $region29: #{my_model_forward.9} parent=11 // pred_check
          %p390 = pneg %p181
        $region30: #{my_model_forward.9} parent=11 // pred_check_branch
          %392 = sbr.rel (%p390) target = $region32
        $region31: #{my_model_forward.9} parent=11 // pred_region
          %394 = vsyncadd [#allocation5], 0
          %s396 = sshll.u32 %s6, 4
          %s397 = int_to_ptr.hbm [resolvable:$true] %s396
          %s398 = sshll.u32 [#allocation4], 4
          %s399 = int_to_ptr.vmem [resolvable:$true] %s398
          %401 = dma.hbm_to_vmem [thread:$0]  %s397, 16, %s399, [#allocation5]
        $region32: #{my_model_forward.9} parent=11 // pred_fallthru
          _
        // Predicated region
        $region33: #{my_model_forward.9} parent=11 // pred_check
          %p402 = pneg %p202
        $region34: #{my_model_forward.9} parent=11 // pred_check_branch
          %404 = sbr.rel (%p402) target = $region36
        $region35: #{my_model_forward.9} parent=11 // pred_region
          %406 = vsyncadd [#allocation5], 0
          %s408 = sshll.u32 %s7, 4
          %s409 = int_to_ptr.hbm [resolvable:$true] %s408
          %s410 = sshll.u32 [#allocation6], 4
          %s411 = int_to_ptr.vmem [resolvable:$true] %s410
          %413 = dma.hbm_to_vmem [thread:$0]  %s409, 16, %s411, [#allocation5]
        $region36: #{my_model_forward.9} parent=11 // pred_fallthru
          _
        // Predicated region
        $region37: #{my_model_forward.9} parent=11 // pred_check
          %p414 = pneg %p223
        $region38: #{my_model_forward.9} parent=11 // pred_check_branch
          %416 = sbr.rel (%p414) target = $region40
        $region39: #{my_model_forward.9} parent=11 // pred_region
          _
        $region40: #{my_model_forward.9} parent=11 // pred_fallthru
          _
        // Predicated region
        $region41: #{my_model_forward.9} parent=11 // pred_check
          %p417 = pneg %p244
        $region42: #{my_model_forward.9} parent=11 // pred_check_branch
          %419 = sbr.rel (%p417) target = $region44
        $region43: #{my_model_forward.9} parent=11 // pred_region
          %421 = vsyncadd [#allocation8], 0
          %s423 = sshll.u32 %s9, 4
          %s424 = int_to_ptr.hbm [resolvable:$true] %s423
          %s425 = sshll.u32 [#allocation7], 4
          %s426 = int_to_ptr.vmem [resolvable:$true] %s425
          %428 = dma.hbm_to_vmem [thread:$0]  %s424, 16, %s426, [#allocation8]
        $region44: #{my_model_forward.9} parent=11 // pred_fallthru
          _
        // Predicated region
        $region45: #{my_model_forward.9} parent=11 // pred_check
          %p429 = pneg %p265
        $region46: #{my_model_forward.9} parent=11 // pred_check_branch
          %431 = sbr.rel (%p429) target = $region48
        $region47: #{my_model_forward.9} parent=11 // pred_region
          _
        $region48: #{my_model_forward.9} parent=11 // pred_fallthru
          _
        // Predicated region
        $region49: #{my_model_forward.9} parent=11 // pred_check
          %p432 = pneg %p286
        $region50: #{my_model_forward.9} parent=11 // pred_check_branch
          %434 = sbr.rel (%p432) target = $region52
        $region51: #{my_model_forward.9} parent=11 // pred_region
          %436 = vsyncadd [#allocation8], 0
          %s438 = sshll.u32 %s11, 4
          %s439 = int_to_ptr.hbm [resolvable:$true] %s438
          %s440 = sshll.u32 [#allocation9], 4
          %s441 = int_to_ptr.vmem [resolvable:$true] %s440
          %443 = dma.hbm_to_vmem [thread:$0]  %s439, 16, %s441, [#allocation8]
        $region52: #{my_model_forward.9} parent=11 // pred_fallthru
          _
        // Predicated region
        $region53: #{my_model_forward.9} parent=11 // pred_check
          %p444 = pneg %p307
        $region54: #{my_model_forward.9} parent=11 // pred_check_branch
          %446 = sbr.rel (%p444) target = $region56
        $region55: #{my_model_forward.9} parent=11 // pred_region
          %448 = vsyncadd [#allocation11], 0
          %s450 = sshll.u32 %s12, 4
          %s451 = int_to_ptr.hbm [resolvable:$true] %s450
          %s452 = sshll.u32 [#allocation10], 4
          %s453 = int_to_ptr.vmem [resolvable:$true] %s452
          %455 = dma.hbm_to_vmem [thread:$0]  %s451, 16, %s453, [#allocation11]
        $region56: #{my_model_forward.9} parent=11 // pred_fallthru
          _
        // Predicated region
        $region57: #{my_model_forward.9} parent=11 // pred_check
          %p456 = pneg %p328
        $region58: #{my_model_forward.9} parent=11 // pred_check_branch
          %458 = sbr.rel (%p456) target = $region60
        $region59: #{my_model_forward.9} parent=11 // pred_region
          %460 = vsyncadd [#allocation11], 0
          %s462 = sshll.u32 %s13, 4
          %s463 = int_to_ptr.hbm [resolvable:$true] %s462
          %s464 = sshll.u32 [#allocation12], 4
          %s465 = int_to_ptr.vmem [resolvable:$true] %s464
          %467 = dma.hbm_to_vmem [thread:$0]  %s463, 16, %s465, [#allocation11]
        $region60: #{my_model_forward.9} parent=11 // pred_fallthru
          _
      $region12: #{my_model_forward.9} parent=5 // pred_fallthru
        _
      %p468 = scmp.lt.s32.totalorder %s24, 2
      // Predicated region
      $region61: #{my_model_forward.9} parent=5 // pred_check
        %p469 = pneg %p468
      $region62: #{my_model_forward.9} parent=5 // pred_check_branch
        %471 = sbr.rel (%p469) target = $region64
      $region63: #{my_model_forward.9} parent=5 // pred_region
        // Predicated region
        $region65: #{my_model_forward.9} parent=63 // pred_check
          %p472 = pneg %p44
        $region66: #{my_model_forward.9} parent=63 // pred_check_branch
          %474 = sbr.rel (%p472) target = $region68
        $region67: #{my_model_forward.9} parent=63 // pred_region
          %p475 = scmp.lt.s32.totalorder %s24, 1
          %s476 = scalar_select %p475, %s24, 1
          %s477 = smul.addr %s476, 4
          %s478 = scalar_lea.vmem %s0, %s477
        $region68: #{my_model_forward.9} parent=63 // pred_fallthru
          _
        // Predicated region
        $region69: #{my_model_forward.9} parent=63 // pred_check
          %p479 = pneg %p70
        $region70: #{my_model_forward.9} parent=63 // pred_check_branch
          %481 = sbr.rel (%p479) target = $region72
        $region71: #{my_model_forward.9} parent=63 // pred_region
          %p482 = scmp.lt.s32.totalorder %s24, 1
          %s483 = scalar_select %p482, %s24, 1
          %s484 = scalar_lea.vmem %s1, %s483
        $region72: #{my_model_forward.9} parent=63 // pred_fallthru
          _
      $region64: #{my_model_forward.9} parent=5 // pred_fallthru
        _
      %p485 = scmp.le.s32.totalorder 1, %s24
      %p486 = scmp.lt.s32.totalorder %s24, 3
      %p487 = pnand %p485, %p486
      %p488 = pneg %p487
      // Predicated region
      $region73: #{my_model_forward.9} parent=5 // pred_check
        _
      $region74: #{my_model_forward.9} parent=5 // pred_check_branch
        %490 = sbr.rel (%p487) target = $region76
      $region75: #{my_model_forward.9} parent=5 // pred_region
        %s491 = ssub.s32 %s24, 1
        // Predicated region
        $region77: #{my_model_forward.9} parent=75 // pred_check
          %p492 = pneg %p160
        $region78: #{my_model_forward.9} parent=75 // pred_check_branch
          %494 = sbr.rel (%p492) target = $region80
        $region79: #{my_model_forward.9} parent=75 // pred_region
          %496 = dma.done [#allocation3], 16
        $region80: #{my_model_forward.9} parent=75 // pred_fallthru
          _
        // Predicated region
        $region81: #{my_model_forward.9} parent=75 // pred_check
          %p497 = pneg %p181
        $region82: #{my_model_forward.9} parent=75 // pred_check_branch
          %499 = sbr.rel (%p497) target = $region84
        $region83: #{my_model_forward.9} parent=75 // pred_region
          %501 = dma.done [#allocation5], 16
        $region84: #{my_model_forward.9} parent=75 // pred_fallthru
          _
        // Predicated region
        $region85: #{my_model_forward.9} parent=75 // pred_check
          %p502 = pneg %p202
        $region86: #{my_model_forward.9} parent=75 // pred_check_branch
          %504 = sbr.rel (%p502) target = $region88
        $region87: #{my_model_forward.9} parent=75 // pred_region
          %506 = dma.done [#allocation5], 16
        $region88: #{my_model_forward.9} parent=75 // pred_fallthru
          _
        // Predicated region
        $region89: #{my_model_forward.9} parent=75 // pred_check
          %p507 = pneg %p244
        $region90: #{my_model_forward.9} parent=75 // pred_check_branch
          %509 = sbr.rel (%p507) target = $region92
        $region91: #{my_model_forward.9} parent=75 // pred_region
          %511 = dma.done [#allocation8], 16
        $region92: #{my_model_forward.9} parent=75 // pred_fallthru
          _
        // Predicated region
        $region93: #{my_model_forward.9} parent=75 // pred_check
          %p512 = pneg %p286
        $region94: #{my_model_forward.9} parent=75 // pred_check_branch
          %514 = sbr.rel (%p512) target = $region96
        $region95: #{my_model_forward.9} parent=75 // pred_region
          %516 = dma.done [#allocation8], 16
        $region96: #{my_model_forward.9} parent=75 // pred_fallthru
          _
        // Predicated region
        $region97: #{my_model_forward.9} parent=75 // pred_check
          %p517 = pneg %p307
        $region98: #{my_model_forward.9} parent=75 // pred_check_branch
          %519 = sbr.rel (%p517) target = $region100
        $region99: #{my_model_forward.9} parent=75 // pred_region
          %521 = dma.done [#allocation11], 16
        $region100: #{my_model_forward.9} parent=75 // pred_fallthru
          _
        // Predicated region
        $region101: #{my_model_forward.9} parent=75 // pred_check
          %p522 = pneg %p328
        $region102: #{my_model_forward.9} parent=75 // pred_check_branch
          %524 = sbr.rel (%p522) target = $region104
        $region103: #{my_model_forward.9} parent=75 // pred_region
          %526 = dma.done [#allocation11], 16
        $region104: #{my_model_forward.9} parent=75 // pred_fallthru
          _
        %p527 = scmp.lt.s32.totalorder %s29, 1
        %s528 = scalar_select %p527, %s29, 1
        %s529 = smul.addr %s528, 4
        %s530 = scalar_lea.vmem %s0, %s529
        %p531 = pneg %p50
        %p532 = pneg %p47
        %p533 = scmp.lt.s32.totalorder %s29, 1
        %s534 = scalar_select %p533, %s29, 1
        %s535 = scalar_lea.vmem %s1, %s534
        %p536 = pneg %p76
        %p537 = pneg %p73
        %p538 = pneg %p97
        %p539 = pneg %p94
        %p540 = pneg %p118
        %p541 = pneg %p115
        %p542 = pneg %p139
        %p543 = pneg %p136
        %p544 = pneg %p160
        %p545 = pneg %p157
        %p546 = pneg %p181
        %p547 = pneg %p178
        %p548 = pneg %p202
        %p549 = pneg %p199
        %p550 = pneg %p223
        %p551 = pneg %p220
        %p552 = pneg %p244
        %p553 = pneg %p241
        %p554 = pneg %p265
        %p555 = pneg %p262
        %p556 = pneg %p286
        %p557 = pneg %p283
        %p558 = pneg %p307
        %p559 = pneg %p304
        %p560 = pneg %p328
        %p561 = pneg %p325
        %p562 = pneg %p354
        %p563 = pneg %p351
        %p564 = scmp.lt.s32.totalorder %s29, 1
        %s565 = scalar_select %p564, %s29, 1
        %s566 = smul.addr %s565, 4
        %s567 = scalar_lea.vmem %s14, %s566
        %p568 = scmp.lt.s32.totalorder %s29, 1
        %s569 = scalar_select %p568, %s29, 1
        %s570 = smul.addr %s569, 4
        %s571 = scalar_lea.vmem %s0, %s570
        %p572 = scmp.lt.s32.totalorder %s29, 1
        %s573 = scalar_select %p572, %s29, 1
        %s574 = scalar_lea.vmem %s1, %s573
        %p575 = scmp.lt.s32.totalorder %s29, 1
        %s576 = scalar_select %p575, %s29, 1
        %s577 = smul.addr %s576, 4
        %s578 = scalar_lea.vmem %s14, %s577
        %v580 = vld [vmem:[%s571] sm:$0xf]
        %v581 = vunpack.c.l.bf16 %v580
        %v582 = vld [vmem:[%s574] sm:$0x1]
        %v583 = vsub.f32 1.0, %v582
        %v584 = vmul.f32 %v583, -1e+09
        %v585 = vld [vmem:[%s2] sm:$0xf]
        %v586 = vld [vmem:[%s2 + $0x4] sm:$0xf]
        %v587 = vld [vmem:[%s2 + $0x8] sm:$0xf]
        %v588 = vld [vmem:[%s2 + $0xc] sm:$0xf]
        %v589 = vld [vmem:[%s3] sm:$0x1]
        %v591 = vperm.slane %v589, 0
        %v597 = vunpack.c.l.b16 %v585
        %v598 = vunpack.c.l.b16 %v586
        %v599 = vunpack.c.l.b16 %v587
        %v600 = vunpack.c.l.b16 %v588
        %v601 = vpack.c.b16 %v598, %v597
        %v602 = vpack.c.b16 %v600, %v599
        %vm605 = vcmask 261120
        %v607 = vsel %vm605, %v580, 0
        %609 = vmatpush.bf16.msra.mxu0 0
        %610 = vmatpush.bf16.msra.mxu0 0
        %611 = vmatpush.bf16.msra.mxu0 0
        %612 = vmatpush.bf16.msra.mxu0 0
        %613 = vmatpush.bf16.msra.mxu0 0
        %614 = vmatpush.bf16.msra.mxu0 0
        %615 = vmatpush.bf16.msra.mxu0 %v602
        %616 = vmatpush.bf16.msra.mxu0 %v601
        %617 = vmatmul.bf16.gmra.mxu0 %v607
        %v618 = vpop.f32.mrf.mxu0
        %v619 = vadd.f32 %v591, %v618
        %v620 = vpop.f32.mrf.mxu0
        %621 = vdwg.mxu0
        %v622 = vpack.c.bf16 %v619, %v619
        %v624 = vunpack.c.l.b16 %v622
        %v625 = vpack.c.b16 %v624, %v624
        %626 = vrot.lane.b32.xlu0 %v625, 112
        %v627 = vpop.permute.xlu0 %626
        %vm628 = vcmask 130048
        %v630 = vsel %vm628, %v622, 0
        %v633 = vsel %vm628, %v627, 0
        %635 = vmatpush.bf16.xpose.msra.mxu0 0
        %636 = vmatpush.bf16.xpose.msra.mxu0 0
        %637 = vmatpush.bf16.xpose.msra.mxu0 0
        %638 = vmatpush.bf16.xpose.msra.mxu0 0
        %639 = vmatpush.bf16.xpose.msra.mxu0 0
        %640 = vmatpush.bf16.xpose.msra.mxu0 0
        %641 = vmatpush.bf16.xpose.msra.mxu0 0
        %642 = vmatpush.bf16.xpose.msra.mxu0 %v633
        %643 = vmatmul.bf16.gmra.mxu0 %v630
        %v644 = vpop.f32.mrf.mxu0
        %v645 = vadd.f32 0.0, %v644
        %v646 = vpop.f32.mrf.mxu0
        %647 = vdwg.mxu0
        %v648 = vmul.f32 %v645, 0.25
        %v650 = vperm.slane %v584, 0
        %v652 = vadd.f32 %v648, %v650
        %vm653 = vcmask 64512
        %v654 = vsel %vm653, %v652, -inf
        %655 = vmax.xlane.f32.xlu0 %v654
        %v656 = vpop.xlane.xlu0 %655
        %v657 = vsub.f32 %v652, %v656
        %v658 = vmul.f32 %v657, 1.442695
        %v659 = vpow.pop %v658
        %v660 = vsel %vm653, %v659, 0.0
        %661 = vadd.xlane.f32.xlu0 %v660
        %v662 = vpop.xlane.xlu0 %661
        %v663 = vrcp.pop %v662
        %v664 = vmul.f32 %v659, %v663
        %v665 = vpack.c.bf16 %v664, %v664
        %666 = vrot.lane.b32.xlu0 %v625, 96
        %v667 = vpop.permute.xlu0 %666
        %v669 = vsel %vm653, %v665, 0
        %vm671 = vcmask 1043456
        %v673 = vsel %vm671, %v667, 0
        %675 = vmatpush.bf16.msra.mxu0 0
        %676 = vmatpush.bf16.msra.mxu0 0
        %677 = vmatpush.bf16.msra.mxu0 0
        %678 = vmatpush.bf16.msra.mxu0 0
        %679 = vmatpush.bf16.msra.mxu0 0
        %680 = vmatpush.bf16.msra.mxu0 0
        %681 = vmatpush.bf16.msra.mxu0 0
        %682 = vmatpush.bf16.msra.mxu0 %v673
        %683 = vmatmul.bf16.gmra.mxu0 %v669
        %v684 = vpop.f32.mrf.mxu0
        %v685 = vadd.f32 0.0, %v684
        %v686 = vpop.f32.mrf.mxu0
        %687 = vdwg.mxu0
        %v688 = vpack.c.bf16 %v685, %v685
        %s689 = scalar_lea.vmem %s2, 16
        %v690 = vld [vmem:[%s689] sm:$0xf]
        %v691 = vld [vmem:[%s689 + $0x4] sm:$0xf]
        %v692 = vld [vmem:[%s689 + $0x8] sm:$0xf]
        %v693 = vld [vmem:[%s689 + $0xc] sm:$0xf]
        %s694 = scalar_lea.vmem %s3, 1
        %v695 = vld [vmem:[%s694] sm:$0x1]
        %v697 = vperm.slane %v695, 0
        %v703 = vunpack.c.l.b16 %v690
        %v704 = vunpack.c.l.b16 %v691
        %v705 = vunpack.c.l.b16 %v692
        %v706 = vunpack.c.l.b16 %v693
        %v707 = vpack.c.b16 %v704, %v703
        %v708 = vpack.c.b16 %v706, %v705
        %711 = vmatpush.bf16.msra.mxu0 0
        %712 = vmatpush.bf16.msra.mxu0 0
        %713 = vmatpush.bf16.msra.mxu0 0
        %714 = vmatpush.bf16.msra.mxu0 0
        %715 = vmatpush.bf16.msra.mxu0 0
        %716 = vmatpush.bf16.msra.mxu0 0
        %717 = vmatpush.bf16.msra.mxu0 %v708
        %718 = vmatpush.bf16.msra.mxu0 %v707
        %719 = vmatmul.bf16.gmra.mxu0 %v607
        %v720 = vpop.f32.mrf.mxu0
        %v721 = vadd.f32 %v697, %v720
        %v722 = vpop.f32.mrf.mxu0
        %723 = vdwg.mxu0
        %v724 = vpack.c.bf16 %v721, %v721
        %v726 = vunpack.c.l.b16 %v724
        %v727 = vpack.c.b16 %v726, %v726
        %728 = vrot.lane.b32.xlu0 %v727, 112
        %v729 = vpop.permute.xlu0 %728
        %v731 = vsel %vm628, %v724, 0
        %v734 = vsel %vm628, %v729, 0
        %736 = vmatpush.bf16.xpose.msra.mxu0 0
        %737 = vmatpush.bf16.xpose.msra.mxu0 0
        %738 = vmatpush.bf16.xpose.msra.mxu0 0
        %739 = vmatpush.bf16.xpose.msra.mxu0 0
        %740 = vmatpush.bf16.xpose.msra.mxu0 0
        %741 = vmatpush.bf16.xpose.msra.mxu0 0
        %742 = vmatpush.bf16.xpose.msra.mxu0 0
        %743 = vmatpush.bf16.xpose.msra.mxu0 %v734
        %744 = vmatmul.bf16.gmra.mxu0 %v731
        %v745 = vpop.f32.mrf.mxu0
        %v746 = vadd.f32 0.0, %v745
        %v747 = vpop.f32.mrf.mxu0
        %748 = vdwg.mxu0
        %v749 = vmul.f32 %v746, 0.25
        %v750 = vadd.f32 %v749, %v650
        %v751 = vsel %vm653, %v750, -inf
        %752 = vmax.xlane.f32.xlu0 %v751
        %v753 = vpop.xlane.xlu0 %752
        %v754 = vsub.f32 %v750, %v753
        %v755 = vmul.f32 %v754, 1.442695
        %v756 = vpow.pop %v755
        %v757 = vsel %vm653, %v756, 0.0
        %758 = vadd.xlane.f32.xlu0 %v757
        %v759 = vpop.xlane.xlu0 %758
        %v760 = vrcp.pop %v759
        %v761 = vmul.f32 %v756, %v760
        %v762 = vpack.c.bf16 %v761, %v761
        %763 = vrot.lane.b32.xlu0 %v727, 96
        %v764 = vpop.permute.xlu0 %763
        %v766 = vsel %vm653, %v762, 0
        %v769 = vsel %vm671, %v764, 0
        %771 = vmatpush.bf16.msra.mxu0 0
        %772 = vmatpush.bf16.msra.mxu0 0
        %773 = vmatpush.bf16.msra.mxu0 0
        %774 = vmatpush.bf16.msra.mxu0 0
        %775 = vmatpush.bf16.msra.mxu0 0
        %776 = vmatpush.bf16.msra.mxu0 0
        %777 = vmatpush.bf16.msra.mxu0 0
        %778 = vmatpush.bf16.msra.mxu0 %v769
        %779 = vmatmul.bf16.gmra.mxu0 %v766
        %v780 = vpop.f32.mrf.mxu0
        %v781 = vadd.f32 0.0, %v780
        %v782 = vpop.f32.mrf.mxu0
        %783 = vdwg.mxu0
        %v784 = vpack.c.bf16 %v781, %v781
        %v786 = vunpack.c.l.b16 %v784
        %v787 = vpack.c.b16 %v786, %v786
        %788 = vrot.lane.b32.xlu0 %v787, 16
        %v789 = vpop.permute.xlu0 %788
        %v792 = vsel %vm628, %v688, %v789
        %v793 = vld [vmem:[%s4] sm:$0xf]
        %v794 = vld [vmem:[%s4 + $0x4] sm:$0xf]
        %v795 = vld [vmem:[%s4 + $0x8] sm:$0xf]
        %v796 = vld [vmem:[%s4 + $0xc] sm:$0xf]
        %v797 = vld [vmem:[#allocation2] sm:$0x1]
        %v799 = vperm.slane %v797, 0
        %v805 = vunpack.c.l.b16 %v793
        %v806 = vunpack.c.l.b16 %v794
        %v807 = vunpack.c.l.b16 %v795
        %v808 = vunpack.c.l.b16 %v796
        %v809 = vpack.c.b16 %v806, %v805
        %v810 = vpack.c.b16 %v808, %v807
        %v813 = vsel %vm605, %v792, 0
        %815 = vmatpush.bf16.msra.mxu0 0
        %816 = vmatpush.bf16.msra.mxu0 0
        %817 = vmatpush.bf16.msra.mxu0 0
        %818 = vmatpush.bf16.msra.mxu0 0
        %819 = vmatpush.bf16.msra.mxu0 0
        %820 = vmatpush.bf16.msra.mxu0 0
        %821 = vmatpush.bf16.msra.mxu0 %v810
        %822 = vmatpush.bf16.msra.mxu0 %v809
        %823 = vmatmul.bf16.gmra.mxu0 %v813
        %v824 = vpop.f32.mrf.mxu0
        %v825 = vadd.f32 %v799, %v824
        %v826 = vpop.f32.mrf.mxu0
        %827 = vdwg.mxu0
        %v828 = vadd.f32 %v825, %v581
        %v829 = vld [vmem:[#allocation4] sm:$0x1]
        %v830 = vld [vmem:[#allocation6] sm:$0x1]
        %v831 = vsel %vm605, %v828, 0.0
        %832 = vadd.xlane.f32.xlu0 %v831
        %v833 = vpop.xlane.xlu0 %832
        %v834 = vrcp.pop 32.0
        %v835 = vmul.f32 32.0, %v834
        %v836 = vsub.f32 1.0, %v835
        %v837 = vmul.f32 %v834, %v836
        %v838 = vadd.f32 %v834, %v837
        %vm839 = vweird.f32 %v834
        %v840 = vsel %vm839, %v834, %v838
        %v841 = vmul.f32 %v833, %v840
        %v842 = vsub.f32 %v828, %v841
        %v843 = vmul.f32 %v842, %v842
        %v844 = vsel %vm605, %v843, 0.0
        %845 = vadd.xlane.f32.xlu0 %v844
        %v846 = vpop.xlane.xlu0 %845
        %v847 = vmul.f32 %v846, %v840
        %v848 = vadd.f32 %v847, 1e-12
        %v849 = vrsqrt.pop %v848
        %v850 = vmul.f32 %v849, %v848
        %v851 = vmul.f32 %v850, %v849
        %v852 = vmul.f32 0.5, %v851
        %v853 = vsub.f32 1.5, %v852
        %v854 = vmul.f32 %v849, %v853
        %vm855 = vweird.f32 %v848
        %vm856 = vweird.f32 %v849
        %vm857 = vmor %vm855, %vm856
        %v858 = vsel %vm857, %v849, %v854
        %v859 = vmul.f32 %v842, %v858
        %v861 = vperm.slane %v829, 0
        %v863 = vmul.f32 %v859, %v861
        %v865 = vperm.slane %v830, 0
        %v867 = vadd.f32 %v863, %v865
        %v868 = vpack.c.bf16 %v867, %v867
        %v869 = vld [vmem:[%s8] sm:$0xf]
        %v870 = vld [vmem:[%s8 + $0x4] sm:$0xf]
        %v871 = vld [vmem:[%s8 + $0x8] sm:$0xf]
        %v872 = vld [vmem:[%s8 + $0xc] sm:$0xf]
        %v873 = vld [vmem:[#allocation7] sm:$0x1]
        %v875 = vperm.slane %v873, 0
        %v881 = vunpack.c.l.b16 %v869
        %v882 = vunpack.c.l.b16 %v870
        %v883 = vunpack.c.l.b16 %v871
        %v884 = vunpack.c.l.b16 %v872
        %v885 = vpack.c.b16 %v882, %v881
        %v886 = vpack.c.b16 %v884, %v883
        %v890 = vsel %vm605, %v868, 0
        %892 = vmatpush.bf16.msra.mxu0 0
        %893 = vmatpush.bf16.msra.mxu0 0
        %894 = vmatpush.bf16.msra.mxu0 0
        %895 = vmatpush.bf16.msra.mxu0 0
        %896 = vmatpush.bf16.msra.mxu0 0
        %897 = vmatpush.bf16.msra.mxu0 0
        %898 = vmatpush.bf16.msra.mxu0 %v886
        %899 = vmatpush.bf16.msra.mxu0 %v885
        %900 = vmatmul.bf16.gmra.mxu0 %v890
        %v901 = vpop.f32.mrf.mxu0
        %v902 = vadd.f32 %v875, %v901
        %v903 = vpop.f32.mrf.mxu0
        %904 = vdwg.mxu0
        %v905 = vmul.f32 %v902, %v902
        %v906 = vmul.f32 %v902, %v905
        %v907 = vmul.f32 %v906, 0.044715
        %v908 = vadd.f32 %v902, %v907
        %v909 = vmul.f32 %v908, 0.7978846
        %v910 = vtanh.pop %v909
        %v911 = vadd.f32 %v910, 1.0
        %v912 = vmul.f32 %v911, 0.5
        %v913 = vmul.f32 %v902, %v912
        %v914 = vpack.c.bf16 %v913, %v913
        %v915 = vld [vmem:[%s10] sm:$0xf]
        %v916 = vld [vmem:[%s10 + $0x4] sm:$0xf]
        %v917 = vld [vmem:[%s10 + $0x8] sm:$0xf]
        %v918 = vld [vmem:[%s10 + $0xc] sm:$0xf]
        %v919 = vld [vmem:[%s10 + $0x10] sm:$0xf]
        %v920 = vld [vmem:[%s10 + $0x14] sm:$0xf]
        %v921 = vld [vmem:[%s10 + $0x18] sm:$0xf]
        %v922 = vld [vmem:[%s10 + $0x1c] sm:$0xf]
        %v923 = vld [vmem:[#allocation9] sm:$0x1]
        %v925 = vperm.slane %v923, 0
        %v935 = vunpack.c.l.b16 %v915
        %v936 = vunpack.c.l.b16 %v916
        %v937 = vunpack.c.l.b16 %v917
        %v938 = vunpack.c.l.b16 %v918
        %v939 = vunpack.c.l.b16 %v919
        %v940 = vunpack.c.l.b16 %v920
        %v941 = vunpack.c.l.b16 %v921
        %v942 = vunpack.c.l.b16 %v922
        %v943 = vpack.c.b16 %v936, %v935
        %v944 = vpack.c.b16 %v938, %v937
        %v945 = vpack.c.b16 %v940, %v939
        %v946 = vpack.c.b16 %v942, %v941
        %vm951 = vcmask 523264
        %v953 = vsel %vm951, %v914, 0
        %955 = vmatpush.bf16.msra.mxu0 0
        %956 = vmatpush.bf16.msra.mxu0 0
        %957 = vmatpush.bf16.msra.mxu0 0
        %958 = vmatpush.bf16.msra.mxu0 0
        %959 = vmatpush.bf16.msra.mxu0 %v946
        %960 = vmatpush.bf16.msra.mxu0 %v945
        %961 = vmatpush.bf16.msra.mxu0 %v944
        %962 = vmatpush.bf16.msra.mxu0 %v943
        %963 = vmatmul.bf16.gmra.mxu0 %v953
        %v964 = vpop.f32.mrf.mxu0
        %v965 = vadd.f32 %v925, %v964
        %v966 = vpop.f32.mrf.mxu0
        %967 = vdwg.mxu0
        %v968 = vadd.f32 %v965, %v867
        %v969 = vld [vmem:[#allocation10] sm:$0x1]
        %v970 = vld [vmem:[#allocation12] sm:$0x1]
        %v971 = vsel %vm605, %v968, 0.0
        %972 = vadd.xlane.f32.xlu0 %v971
        %v973 = vpop.xlane.xlu0 %972
        %v974 = vmul.f32 %v973, %v840
        %v975 = vsub.f32 %v968, %v974
        %v976 = vmul.f32 %v975, %v975
        %v977 = vsel %vm605, %v976, 0.0
        %978 = vadd.xlane.f32.xlu0 %v977
        %v979 = vpop.xlane.xlu0 %978
        %v980 = vmul.f32 %v979, %v840
        %v981 = vadd.f32 %v980, 1e-12
        %v982 = vrsqrt.pop %v981
        %v983 = vmul.f32 %v982, %v981
        %v984 = vmul.f32 %v983, %v982
        %v985 = vmul.f32 0.5, %v984
        %v986 = vsub.f32 1.5, %v985
        %v987 = vmul.f32 %v982, %v986
        %vm988 = vweird.f32 %v981
        %vm989 = vweird.f32 %v982
        %vm990 = vmor %vm988, %vm989
        %v991 = vsel %vm990, %v982, %v987
        %v992 = vmul.f32 %v975, %v991
        %v994 = vperm.slane %v969, 0
        %v996 = vmul.f32 %v992, %v994
        %v998 = vperm.slane %v970, 0
        %v1000 = vadd.f32 %v996, %v998
        %v1001 = vpack.c.bf16 %v1000, %v1000
        %vm1002 = vcmask 257024
        %1003 = vst.msk [vmem:[%s578] sm:$0xf] %vm1002, %v1001
        %p1004 = scmp.lt.s32.totalorder %s29, 1
        %s1005 = scalar_select %p1004, %s29, 1
        %s1006 = smul.addr %s1005, 4
        %s1007 = scalar_lea.vmem %s14, %s1006
        // Predicated region
        $region105: #{my_model_forward.9} parent=75 // pred_check
          %p1008 = pneg %p351
        $region106: #{my_model_forward.9} parent=75 // pred_check_branch
          %1010 = sbr.rel (%p1008) target = $region108
        $region107: #{my_model_forward.9} parent=75 // pred_region
          _
        $region108: #{my_model_forward.9} parent=75 // pred_fallthru
          _
      $region76: #{my_model_forward.9} parent=5 // pred_fallthru
        _
      %p1011 = scmp.le.s32.totalorder 2, %s24
      // Predicated region
      $region109: #{my_model_forward.9} parent=5 // pred_check
        %p1012 = pneg %p1011
      $region110: #{my_model_forward.9} parent=5 // pred_check_branch
        %1014 = sbr.rel (%p1012) target = $region112
      $region111: #{my_model_forward.9} parent=5 // pred_region
        %s1015 = ssub.s32 %s24, 2
        // Predicated region
        $region113: #{my_model_forward.9} parent=111 // pred_check
          %p1016 = pneg %p357
        $region114: #{my_model_forward.9} parent=111 // pred_check_branch
          %1018 = sbr.rel (%p1016) target = $region116
        $region115: #{my_model_forward.9} parent=111 // pred_region
          %p1019 = scmp.lt.s32.totalorder %s30, 1
          %s1020 = scalar_select %p1019, %s30, 1
          %s1021 = smul.addr %s1020, 4
          %s1022 = scalar_lea.vmem %s14, %s1021
        $region116: #{my_model_forward.9} parent=111 // pred_fallthru
          _
      $region112: #{my_model_forward.9} parent=5 // pred_fallthru
        _
    $region6: #{my_model_forward.9} parent=1 // loop_footer
      %s28 = sadd.s32 1, %s24
    $region7: #{my_model_forward.9} parent=1 // loop_footer_branch
      %23 = sbr.rel target = $region3
    $region8: #{my_model_forward.9} parent=1 // loop_exit
      _
    %1023 = vsyncpa [#allocation3], 1
    %s1024 = scalar_lea.sflag [#allocation3], 1
    %1025 = vsyncpa %s1024, 1
    %1026 = vsyncpa [#allocation5], 1
    %1027 = vsyncpa [#allocation8], 1
    %1028 = vsyncpa [#allocation11], 1

</llo_original>
